<compile_context>
chip_gen: v7x
topology: tpu7x:2x2x1
jax: 0.10.0
libtpu: 0.0.40
codegen_flags: <defaults>
</compile_context>

<pallas_src>
import functools

import jax
import jax.numpy as jnp
from jax import lax
from jax.experimental import pallas as pl
from jax.experimental.pallas import tpu as pltpu


def _encoder_kernel(
    x_bd_ref,        # (T, 2N, 2)   block-diagonally stacked raw input sequence
    yx_ref,          # (T, N, 2N)   xl @ [w1[0][:F2] | w1[1][:F2]]   (precomputed)
    convx_ref,       # (T, N, 2)    xl @ conv_W[:F2] + conv_b        (precomputed)
    cx_ref,          # (T, N, F2)   xl @ lin_c_W[:F2]                (precomputed)
    conv_Ws_ref,     # (F2, 2)
    w1s_ref,         # (F2, 2N)
    mT_ref,          # (2N, N)      stacked [(A*w2[0]).T ; (B*w2[1]).T]
    logit_bias_ref,  # (2N, 2N)     core bias + (-1e16)*(1 - blockdiag(A, B))
    Wru_ref,         # (2N, N)      stacked [(A*Wr).T ; (A*Wu).T]
    lin_ru_p_ref,    # (2, 2F2)
    lin_ru_s_ref,    # (F2, 2F2)
    bias_ru_ref,     # (2N, 2F2)    folded LocalGC + Linear biases, pre-broadcast
    Wc_ref,          # (N, N)       (A*Wc).T
    lin_c_s_ref,     # (F2, F2)
    bias_c_ref,      # (N, F2)      folded LocalGC + Linear bias, pre-broadcast
    out_ref,         # (N, F2)      final GRU state for this batch element
    *, N, F2, T,
):
    f32 = jnp.float32
    dot = functools.partial(jnp.dot, preferred_element_type=f32)

    # Hoist loop-invariant loads out of the time loop.
    conv_Ws = conv_Ws_ref[...]
    w1s = w1s_ref[...]
    mT = mT_ref[...]
    logit_bias = logit_bias_ref[...]
    Wru = Wru_ref[...]
    lin_ru_p = lin_ru_p_ref[...]
    lin_ru_s = lin_ru_s_ref[...]
    bias_ru = bias_ru_ref[...]
    Wc = Wc_ref[...]
    lin_c_s = lin_c_s_ref[...]
    bias_c = bias_c_ref[...]

    def step(t, state):
        x_bd = x_bd_ref[t]                                   # (2N, 2): [:N]=[x0,0], [N:]=[0,x1]
        yx = yx_ref[t]                                       # (N, 2N)
        convx = convx_ref[t]                                 # (N, 2)
        cx = cx_ref[t]                                       # (N, F2)

        # demand = tanh(convert(concat([xl, state]))) * 0.5 ; the xl-part is precomputed.
        demand = jnp.tanh(convx + dot(state, conv_Ws)) * 0.5           # (N, 2)

        # Both masked-softmax heads fused: logits are block-diagonal valid; the
        # off-diagonal blocks are killed exactly by the -1e16 additive mask.
        Y = yx + dot(state, w1s)                             # (N, 2N)  == gru_in @ [w1[0]|w1[1]]
        logits = dot(mT, Y) + logit_bias                     # (2N, 2N)
        mx = jnp.max(logits, axis=-1, keepdims=True)
        e = jnp.exp(logits - mx)
        masks = e / jnp.sum(e, axis=-1, keepdims=True)       # blockdiag(mask1, mask2)

        vq = dot(masks, x_bd)                                # (2N, 2): [:N]=(v,0), [N:]=(0,q)
        p = vq[:N] + vq[N:] + demand                         # (N, 2)

        # Fused r/u gates (LocalGC biases folded through the Linear in the wrapper).
        z_ru = dot(p, lin_ru_p) + dot(state, lin_ru_s)       # (N, 2F2)
        ru = jax.nn.sigmoid(dot(Wru, z_ru) + bias_ru)        # (2N, 2F2)
        r = ru[:N, :F2]
        u = ru[N:, F2:]

        s = r * state
        z_c = cx + dot(s, lin_c_s)                           # (N, F2)
        c = jnp.tanh(dot(Wc, z_c) + bias_c)                  # (N, F2)

        return u * state + (1.0 - u) * c

    state0 = jnp.zeros((N, F2), f32)
    out_ref[...] = lax.fori_loop(0, T, step, state0, unroll=True)


def encoder_vis_pallas(x, params):
    Bsz, T, N, _ = x.shape
    F = params["core_w1"].shape[1]
    F2 = F // 2
    f32 = jnp.float32

    x = x.astype(f32)
    A = params["A"].astype(f32)
    Badj = params["Badj"].astype(f32)

    # ---------------- grid/state-invariant precomputation (outside the kernel) ----------------
    # Block-diagonally stacked raw input: rows [:N] carry feature 0, rows [N:] feature 1.
    x_bd = jnp.concatenate(
        [x * jnp.array([1.0, 0.0], f32), x * jnp.array([0.0, 1.0], f32)], axis=2)   # (B,T,2N,2)

    # Input projection (depends on x only) hoisted fully out of the recurrence.
    xl_all = x @ params["lin_in_W"].astype(f32) + params["lin_in_b"].astype(f32)     # (B,T,N,F2)

    conv_Wx = params["conv_W"][:F2].astype(f32)
    conv_Ws = params["conv_W"][F2:].astype(f32)
    convx_all = xl_all @ conv_Wx + params["conv_b"].astype(f32)                      # (B,T,N,2)

    w1x = jnp.concatenate([params["core_w1"][0][:F2],
                           params["core_w1"][1][:F2]], axis=1).astype(f32)           # (F2, 2N)
    w1s = jnp.concatenate([params["core_w1"][0][F2:],
                           params["core_w1"][1][F2:]], axis=1)                        # (F2, 2N)
    yx_all = xl_all @ w1x                                                             # (B,T,N,2N)

    lin_c_x = params["lin_c_W"][:F2].astype(f32)
    lin_c_s = params["lin_c_W"][F2:]
    cx_all = xl_all @ lin_c_x                                                         # (B,T,N,F2)

    mT = jnp.concatenate([(A * params["core_w2"][0]).T,
                          (Badj * params["core_w2"][1]).T], axis=0)                   # (2N, N)

    zero_nn = jnp.zeros((N, N), f32)
    adj_bd = jnp.block([[A, zero_nn], [zero_nn, Badj]])                               # (2N, 2N)
    bias_stack = jnp.concatenate([params["core_bias"][0],
                                  params["core_bias"][1]], axis=0)                    # (2N, 1)
    # NOTE: rows of A/Badj are non-empty (identity included), otherwise the -1e16
    # masking would produce a degenerate softmax row.
    logit_bias = bias_stack + (-1e16) * (1.0 - adj_bd)                                # (2N, 2N)

    Wru = jnp.concatenate([(A * params["dgc_r_w"]).T,
                           (A * params["dgc_u_w"]).T], axis=0)                        # (2N, N)
    lin_ru_p = jnp.concatenate([params["lin_r_W"][:2], params["lin_u_W"][:2]], axis=1)    # (2, 2F2)
    lin_ru_s = jnp.concatenate([params["lin_r_W"][2:], params["lin_u_W"][2:]], axis=1)    # (F2, 2F2)
    bias_ru = jnp.broadcast_to(
        jnp.concatenate(
            [params["dgc_r_b"] @ params["lin_r_W"] + params["lin_r_b"],
             params["dgc_u_b"] @ params["lin_u_W"] + params["lin_u_b"]], axis=1),
        (2 * N, 2 * F2))

    Wc = (A * params["dgc_c_w"]).T                                                    # (N, N)
    bias_c = jnp.broadcast_to(params["dgc_c_b"] @ params["lin_c_W"] + params["lin_c_b"],
                              (N, F2))

    consts = (conv_Ws, w1s, mT, logit_bias,
              Wru, lin_ru_p, lin_ru_s, bias_ru,
              Wc, lin_c_s, bias_c)
    consts = tuple(c.astype(f32) for c in consts)

    def const_spec(shape):
        nd = len(shape)
        return pl.BlockSpec(shape, lambda b, _nd=nd: (0,) * _nd)

    in_specs = [
        pl.BlockSpec((None, T, 2 * N, 2), lambda b: (b, 0, 0, 0)),     # x_bd
        pl.BlockSpec((None, T, N, 2 * N), lambda b: (b, 0, 0, 0)),     # yx_all
        pl.BlockSpec((None, T, N, 2), lambda b: (b, 0, 0, 0)),         # convx_all
        pl.BlockSpec((None, T, N, F2), lambda b: (b, 0, 0, 0)),        # cx_all
    ]
    in_specs += [const_spec(tuple(c.shape)) for c in consts]

    kernel = functools.partial(_encoder_kernel, N=N, F2=F2, T=T)

    return pl.pallas_call(
        kernel,
        out_shape=jax.ShapeDtypeStruct((Bsz, N, F2), f32),
        grid_spec=pltpu.PrefetchScalarGridSpec(
            num_scalar_prefetch=0,
            grid=(Bsz,),
            in_specs=in_specs,
            out_specs=pl.BlockSpec((None, N, F2), lambda b: (b, 0, 0)),
        ),
        compiler_params=pltpu.CompilerParams(
            dimension_semantics=("parallel",)),
    )(x_bd, yx_all, convx_all, cx_all, *consts)


def encoder_vis_ref(x, params):
    """Pure-JAX reference mirroring the PyTorch forward."""
    Bsz, T, N, _ = x.shape
    F = params["core_w1"].shape[1]
    F2 = F // 2
    A, Badj = params["A"], params["Badj"]
    state = jnp.zeros((Bsz, N, F2), jnp.float32)
    for t in range(T):
        xt = x[:, t]                                          # (B, N, 2)
        xl = xt @ params["lin_in_W"] + params["lin_in_b"]
        gru_in = jnp.concatenate([xl, state], -1)
        demand = jnp.tanh(gru_in @ params["conv_W"] + params["conv_b"]) * 0.5

        def msm(adj, w2, w1, bias):
            x1 = jnp.swapaxes(gru_in, -1, -2) @ (adj * w2)
            logits = jnp.swapaxes(x1, -1, -2) @ w1 + bias
            logits = logits + (-1e16) * (1.0 - adj)
            return jax.nn.softmax(logits, axis=-1)

        mask1 = msm(A, params["core_w2"][0], params["core_w1"][0], params["core_bias"][0])
        mask2 = msm(Badj, params["core_w2"][1], params["core_w1"][1], params["core_bias"][1])
        v = mask1 @ xt[..., :1]
        q = mask2 @ xt[..., 1:]
        p = jnp.concatenate([v, q], -1) + demand

        feat_ru = jnp.concatenate([p, state], -1)

        def local_gc(feat, w, bias):
            out = jnp.swapaxes(jnp.swapaxes(feat, -1, -2) @ (A * w), -1, -2)
            return out + bias

        r = jax.nn.sigmoid(local_gc(feat_ru, params["dgc_r_w"], params["dgc_r_b"])
                           @ params["lin_r_W"] + params["lin_r_b"])
        u = jax.nn.sigmoid(local_gc(feat_ru, params["dgc_u_w"], params["dgc_u_b"])
                           @ params["lin_u_W"] + params["lin_u_b"])
        s = r * state
        feat_c = jnp.concatenate([xl, s], -1)
        c = jnp.tanh(local_gc(feat_c, params["dgc_c_w"], params["dgc_c_b"])
                     @ params["lin_c_W"] + params["lin_c_b"])
        state = u * state + (1.0 - u) * c
    return state


def make_params(key, N, F):
    F2 = F // 2
    dim = F2 + 2
    ks = jax.random.split(key, 20)

    def xavier(k, shape, fan_in, fan_out):
        std = (2.0 / (fan_in + fan_out)) ** 0.5
        return std * jax.random.normal(k, shape, jnp.float32)

    eye = jnp.eye(N, dtype=jnp.float32)
    A = jnp.maximum((jax.random.uniform(ks[0], (N, N)) < 0.4).astype(jnp.float32), eye)
    Badj = jnp.maximum((jax.random.uniform(ks[1], (N, N)) < 0.4).astype(jnp.float32), eye)

    params = dict(
        A=A, Badj=Badj,
        core_w1=xavier(ks[2], (2, F, N), F, N),
        core_w2=xavier(ks[3], (2, N, N), N, N),
        core_bias=jnp.zeros((2, N, 1), jnp.float32),
        # nn.Linear weights stored pre-transposed to (in, out); biases as (1, out)
        conv_W=0.3 * jax.random.normal(ks[4], (F, 2), jnp.float32),
        conv_b=0.1 * jax.random.normal(ks[5], (1, 2), jnp.float32),
        lin_in_W=0.3 * jax.random.normal(ks[6], (2, F2), jnp.float32),
        lin_in_b=0.1 * jax.random.normal(ks[7], (1, F2), jnp.float32),
        dgc_r_w=xavier(ks[8], (N, N), N, N),
        dgc_r_b=jnp.zeros((1, dim), jnp.float32),
        lin_r_W=0.3 * jax.random.normal(ks[9], (dim, F2), jnp.float32),
        lin_r_b=0.1 * jax.random.normal(ks[10], (1, F2), jnp.float32),
        dgc_u_w=xavier(ks[11], (N, N), N, N),
        dgc_u_b=jnp.zeros((1, dim), jnp.float32),
        lin_u_W=0.3 * jax.random.normal(ks[12], (dim, F2), jnp.float32),
        lin_u_b=0.1 * jax.random.normal(ks[13], (1, F2), jnp.float32),
        dgc_c_w=xavier(ks[14], (N, N), N, N),
        dgc_c_b=jnp.zeros((1, F), jnp.float32),
        lin_c_W=0.3 * jax.random.normal(ks[15], (F, F2), jnp.float32),
        lin_c_b=0.1 * jax.random.normal(ks[16], (1, F2), jnp.float32),
    )
    return params


if __name__ == "__main__":
    key = jax.random.PRNGKey(0)
    k_p, k_x = jax.random.split(key)

    Bsz, T, N, F = 2, 4, 16, 8    # batch, seq-len, nodes, feature dim (F//2 = state dim)
    params = make_params(k_p, N, F)
    x = jax.random.normal(k_x, (Bsz, T, N, 2), jnp.float32)

    out = encoder_vis_pallas(x, params)
    out = jax.block_until_ready(out)

    ref = encoder_vis_ref(x, params)
    assert out.shape == (Bsz, N, F // 2)
    assert jnp.allclose(out, ref, rtol=1e-3, atol=1e-4), (
        f"mismatch: max abs diff {jnp.max(jnp.abs(out - ref))}")

    print("KERNEL_OK")
</pallas_src>

<mosaic_0001>
module attributes {stable_mosaic.version = 11 : i64} {
  func.func @_encoder_kernel(%arg0: i32, %arg1: memref<1x4x32x2xf32, #tpu.memory_space<vmem>>, %arg2: memref<1x4x16x32xf32, #tpu.memory_space<vmem>>, %arg3: memref<1x4x16x2xf32, #tpu.memory_space<vmem>>, %arg4: memref<1x4x16x4xf32, #tpu.memory_space<vmem>>, %arg5: memref<4x2xf32, #tpu.memory_space<vmem>>, %arg6: memref<4x32xf32, #tpu.memory_space<vmem>>, %arg7: memref<32x16xf32, #tpu.memory_space<vmem>>, %arg8: memref<32x32xf32, #tpu.memory_space<vmem>>, %arg9: memref<32x16xf32, #tpu.memory_space<vmem>>, %arg10: memref<2x8xf32, #tpu.memory_space<vmem>>, %arg11: memref<4x8xf32, #tpu.memory_space<vmem>>, %arg12: memref<32x8xf32, #tpu.memory_space<vmem>>, %arg13: memref<16x16xf32, #tpu.memory_space<vmem>>, %arg14: memref<4x4xf32, #tpu.memory_space<vmem>>, %arg15: memref<16x4xf32, #tpu.memory_space<vmem>>, %arg16: memref<1x16x4xf32, #tpu.memory_space<vmem>>) attributes {dimension_semantics = [#tpu.dimension_semantics<parallel>], iteration_bounds = array<i64: 2>, scalar_prefetch = 0 : i64, scratch_operands = 0 : i64, tpu.core_type = #tpu.core_type<tc>, window_params = [{transform_indices = @transform_0, window_bounds = array<i64: 1, 4, 32, 2>}, {transform_indices = @transform_1, window_bounds = array<i64: 1, 4, 16, 32>}, {transform_indices = @transform_2, window_bounds = array<i64: 1, 4, 16, 2>}, {transform_indices = @transform_3, window_bounds = array<i64: 1, 4, 16, 4>}, {pipeline_mode = #tpu.pipeline_mode<synchronous>, transform_indices = @transform_4, window_bounds = array<i64: 4, 2>}, {pipeline_mode = #tpu.pipeline_mode<synchronous>, transform_indices = @transform_5, window_bounds = array<i64: 4, 32>}, {pipeline_mode = #tpu.pipeline_mode<synchronous>, transform_indices = @transform_6, window_bounds = array<i64: 32, 16>}, {pipeline_mode = #tpu.pipeline_mode<synchronous>, transform_indices = @transform_7, window_bounds = array<i64: 32, 32>}, {pipeline_mode = #tpu.pipeline_mode<synchronous>, transform_indices = @transform_8, window_bounds = array<i64: 32, 16>}, {pipeline_mode = #tpu.pipeline_mode<synchronous>, transform_indices = @transform_9, window_bounds = array<i64: 2, 8>}, {pipeline_mode = #tpu.pipeline_mode<synchronous>, transform_indices = @transform_10, window_bounds = array<i64: 4, 8>}, {pipeline_mode = #tpu.pipeline_mode<synchronous>, transform_indices = @transform_11, window_bounds = array<i64: 32, 8>}, {pipeline_mode = #tpu.pipeline_mode<synchronous>, transform_indices = @transform_12, window_bounds = array<i64: 16, 16>}, {pipeline_mode = #tpu.pipeline_mode<synchronous>, transform_indices = @transform_13, window_bounds = array<i64: 4, 4>}, {pipeline_mode = #tpu.pipeline_mode<synchronous>, transform_indices = @transform_14, window_bounds = array<i64: 16, 4>}, {transform_indices = @transform_15, window_bounds = array<i64: 1, 16, 4>}]} {
    %c0 = arith.constant 0 : index
    %c0_0 = arith.constant 0 : index
    %0 = vector.load %arg5[%c0, %c0_0] : memref<4x2xf32, #tpu.memory_space<vmem>>, vector<4x2xf32>
    %c0_1 = arith.constant 0 : index
    %c0_2 = arith.constant 0 : index
    %1 = vector.load %arg6[%c0_1, %c0_2] : memref<4x32xf32, #tpu.memory_space<vmem>>, vector<4x32xf32>
    %c0_3 = arith.constant 0 : index
    %c0_4 = arith.constant 0 : index
    %2 = vector.load %arg7[%c0_3, %c0_4] : memref<32x16xf32, #tpu.memory_space<vmem>>, vector<32x16xf32>
    %c0_5 = arith.constant 0 : index
    %c0_6 = arith.constant 0 : index
    %3 = vector.load %arg8[%c0_5, %c0_6] : memref<32x32xf32, #tpu.memory_space<vmem>>, vector<32x32xf32>
    %c0_7 = arith.constant 0 : index
    %c0_8 = arith.constant 0 : index
    %4 = vector.load %arg9[%c0_7, %c0_8] : memref<32x16xf32, #tpu.memory_space<vmem>>, vector<32x16xf32>
    %c0_9 = arith.constant 0 : index
    %c0_10 = arith.constant 0 : index
    %5 = vector.load %arg10[%c0_9, %c0_10] : memref<2x8xf32, #tpu.memory_space<vmem>>, vector<2x8xf32>
    %c0_11 = arith.constant 0 : index
    %c0_12 = arith.constant 0 : index
    %6 = vector.load %arg11[%c0_11, %c0_12] : memref<4x8xf32, #tpu.memory_space<vmem>>, vector<4x8xf32>
    %c0_13 = arith.constant 0 : index
    %c0_14 = arith.constant 0 : index
    %7 = vector.load %arg12[%c0_13, %c0_14] : memref<32x8xf32, #tpu.memory_space<vmem>>, vector<32x8xf32>
    %c0_15 = arith.constant 0 : index
    %c0_16 = arith.constant 0 : index
    %8 = vector.load %arg13[%c0_15, %c0_16] : memref<16x16xf32, #tpu.memory_space<vmem>>, vector<16x16xf32>
    %c0_17 = arith.constant 0 : index
    %c0_18 = arith.constant 0 : index
    %9 = vector.load %arg14[%c0_17, %c0_18] : memref<4x4xf32, #tpu.memory_space<vmem>>, vector<4x4xf32>
    %c0_19 = arith.constant 0 : index
    %c0_20 = arith.constant 0 : index
    %10 = vector.load %arg15[%c0_19, %c0_20] : memref<16x4xf32, #tpu.memory_space<vmem>>, vector<16x4xf32>
    %cst = arith.constant 0.000000e+00 : f32
    %11 = vector.broadcast %cst : f32 to vector<16x4xf32>
    %c0_i32 = arith.constant 0 : i32
    %c0_21 = arith.constant 0 : index
    %12 = arith.index_cast %c0_i32 : i32 to index
    %c0_22 = arith.constant 0 : index
    %c0_23 = arith.constant 0 : index
    %13 = vector.load %arg1[%c0_21, %12, %c0_22, %c0_23] : memref<1x4x32x2xf32, #tpu.memory_space<vmem>>, vector<1x1x32x2xf32>
    %14 = vector.shape_cast %13 : vector<1x1x32x2xf32> to vector<32x2xf32>
    %c0_24 = arith.constant 0 : index
    %15 = arith.index_cast %c0_i32 : i32 to index
    %c0_25 = arith.constant 0 : index
    %c0_26 = arith.constant 0 : index
    %16 = vector.load %arg2[%c0_24, %15, %c0_25, %c0_26] : memref<1x4x16x32xf32, #tpu.memory_space<vmem>>, vector<1x1x16x32xf32>
    %17 = vector.shape_cast %16 : vector<1x1x16x32xf32> to vector<16x32xf32>
    %c0_27 = arith.constant 0 : index
    %18 = arith.index_cast %c0_i32 : i32 to index
    %c0_28 = arith.constant 0 : index
    %c0_29 = arith.constant 0 : index
    %19 = vector.load %arg3[%c0_27, %18, %c0_28, %c0_29] : memref<1x4x16x2xf32, #tpu.memory_space<vmem>>, vector<1x1x16x2xf32>
    %20 = vector.shape_cast %19 : vector<1x1x16x2xf32> to vector<16x2xf32>
    %c0_30 = arith.constant 0 : index
    %21 = arith.index_cast %c0_i32 : i32 to index
    %c0_31 = arith.constant 0 : index
    %c0_32 = arith.constant 0 : index
    %22 = vector.load %arg4[%c0_30, %21, %c0_31, %c0_32] : memref<1x4x16x4xf32, #tpu.memory_space<vmem>>, vector<1x1x16x4xf32>
    %23 = vector.shape_cast %22 : vector<1x1x16x4xf32> to vector<16x4xf32>
    %cst_33 = arith.constant dense<0.000000e+00> : vector<16x2xf32>
    %24 = tpu.matmul %11, %0, %cst_33 {dimension_numbers = #tpu.dot_dimension_numbers<[1], [0], [0], [1], [0, 0, 1, 1], [], []>} : vector<16x4xf32>, vector<4x2xf32>, vector<16x2xf32> -> vector<16x2xf32>
    %25 = arith.addf %20, %24 : vector<16x2xf32>
    %26 = math.tanh %25 : vector<16x2xf32>
    %cst_34 = arith.constant 5.000000e-01 : f32
    %27 = vector.broadcast %cst_34 : f32 to vector<16x2xf32>
    %28 = arith.mulf %26, %27 : vector<16x2xf32>
    %cst_35 = arith.constant dense<0.000000e+00> : vector<16x32xf32>
    %29 = tpu.matmul %11, %1, %cst_35 {dimension_numbers = #tpu.dot_dimension_numbers<[1], [0], [0], [1], [0, 0, 1, 1], [], []>} : vector<16x4xf32>, vector<4x32xf32>, vector<16x32xf32> -> vector<16x32xf32>
    %30 = arith.addf %17, %29 : vector<16x32xf32>
    %cst_36 = arith.constant dense<0.000000e+00> : vector<32x32xf32>
    %31 = tpu.matmul %2, %30, %cst_36 {dimension_numbers = #tpu.dot_dimension_numbers<[1], [0], [0], [1], [0, 0, 1, 1], [], []>} : vector<32x16xf32>, vector<16x32xf32>, vector<32x32xf32> -> vector<32x32xf32>
    %32 = arith.addf %31, %3 : vector<32x32xf32>
    %cst_37 = arith.constant dense<0xFF800000> : vector<32xf32>
    %33 = vector.multi_reduction <maximumf>, %32, %cst_37 [1] : vector<32x32xf32> to vector<32xf32>
    %34 = vector.shape_cast %33 : vector<32xf32> to vector<32x1xf32>
    %35 = vector.broadcast %34 : vector<32x1xf32> to vector<32x32xf32>
    %36 = arith.subf %32, %35 : vector<32x32xf32>
    %37 = math.exp %36 : vector<32x32xf32>
    %cst_38 = arith.constant dense<0.000000e+00> : vector<32xf32>
    %38 = vector.multi_reduction <add>, %37, %cst_38 [1] : vector<32x32xf32> to vector<32xf32>
    %39 = vector.shape_cast %38 : vector<32xf32> to vector<32x1xf32>
    %40 = vector.broadcast %39 : vector<32x1xf32> to vector<32x32xf32>
    %41 = arith.divf %37, %40 : vector<32x32xf32>
    %cst_39 = arith.constant dense<0.000000e+00> : vector<32x2xf32>
    %42 = tpu.matmul %41, %14, %cst_39 {dimension_numbers = #tpu.dot_dimension_numbers<[1], [0], [0], [1], [0, 0, 1, 1], [], []>} : vector<32x32xf32>, vector<32x2xf32>, vector<32x2xf32> -> vector<32x2xf32>
    %43 = vector.extract_strided_slice %42 {offsets = [0, 0], sizes = [16, 2], strides = [1, 1]} : vector<32x2xf32> to vector<16x2xf32>
    %44 = vector.extract_strided_slice %42 {offsets = [16, 0], sizes = [16, 2], strides = [1, 1]} : vector<32x2xf32> to vector<16x2xf32>
    %45 = arith.addf %43, %44 : vector<16x2xf32>
    %46 = arith.addf %45, %28 : vector<16x2xf32>
    %cst_40 = arith.constant dense<0.000000e+00> : vector<16x8xf32>
    %47 = tpu.matmul %46, %5, %cst_40 {dimension_numbers = #tpu.dot_dimension_numbers<[1], [0], [0], [1], [0, 0, 1, 1], [], []>} : vector<16x2xf32>, vector<2x8xf32>, vector<16x8xf32> -> vector<16x8xf32>
    %cst_41 = arith.constant dense<0.000000e+00> : vector<16x8xf32>
    %48 = tpu.matmul %11, %6, %cst_41 {dimension_numbers = #tpu.dot_dimension_numbers<[1], [0], [0], [1], [0, 0, 1, 1], [], []>} : vector<16x4xf32>, vector<4x8xf32>, vector<16x8xf32> -> vector<16x8xf32>
    %49 = arith.addf %47, %48 : vector<16x8xf32>
    %cst_42 = arith.constant dense<0.000000e+00> : vector<32x8xf32>
    %50 = tpu.matmul %4, %49, %cst_42 {dimension_numbers = #tpu.dot_dimension_numbers<[1], [0], [0], [1], [0, 0, 1, 1], [], []>} : vector<32x16xf32>, vector<16x8xf32>, vector<32x8xf32> -> vector<32x8xf32>
    %51 = arith.addf %50, %7 : vector<32x8xf32>
    %52 = arith.negf %51 : vector<32x8xf32>
    %53 = math.exp %52 : vector<32x8xf32>
    %cst_43 = arith.constant 1.000000e+00 : f32
    %54 = vector.broadcast %cst_43 : f32 to vector<32x8xf32>
    %55 = arith.addf %54, %53 : vector<32x8xf32>
    %56 = arith.divf %54, %55 : vector<32x8xf32>
    %57 = vector.extract_strided_slice %56 {offsets = [0, 0], sizes = [16, 4], strides = [1, 1]} : vector<32x8xf32> to vector<16x4xf32>
    %58 = vector.extract_strided_slice %56 {offsets = [16, 4], sizes = [16, 4], strides = [1, 1]} : vector<32x8xf32> to vector<16x4xf32>
    %59 = arith.mulf %57, %11 : vector<16x4xf32>
    %cst_44 = arith.constant dense<0.000000e+00> : vector<16x4xf32>
    %60 = tpu.matmul %59, %9, %cst_44 {dimension_numbers = #tpu.dot_dimension_numbers<[1], [0], [0], [1], [0, 0, 1, 1], [], []>} : vector<16x4xf32>, vector<4x4xf32>, vector<16x4xf32> -> vector<16x4xf32>
    %61 = arith.addf %23, %60 : vector<16x4xf32>
    %cst_45 = arith.constant dense<0.000000e+00> : vector<16x4xf32>
    %62 = tpu.matmul %8, %61, %cst_45 {dimension_numbers = #tpu.dot_dimension_numbers<[1], [0], [0], [1], [0, 0, 1, 1], [], []>} : vector<16x16xf32>, vector<16x4xf32>, vector<16x4xf32> -> vector<16x4xf32>
    %63 = arith.addf %62, %10 : vector<16x4xf32>
    %64 = math.tanh %63 : vector<16x4xf32>
    %65 = arith.mulf %58, %11 : vector<16x4xf32>
    %cst_46 = arith.constant 1.000000e+00 : f32
    %66 = vector.broadcast %cst_46 : f32 to vector<16x4xf32>
    %67 = arith.subf %66, %58 : vector<16x4xf32>
    %68 = arith.mulf %67, %64 : vector<16x4xf32>
    %69 = arith.addf %65, %68 : vector<16x4xf32>
    %c1_i32 = arith.constant 1 : i32
    %c0_47 = arith.constant 0 : index
    %70 = arith.index_cast %c1_i32 : i32 to index
    %c0_48 = arith.constant 0 : index
    %c0_49 = arith.constant 0 : index
    %71 = vector.load %arg1[%c0_47, %70, %c0_48, %c0_49] : memref<1x4x32x2xf32, #tpu.memory_space<vmem>>, vector<1x1x32x2xf32>
    %72 = vector.shape_cast %71 : vector<1x1x32x2xf32> to vector<32x2xf32>
    %c0_50 = arith.constant 0 : index
    %73 = arith.index_cast %c1_i32 : i32 to index
    %c0_51 = arith.constant 0 : index
    %c0_52 = arith.constant 0 : index
    %74 = vector.load %arg2[%c0_50, %73, %c0_51, %c0_52] : memref<1x4x16x32xf32, #tpu.memory_space<vmem>>, vector<1x1x16x32xf32>
    %75 = vector.shape_cast %74 : vector<1x1x16x32xf32> to vector<16x32xf32>
    %c0_53 = arith.constant 0 : index
    %76 = arith.index_cast %c1_i32 : i32 to index
    %c0_54 = arith.constant 0 : index
    %c0_55 = arith.constant 0 : index
    %77 = vector.load %arg3[%c0_53, %76, %c0_54, %c0_55] : memref<1x4x16x2xf32, #tpu.memory_space<vmem>>, vector<1x1x16x2xf32>
    %78 = vector.shape_cast %77 : vector<1x1x16x2xf32> to vector<16x2xf32>
    %c0_56 = arith.constant 0 : index
    %79 = arith.index_cast %c1_i32 : i32 to index
    %c0_57 = arith.constant 0 : index
    %c0_58 = arith.constant 0 : index
    %80 = vector.load %arg4[%c0_56, %79, %c0_57, %c0_58] : memref<1x4x16x4xf32, #tpu.memory_space<vmem>>, vector<1x1x16x4xf32>
    %81 = vector.shape_cast %80 : vector<1x1x16x4xf32> to vector<16x4xf32>
    %cst_59 = arith.constant dense<0.000000e+00> : vector<16x2xf32>
    %82 = tpu.matmul %69, %0, %cst_59 {dimension_numbers = #tpu.dot_dimension_numbers<[1], [0], [0], [1], [0, 0, 1, 1], [], []>} : vector<16x4xf32>, vector<4x2xf32>, vector<16x2xf32> -> vector<16x2xf32>
    %83 = arith.addf %78, %82 : vector<16x2xf32>
    %84 = math.tanh %83 : vector<16x2xf32>
    %cst_60 = arith.constant 5.000000e-01 : f32
    %85 = vector.broadcast %cst_60 : f32 to vector<16x2xf32>
    %86 = arith.mulf %84, %85 : vector<16x2xf32>
    %cst_61 = arith.constant dense<0.000000e+00> : vector<16x32xf32>
    %87 = tpu.matmul %69, %1, %cst_61 {dimension_numbers = #tpu.dot_dimension_numbers<[1], [0], [0], [1], [0, 0, 1, 1], [], []>} : vector<16x4xf32>, vector<4x32xf32>, vector<16x32xf32> -> vector<16x32xf32>
    %88 = arith.addf %75, %87 : vector<16x32xf32>
    %cst_62 = arith.constant dense<0.000000e+00> : vector<32x32xf32>
    %89 = tpu.matmul %2, %88, %cst_62 {dimension_numbers = #tpu.dot_dimension_numbers<[1], [0], [0], [1], [0, 0, 1, 1], [], []>} : vector<32x16xf32>, vector<16x32xf32>, vector<32x32xf32> -> vector<32x32xf32>
    %90 = arith.addf %89, %3 : vector<32x32xf32>
    %cst_63 = arith.constant dense<0xFF800000> : vector<32xf32>
    %91 = vector.multi_reduction <maximumf>, %90, %cst_63 [1] : vector<32x32xf32> to vector<32xf32>
    %92 = vector.shape_cast %91 : vector<32xf32> to vector<32x1xf32>
    %93 = vector.broadcast %92 : vector<32x1xf32> to vector<32x32xf32>
    %94 = arith.subf %90, %93 : vector<32x32xf32>
    %95 = math.exp %94 : vector<32x32xf32>
    %cst_64 = arith.constant dense<0.000000e+00> : vector<32xf32>
    %96 = vector.multi_reduction <add>, %95, %cst_64 [1] : vector<32x32xf32> to vector<32xf32>
    %97 = vector.shape_cast %96 : vector<32xf32> to vector<32x1xf32>
    %98 = vector.broadcast %97 : vector<32x1xf32> to vector<32x32xf32>
    %99 = arith.divf %95, %98 : vector<32x32xf32>
    %cst_65 = arith.constant dense<0.000000e+00> : vector<32x2xf32>
    %100 = tpu.matmul %99, %72, %cst_65 {dimension_numbers = #tpu.dot_dimension_numbers<[1], [0], [0], [1], [0, 0, 1, 1], [], []>} : vector<32x32xf32>, vector<32x2xf32>, vector<32x2xf32> -> vector<32x2xf32>
    %101 = vector.extract_strided_slice %100 {offsets = [0, 0], sizes = [16, 2], strides = [1, 1]} : vector<32x2xf32> to vector<16x2xf32>
    %102 = vector.extract_strided_slice %100 {offsets = [16, 0], sizes = [16, 2], strides = [1, 1]} : vector<32x2xf32> to vector<16x2xf32>
    %103 = arith.addf %101, %102 : vector<16x2xf32>
    %104 = arith.addf %103, %86 : vector<16x2xf32>
    %cst_66 = arith.constant dense<0.000000e+00> : vector<16x8xf32>
    %105 = tpu.matmul %104, %5, %cst_66 {dimension_numbers = #tpu.dot_dimension_numbers<[1], [0], [0], [1], [0, 0, 1, 1], [], []>} : vector<16x2xf32>, vector<2x8xf32>, vector<16x8xf32> -> vector<16x8xf32>
    %cst_67 = arith.constant dense<0.000000e+00> : vector<16x8xf32>
    %106 = tpu.matmul %69, %6, %cst_67 {dimension_numbers = #tpu.dot_dimension_numbers<[1], [0], [0], [1], [0, 0, 1, 1], [], []>} : vector<16x4xf32>, vector<4x8xf32>, vector<16x8xf32> -> vector<16x8xf32>
    %107 = arith.addf %105, %106 : vector<16x8xf32>
    %cst_68 = arith.constant dense<0.000000e+00> : vector<32x8xf32>
    %108 = tpu.matmul %4, %107, %cst_68 {dimension_numbers = #tpu.dot_dimension_numbers<[1], [0], [0], [1], [0, 0, 1, 1], [], []>} : vector<32x16xf32>, vector<16x8xf32>, vector<32x8xf32> -> vector<32x8xf32>
    %109 = arith.addf %108, %7 : vector<32x8xf32>
    %110 = arith.negf %109 : vector<32x8xf32>
    %111 = math.exp %110 : vector<32x8xf32>
    %cst_69 = arith.constant 1.000000e+00 : f32
    %112 = vector.broadcast %cst_69 : f32 to vector<32x8xf32>
    %113 = arith.addf %112, %111 : vector<32x8xf32>
    %114 = arith.divf %112, %113 : vector<32x8xf32>
    %115 = vector.extract_strided_slice %114 {offsets = [0, 0], sizes = [16, 4], strides = [1, 1]} : vector<32x8xf32> to vector<16x4xf32>
    %116 = vector.extract_strided_slice %114 {offsets = [16, 4], sizes = [16, 4], strides = [1, 1]} : vector<32x8xf32> to vector<16x4xf32>
    %117 = arith.mulf %115, %69 : vector<16x4xf32>
    %cst_70 = arith.constant dense<0.000000e+00> : vector<16x4xf32>
    %118 = tpu.matmul %117, %9, %cst_70 {dimension_numbers = #tpu.dot_dimension_numbers<[1], [0], [0], [1], [0, 0, 1, 1], [], []>} : vector<16x4xf32>, vector<4x4xf32>, vector<16x4xf32> -> vector<16x4xf32>
    %119 = arith.addf %81, %118 : vector<16x4xf32>
    %cst_71 = arith.constant dense<0.000000e+00> : vector<16x4xf32>
    %120 = tpu.matmul %8, %119, %cst_71 {dimension_numbers = #tpu.dot_dimension_numbers<[1], [0], [0], [1], [0, 0, 1, 1], [], []>} : vector<16x16xf32>, vector<16x4xf32>, vector<16x4xf32> -> vector<16x4xf32>
    %121 = arith.addf %120, %10 : vector<16x4xf32>
    %122 = math.tanh %121 : vector<16x4xf32>
    %123 = arith.mulf %116, %69 : vector<16x4xf32>
    %cst_72 = arith.constant 1.000000e+00 : f32
    %124 = vector.broadcast %cst_72 : f32 to vector<16x4xf32>
    %125 = arith.subf %124, %116 : vector<16x4xf32>
    %126 = arith.mulf %125, %122 : vector<16x4xf32>
    %127 = arith.addf %123, %126 : vector<16x4xf32>
    %c2_i32 = arith.constant 2 : i32
    %c0_73 = arith.constant 0 : index
    %128 = arith.index_cast %c2_i32 : i32 to index
    %c0_74 = arith.constant 0 : index
    %c0_75 = arith.constant 0 : index
    %129 = vector.load %arg1[%c0_73, %128, %c0_74, %c0_75] : memref<1x4x32x2xf32, #tpu.memory_space<vmem>>, vector<1x1x32x2xf32>
    %130 = vector.shape_cast %129 : vector<1x1x32x2xf32> to vector<32x2xf32>
    %c0_76 = arith.constant 0 : index
    %131 = arith.index_cast %c2_i32 : i32 to index
    %c0_77 = arith.constant 0 : index
    %c0_78 = arith.constant 0 : index
    %132 = vector.load %arg2[%c0_76, %131, %c0_77, %c0_78] : memref<1x4x16x32xf32, #tpu.memory_space<vmem>>, vector<1x1x16x32xf32>
    %133 = vector.shape_cast %132 : vector<1x1x16x32xf32> to vector<16x32xf32>
    %c0_79 = arith.constant 0 : index
    %134 = arith.index_cast %c2_i32 : i32 to index
    %c0_80 = arith.constant 0 : index
    %c0_81 = arith.constant 0 : index
    %135 = vector.load %arg3[%c0_79, %134, %c0_80, %c0_81] : memref<1x4x16x2xf32, #tpu.memory_space<vmem>>, vector<1x1x16x2xf32>
    %136 = vector.shape_cast %135 : vector<1x1x16x2xf32> to vector<16x2xf32>
    %c0_82 = arith.constant 0 : index
    %137 = arith.index_cast %c2_i32 : i32 to index
    %c0_83 = arith.constant 0 : index
    %c0_84 = arith.constant 0 : index
    %138 = vector.load %arg4[%c0_82, %137, %c0_83, %c0_84] : memref<1x4x16x4xf32, #tpu.memory_space<vmem>>, vector<1x1x16x4xf32>
    %139 = vector.shape_cast %138 : vector<1x1x16x4xf32> to vector<16x4xf32>
    %cst_85 = arith.constant dense<0.000000e+00> : vector<16x2xf32>
    %140 = tpu.matmul %127, %0, %cst_85 {dimension_numbers = #tpu.dot_dimension_numbers<[1], [0], [0], [1], [0, 0, 1, 1], [], []>} : vector<16x4xf32>, vector<4x2xf32>, vector<16x2xf32> -> vector<16x2xf32>
    %141 = arith.addf %136, %140 : vector<16x2xf32>
    %142 = math.tanh %141 : vector<16x2xf32>
    %cst_86 = arith.constant 5.000000e-01 : f32
    %143 = vector.broadcast %cst_86 : f32 to vector<16x2xf32>
    %144 = arith.mulf %142, %143 : vector<16x2xf32>
    %cst_87 = arith.constant dense<0.000000e+00> : vector<16x32xf32>
    %145 = tpu.matmul %127, %1, %cst_87 {dimension_numbers = #tpu.dot_dimension_numbers<[1], [0], [0], [1], [0, 0, 1, 1], [], []>} : vector<16x4xf32>, vector<4x32xf32>, vector<16x32xf32> -> vector<16x32xf32>
    %146 = arith.addf %133, %145 : vector<16x32xf32>
    %cst_88 = arith.constant dense<0.000000e+00> : vector<32x32xf32>
    %147 = tpu.matmul %2, %146, %cst_88 {dimension_numbers = #tpu.dot_dimension_numbers<[1], [0], [0], [1], [0, 0, 1, 1], [], []>} : vector<32x16xf32>, vector<16x32xf32>, vector<32x32xf32> -> vector<32x32xf32>
    %148 = arith.addf %147, %3 : vector<32x32xf32>
    %cst_89 = arith.constant dense<0xFF800000> : vector<32xf32>
    %149 = vector.multi_reduction <maximumf>, %148, %cst_89 [1] : vector<32x32xf32> to vector<32xf32>
    %150 = vector.shape_cast %149 : vector<32xf32> to vector<32x1xf32>
    %151 = vector.broadcast %150 : vector<32x1xf32> to vector<32x32xf32>
    %152 = arith.subf %148, %151 : vector<32x32xf32>
    %153 = math.exp %152 : vector<32x32xf32>
    %cst_90 = arith.constant dense<0.000000e+00> : vector<32xf32>
    %154 = vector.multi_reduction <add>, %153, %cst_90 [1] : vector<32x32xf32> to vector<32xf32>
    %155 = vector.shape_cast %154 : vector<32xf32> to vector<32x1xf32>
    %156 = vector.broadcast %155 : vector<32x1xf32> to vector<32x32xf32>
    %157 = arith.divf %153, %156 : vector<32x32xf32>
    %cst_91 = arith.constant dense<0.000000e+00> : vector<32x2xf32>
    %158 = tpu.matmul %157, %130, %cst_91 {dimension_numbers = #tpu.dot_dimension_numbers<[1], [0], [0], [1], [0, 0, 1, 1], [], []>} : vector<32x32xf32>, vector<32x2xf32>, vector<32x2xf32> -> vector<32x2xf32>
    %159 = vector.extract_strided_slice %158 {offsets = [0, 0], sizes = [16, 2], strides = [1, 1]} : vector<32x2xf32> to vector<16x2xf32>
    %160 = vector.extract_strided_slice %158 {offsets = [16, 0], sizes = [16, 2], strides = [1, 1]} : vector<32x2xf32> to vector<16x2xf32>
    %161 = arith.addf %159, %160 : vector<16x2xf32>
    %162 = arith.addf %161, %144 : vector<16x2xf32>
    %cst_92 = arith.constant dense<0.000000e+00> : vector<16x8xf32>
    %163 = tpu.matmul %162, %5, %cst_92 {dimension_numbers = #tpu.dot_dimension_numbers<[1], [0], [0], [1], [0, 0, 1, 1], [], []>} : vector<16x2xf32>, vector<2x8xf32>, vector<16x8xf32> -> vector<16x8xf32>
    %cst_93 = arith.constant dense<0.000000e+00> : vector<16x8xf32>
    %164 = tpu.matmul %127, %6, %cst_93 {dimension_numbers = #tpu.dot_dimension_numbers<[1], [0], [0], [1], [0, 0, 1, 1], [], []>} : vector<16x4xf32>, vector<4x8xf32>, vector<16x8xf32> -> vector<16x8xf32>
    %165 = arith.addf %163, %164 : vector<16x8xf32>
    %cst_94 = arith.constant dense<0.000000e+00> : vector<32x8xf32>
    %166 = tpu.matmul %4, %165, %cst_94 {dimension_numbers = #tpu.dot_dimension_numbers<[1], [0], [0], [1], [0, 0, 1, 1], [], []>} : vector<32x16xf32>, vector<16x8xf32>, vector<32x8xf32> -> vector<32x8xf32>
    %167 = arith.addf %166, %7 : vector<32x8xf32>
    %168 = arith.negf %167 : vector<32x8xf32>
    %169 = math.exp %168 : vector<32x8xf32>
    %cst_95 = arith.constant 1.000000e+00 : f32
    %170 = vector.broadcast %cst_95 : f32 to vector<32x8xf32>
    %171 = arith.addf %170, %169 : vector<32x8xf32>
    %172 = arith.divf %170, %171 : vector<32x8xf32>
    %173 = vector.extract_strided_slice %172 {offsets = [0, 0], sizes = [16, 4], strides = [1, 1]} : vector<32x8xf32> to vector<16x4xf32>
    %174 = vector.extract_strided_slice %172 {offsets = [16, 4], sizes = [16, 4], strides = [1, 1]} : vector<32x8xf32> to vector<16x4xf32>
    %175 = arith.mulf %173, %127 : vector<16x4xf32>
    %cst_96 = arith.constant dense<0.000000e+00> : vector<16x4xf32>
    %176 = tpu.matmul %175, %9, %cst_96 {dimension_numbers = #tpu.dot_dimension_numbers<[1], [0], [0], [1], [0, 0, 1, 1], [], []>} : vector<16x4xf32>, vector<4x4xf32>, vector<16x4xf32> -> vector<16x4xf32>
    %177 = arith.addf %139, %176 : vector<16x4xf32>
    %cst_97 = arith.constant dense<0.000000e+00> : vector<16x4xf32>
    %178 = tpu.matmul %8, %177, %cst_97 {dimension_numbers = #tpu.dot_dimension_numbers<[1], [0], [0], [1], [0, 0, 1, 1], [], []>} : vector<16x16xf32>, vector<16x4xf32>, vector<16x4xf32> -> vector<16x4xf32>
    %179 = arith.addf %178, %10 : vector<16x4xf32>
    %180 = math.tanh %179 : vector<16x4xf32>
    %181 = arith.mulf %174, %127 : vector<16x4xf32>
    %cst_98 = arith.constant 1.000000e+00 : f32
    %182 = vector.broadcast %cst_98 : f32 to vector<16x4xf32>
    %183 = arith.subf %182, %174 : vector<16x4xf32>
    %184 = arith.mulf %183, %180 : vector<16x4xf32>
    %185 = arith.addf %181, %184 : vector<16x4xf32>
    %c3_i32 = arith.constant 3 : i32
    %c0_99 = arith.constant 0 : index
    %186 = arith.index_cast %c3_i32 : i32 to index
    %c0_100 = arith.constant 0 : index
    %c0_101 = arith.constant 0 : index
    %187 = vector.load %arg1[%c0_99, %186, %c0_100, %c0_101] : memref<1x4x32x2xf32, #tpu.memory_space<vmem>>, vector<1x1x32x2xf32>
    %188 = vector.shape_cast %187 : vector<1x1x32x2xf32> to vector<32x2xf32>
    %c0_102 = arith.constant 0 : index
    %189 = arith.index_cast %c3_i32 : i32 to index
    %c0_103 = arith.constant 0 : index
    %c0_104 = arith.constant 0 : index
    %190 = vector.load %arg2[%c0_102, %189, %c0_103, %c0_104] : memref<1x4x16x32xf32, #tpu.memory_space<vmem>>, vector<1x1x16x32xf32>
    %191 = vector.shape_cast %190 : vector<1x1x16x32xf32> to vector<16x32xf32>
    %c0_105 = arith.constant 0 : index
    %192 = arith.index_cast %c3_i32 : i32 to index
    %c0_106 = arith.constant 0 : index
    %c0_107 = arith.constant 0 : index
    %193 = vector.load %arg3[%c0_105, %192, %c0_106, %c0_107] : memref<1x4x16x2xf32, #tpu.memory_space<vmem>>, vector<1x1x16x2xf32>
    %194 = vector.shape_cast %193 : vector<1x1x16x2xf32> to vector<16x2xf32>
    %c0_108 = arith.constant 0 : index
    %195 = arith.index_cast %c3_i32 : i32 to index
    %c0_109 = arith.constant 0 : index
    %c0_110 = arith.constant 0 : index
    %196 = vector.load %arg4[%c0_108, %195, %c0_109, %c0_110] : memref<1x4x16x4xf32, #tpu.memory_space<vmem>>, vector<1x1x16x4xf32>
    %197 = vector.shape_cast %196 : vector<1x1x16x4xf32> to vector<16x4xf32>
    %cst_111 = arith.constant dense<0.000000e+00> : vector<16x2xf32>
    %198 = tpu.matmul %185, %0, %cst_111 {dimension_numbers = #tpu.dot_dimension_numbers<[1], [0], [0], [1], [0, 0, 1, 1], [], []>} : vector<16x4xf32>, vector<4x2xf32>, vector<16x2xf32> -> vector<16x2xf32>
    %199 = arith.addf %194, %198 : vector<16x2xf32>
    %200 = math.tanh %199 : vector<16x2xf32>
    %cst_112 = arith.constant 5.000000e-01 : f32
    %201 = vector.broadcast %cst_112 : f32 to vector<16x2xf32>
    %202 = arith.mulf %200, %201 : vector<16x2xf32>
    %cst_113 = arith.constant dense<0.000000e+00> : vector<16x32xf32>
    %203 = tpu.matmul %185, %1, %cst_113 {dimension_numbers = #tpu.dot_dimension_numbers<[1], [0], [0], [1], [0, 0, 1, 1], [], []>} : vector<16x4xf32>, vector<4x32xf32>, vector<16x32xf32> -> vector<16x32xf32>
    %204 = arith.addf %191, %203 : vector<16x32xf32>
    %cst_114 = arith.constant dense<0.000000e+00> : vector<32x32xf32>
    %205 = tpu.matmul %2, %204, %cst_114 {dimension_numbers = #tpu.dot_dimension_numbers<[1], [0], [0], [1], [0, 0, 1, 1], [], []>} : vector<32x16xf32>, vector<16x32xf32>, vector<32x32xf32> -> vector<32x32xf32>
    %206 = arith.addf %205, %3 : vector<32x32xf32>
    %cst_115 = arith.constant dense<0xFF800000> : vector<32xf32>
    %207 = vector.multi_reduction <maximumf>, %206, %cst_115 [1] : vector<32x32xf32> to vector<32xf32>
    %208 = vector.shape_cast %207 : vector<32xf32> to vector<32x1xf32>
    %209 = vector.broadcast %208 : vector<32x1xf32> to vector<32x32xf32>
    %210 = arith.subf %206, %209 : vector<32x32xf32>
    %211 = math.exp %210 : vector<32x32xf32>
    %cst_116 = arith.constant dense<0.000000e+00> : vector<32xf32>
    %212 = vector.multi_reduction <add>, %211, %cst_116 [1] : vector<32x32xf32> to vector<32xf32>
    %213 = vector.shape_cast %212 : vector<32xf32> to vector<32x1xf32>
    %214 = vector.broadcast %213 : vector<32x1xf32> to vector<32x32xf32>
    %215 = arith.divf %211, %214 : vector<32x32xf32>
    %cst_117 = arith.constant dense<0.000000e+00> : vector<32x2xf32>
    %216 = tpu.matmul %215, %188, %cst_117 {dimension_numbers = #tpu.dot_dimension_numbers<[1], [0], [0], [1], [0, 0, 1, 1], [], []>} : vector<32x32xf32>, vector<32x2xf32>, vector<32x2xf32> -> vector<32x2xf32>
    %217 = vector.extract_strided_slice %216 {offsets = [0, 0], sizes = [16, 2], strides = [1, 1]} : vector<32x2xf32> to vector<16x2xf32>
    %218 = vector.extract_strided_slice %216 {offsets = [16, 0], sizes = [16, 2], strides = [1, 1]} : vector<32x2xf32> to vector<16x2xf32>
    %219 = arith.addf %217, %218 : vector<16x2xf32>
    %220 = arith.addf %219, %202 : vector<16x2xf32>
    %cst_118 = arith.constant dense<0.000000e+00> : vector<16x8xf32>
    %221 = tpu.matmul %220, %5, %cst_118 {dimension_numbers = #tpu.dot_dimension_numbers<[1], [0], [0], [1], [0, 0, 1, 1], [], []>} : vector<16x2xf32>, vector<2x8xf32>, vector<16x8xf32> -> vector<16x8xf32>
    %cst_119 = arith.constant dense<0.000000e+00> : vector<16x8xf32>
    %222 = tpu.matmul %185, %6, %cst_119 {dimension_numbers = #tpu.dot_dimension_numbers<[1], [0], [0], [1], [0, 0, 1, 1], [], []>} : vector<16x4xf32>, vector<4x8xf32>, vector<16x8xf32> -> vector<16x8xf32>
    %223 = arith.addf %221, %222 : vector<16x8xf32>
    %cst_120 = arith.constant dense<0.000000e+00> : vector<32x8xf32>
    %224 = tpu.matmul %4, %223, %cst_120 {dimension_numbers = #tpu.dot_dimension_numbers<[1], [0], [0], [1], [0, 0, 1, 1], [], []>} : vector<32x16xf32>, vector<16x8xf32>, vector<32x8xf32> -> vector<32x8xf32>
    %225 = arith.addf %224, %7 : vector<32x8xf32>
    %226 = arith.negf %225 : vector<32x8xf32>
    %227 = math.exp %226 : vector<32x8xf32>
    %cst_121 = arith.constant 1.000000e+00 : f32
    %228 = vector.broadcast %cst_121 : f32 to vector<32x8xf32>
    %229 = arith.addf %228, %227 : vector<32x8xf32>
    %230 = arith.divf %228, %229 : vector<32x8xf32>
    %231 = vector.extract_strided_slice %230 {offsets = [0, 0], sizes = [16, 4], strides = [1, 1]} : vector<32x8xf32> to vector<16x4xf32>
    %232 = vector.extract_strided_slice %230 {offsets = [16, 4], sizes = [16, 4], strides = [1, 1]} : vector<32x8xf32> to vector<16x4xf32>
    %233 = arith.mulf %231, %185 : vector<16x4xf32>
    %cst_122 = arith.constant dense<0.000000e+00> : vector<16x4xf32>
    %234 = tpu.matmul %233, %9, %cst_122 {dimension_numbers = #tpu.dot_dimension_numbers<[1], [0], [0], [1], [0, 0, 1, 1], [], []>} : vector<16x4xf32>, vector<4x4xf32>, vector<16x4xf32> -> vector<16x4xf32>
    %235 = arith.addf %197, %234 : vector<16x4xf32>
    %cst_123 = arith.constant dense<0.000000e+00> : vector<16x4xf32>
    %236 = tpu.matmul %8, %235, %cst_123 {dimension_numbers = #tpu.dot_dimension_numbers<[1], [0], [0], [1], [0, 0, 1, 1], [], []>} : vector<16x16xf32>, vector<16x4xf32>, vector<16x4xf32> -> vector<16x4xf32>
    %237 = arith.addf %236, %10 : vector<16x4xf32>
    %238 = math.tanh %237 : vector<16x4xf32>
    %239 = arith.mulf %232, %185 : vector<16x4xf32>
    %cst_124 = arith.constant 1.000000e+00 : f32
    %240 = vector.broadcast %cst_124 : f32 to vector<16x4xf32>
    %241 = arith.subf %240, %232 : vector<16x4xf32>
    %242 = arith.mulf %241, %238 : vector<16x4xf32>
    %243 = arith.addf %239, %242 : vector<16x4xf32>
    %c4_i32 = arith.constant 4 : i32
    %c0_125 = arith.constant 0 : index
    %c0_126 = arith.constant 0 : index
    %c0_127 = arith.constant 0 : index
    %244 = vector.load %arg16[%c0_125, %c0_126, %c0_127] : memref<1x16x4xf32, #tpu.memory_space<vmem>>, vector<1x16x4xf32>
    %245 = vector.shape_cast %244 : vector<1x16x4xf32> to vector<16x4xf32>
    %246 = vector.shape_cast %243 : vector<16x4xf32> to vector<1x16x4xf32>
    tpu.vector_store %arg16[%c0_125, %c0_126, %c0_127], %246 {strides = array<i32>} : memref<1x16x4xf32, #tpu.memory_space<vmem>>, vector<1x16x4xf32>,
    return
  }
  func.func @transform_0(%arg0: i32) -> (i32, i32, i32, i32) {
    %c0_i32 = arith.constant 0 : i32
    %c0_i32_0 = arith.constant 0 : i32
    %c0_i32_1 = arith.constant 0 : i32
    %c0_i32_2 = arith.constant 0 : i32
    return %arg0, %c0_i32, %c0_i32_0, %c0_i32_1 : i32, i32, i32, i32
  }
  func.func @transform_1(%arg0: i32) -> (i32, i32, i32, i32) {
    %c0_i32 = arith.constant 0 : i32
    %c0_i32_0 = arith.constant 0 : i32
    %c0_i32_1 = arith.constant 0 : i32
    %c0_i32_2 = arith.constant 0 : i32
    return %arg0, %c0_i32, %c0_i32_0, %c0_i32_1 : i32, i32, i32, i32
  }
  func.func @transform_2(%arg0: i32) -> (i32, i32, i32, i32) {
    %c0_i32 = arith.constant 0 : i32
    %c0_i32_0 = arith.constant 0 : i32
    %c0_i32_1 = arith.constant 0 : i32
    %c0_i32_2 = arith.constant 0 : i32
    return %arg0, %c0_i32, %c0_i32_0, %c0_i32_1 : i32, i32, i32, i32
  }
  func.func @transform_3(%arg0: i32) -> (i32, i32, i32, i32) {
    %c0_i32 = arith.constant 0 : i32
    %c0_i32_0 = arith.constant 0 : i32
    %c0_i32_1 = arith.constant 0 : i32
    %c0_i32_2 = arith.constant 0 : i32
    return %arg0, %c0_i32, %c0_i32_0, %c0_i32_1 : i32, i32, i32, i32
  }
  func.func @transform_4(%arg0: i32) -> (i32, i32) {
    %c0_i32 = arith.constant 0 : i32
    %c0_i32_0 = arith.constant 0 : i32
    %c0_i32_1 = arith.constant 0 : i32
    return %c0_i32, %c0_i32_0 : i32, i32
  }
  func.func @transform_5(%arg0: i32) -> (i32, i32) {
    %c0_i32 = arith.constant 0 : i32
    %c0_i32_0 = arith.constant 0 : i32
    %c0_i32_1 = arith.constant 0 : i32
    return %c0_i32, %c0_i32_0 : i32, i32
  }
  func.func @transform_6(%arg0: i32) -> (i32, i32) {
    %c0_i32 = arith.constant 0 : i32
    %c0_i32_0 = arith.constant 0 : i32
    %c0_i32_1 = arith.constant 0 : i32
    return %c0_i32, %c0_i32_0 : i32, i32
  }
  func.func @transform_7(%arg0: i32) -> (i32, i32) {
    %c0_i32 = arith.constant 0 : i32
    %c0_i32_0 = arith.constant 0 : i32
    %c0_i32_1 = arith.constant 0 : i32
    return %c0_i32, %c0_i32_0 : i32, i32
  }
  func.func @transform_8(%arg0: i32) -> (i32, i32) {
    %c0_i32 = arith.constant 0 : i32
    %c0_i32_0 = arith.constant 0 : i32
    %c0_i32_1 = arith.constant 0 : i32
    return %c0_i32, %c0_i32_0 : i32, i32
  }
  func.func @transform_9(%arg0: i32) -> (i32, i32) {
    %c0_i32 = arith.constant 0 : i32
    %c0_i32_0 = arith.constant 0 : i32
    %c0_i32_1 = arith.constant 0 : i32
    return %c0_i32, %c0_i32_0 : i32, i32
  }
  func.func @transform_10(%arg0: i32) -> (i32, i32) {
    %c0_i32 = arith.constant 0 : i32
    %c0_i32_0 = arith.constant 0 : i32
    %c0_i32_1 = arith.constant 0 : i32
    return %c0_i32, %c0_i32_0 : i32, i32
  }
  func.func @transform_11(%arg0: i32) -> (i32, i32) {
    %c0_i32 = arith.constant 0 : i32
    %c0_i32_0 = arith.constant 0 : i32
    %c0_i32_1 = arith.constant 0 : i32
    return %c0_i32, %c0_i32_0 : i32, i32
  }
  func.func @transform_12(%arg0: i32) -> (i32, i32) {
    %c0_i32 = arith.constant 0 : i32
    %c0_i32_0 = arith.constant 0 : i32
    %c0_i32_1 = arith.constant 0 : i32
    return %c0_i32, %c0_i32_0 : i32, i32
  }
  func.func @transform_13(%arg0: i32) -> (i32, i32) {
    %c0_i32 = arith.constant 0 : i32
    %c0_i32_0 = arith.constant 0 : i32
    %c0_i32_1 = arith.constant 0 : i32
    return %c0_i32, %c0_i32_0 : i32, i32
  }
  func.func @transform_14(%arg0: i32) -> (i32, i32) {
    %c0_i32 = arith.constant 0 : i32
    %c0_i32_0 = arith.constant 0 : i32
    %c0_i32_1 = arith.constant 0 : i32
    return %c0_i32, %c0_i32_0 : i32, i32
  }
  func.func @transform_15(%arg0: i32) -> (i32, i32, i32) {
    %c0_i32 = arith.constant 0 : i32
    %c0_i32_0 = arith.constant 0 : i32
    %c0_i32_1 = arith.constant 0 : i32
    return %arg0, %c0_i32, %c0_i32_0 : i32, i32, i32
  }
}

</mosaic_0001>

<llo_original>
// kernel: tpu_custom_call.1
$region0: #{tpu_custom_call.1}
  #allocation0 [shape = 'u32[]', space=smem, size = 0x4, offset = 0x4, fixed_abs, tag = 'smem constant byte address 0x4 - core index']
  #allocation1 [shape = 'u32[144,128]{1,0:T(1,128)}', space=vmem, size = 0x12000, scoped, tag = 'internal scratch']
  %s0 = inlined_call_operand.vmem [shape: f32[2,4,32,2], index: 0, kind: input, shape index: {}]
  %s1 = inlined_call_operand.vmem [shape: f32[2,4,16,32], index: 1, kind: input, shape index: {}]
  %s2 = inlined_call_operand.vmem [shape: f32[2,4,16,2], index: 2, kind: input, shape index: {}]
  %s3 = inlined_call_operand.vmem [shape: f32[2,4,16,4], index: 3, kind: input, shape index: {}]
  %s4 = inlined_call_operand.vmem [shape: f32[4,2], index: 4, kind: input, shape index: {}]
  %s5 = inlined_call_operand.vmem [shape: f32[4,32], index: 5, kind: input, shape index: {}]
  %s6 = inlined_call_operand.vmem [shape: f32[32,16], index: 6, kind: input, shape index: {}]
  %s7 = inlined_call_operand.vmem [shape: f32[32,32], index: 7, kind: input, shape index: {}]
  %s8 = inlined_call_operand.vmem [shape: f32[32,16], index: 8, kind: input, shape index: {}]
  %s9 = inlined_call_operand.vmem [shape: f32[2,8], index: 9, kind: input, shape index: {}]
  %s10 = inlined_call_operand.vmem [shape: f32[4,8], index: 10, kind: input, shape index: {}]
  %s11 = inlined_call_operand.vmem [shape: f32[32,8], index: 11, kind: input, shape index: {}]
  %s12 = inlined_call_operand.vmem [shape: f32[16,16], index: 12, kind: input, shape index: {}]
  %s13 = inlined_call_operand.vmem [shape: f32[4,4], index: 13, kind: input, shape index: {}]
  %s14 = inlined_call_operand.vmem [shape: f32[16,4], index: 14, kind: input, shape index: {}]
  %s15 = inlined_call_operand.vmem [shape: f32[2,16,4], index: 15, kind: output, shape index: {}]
  %s16 = sld [smem:[#allocation0]]
  $region93: #{tpu_custom_call.1} parent=0
    _
  %s18 = ssub.s32 1, %s16
  %s19 = scalar_select 0, %s18, %s16
  loop: start=0, step=1, limit=4
  $region2: #{tpu_custom_call.1} parent=0 // loop_pre_header
    _
  $region3: #{tpu_custom_call.1} parent=0 // loop_header
    %s21 = sphi 0, %s25
    %p22 = scmp.ge.s32.totalorder %s21, 4
    %s31 = sphi 0, %s33
    %s34 = sphi 0, %s31
    %s35 = sphi 0, %s34
    %s51 = sphi 0, %s35
    %s57 = sphi 0, %s59
    %s60 = sphi 0, %s57
    %s61 = sphi 0, %s60
    %s77 = sphi 0, %s61
    %s83 = sphi 0, %s85
    %s86 = sphi 0, %s83
    %s87 = sphi 0, %s86
    %s103 = sphi 0, %s87
    %s109 = sphi 0, %s111
    %s112 = sphi 0, %s109
    %s113 = sphi 0, %s112
    %s129 = sphi 0, %s113
    %s133 = sphi 0, %s133
    %s135 = sphi 0, %s133
    %s136 = sphi 0, %s135
    %s150 = sphi 0, %s136
    %s154 = sphi 0, %s154
    %s156 = sphi 0, %s154
    %s157 = sphi 0, %s156
    %s171 = sphi 0, %s157
    %s175 = sphi 0, %s175
    %s177 = sphi 0, %s175
    %s178 = sphi 0, %s177
    %s192 = sphi 0, %s178
    %s196 = sphi 0, %s196
    %s198 = sphi 0, %s196
    %s199 = sphi 0, %s198
    %s213 = sphi 0, %s199
    %s217 = sphi 0, %s217
    %s219 = sphi 0, %s217
    %s220 = sphi 0, %s219
    %s234 = sphi 0, %s220
    %s238 = sphi 0, %s238
    %s240 = sphi 0, %s238
    %s241 = sphi 0, %s240
    %s255 = sphi 0, %s241
    %s259 = sphi 0, %s259
    %s261 = sphi 0, %s259
    %s262 = sphi 0, %s261
    %s276 = sphi 0, %s262
    %s280 = sphi 0, %s280
    %s282 = sphi 0, %s280
    %s283 = sphi 0, %s282
    %s297 = sphi 0, %s283
    %s301 = sphi 0, %s301
    %s303 = sphi 0, %s301
    %s304 = sphi 0, %s303
    %s318 = sphi 0, %s304
    %s322 = sphi 0, %s322
    %s324 = sphi 0, %s322
    %s325 = sphi 0, %s324
    %s339 = sphi 0, %s325
    %s343 = sphi 0, %s343
    %s345 = sphi 0, %s343
    %s346 = sphi 0, %s345
    %s360 = sphi 0, %s346
    %s366 = sphi 0, %s368
    %s369 = sphi 0, %s366
    %s370 = sphi 0, %s369
    %s386 = sphi 0, %s370
  $region4: #{tpu_custom_call.1} parent=0 // loop_header_branch
    %24 = sbr.rel (%p22) target = $region8
  $region5: #{tpu_custom_call.1} parent=0 // loop_body
    %s26 = ssub.s32 %s21, 1
    %s27 = ssub.s32 %s21, 2
    %s28 = sadd.s32 %s21, 1
    %s29 = ssub.s32 %s21, %s28
    %p30 = scmp.eq.s32.totalorder %s29, 0
    %s32 = sadd.s32 %s31, 1
    %s33 = scalar_select %p30, %s31, %s32
    %p36 = pneg %p30
    %p37 = scmp.eq.s32.totalorder %s21, 1
    %p38 = por %p36, %p37
    %p39 = scmp.ne.s32.totalorder %s31, %s34
    %p40 = scmp.eq.s32.totalorder %s21, 0
    %p41 = por %p39, %p40
    %p42 = scmp.ne.s32.totalorder %s31, %s34
    %p43 = scmp.eq.s32.totalorder %s26, 1
    %p44 = por %p42, %p43
    %p45 = scmp.ne.s32.totalorder %s34, %s35
    %p46 = scmp.eq.s32.totalorder %s26, 0
    %p47 = por %p45, %p46
    %p48 = scmp.ne.s32.totalorder %s34, %s35
    %p49 = scmp.eq.s32.totalorder %s27, 1
    %p50 = por %p48, %p49
    %p52 = scmp.ne.s32.totalorder %s35, %s51
    %p53 = scmp.eq.s32.totalorder %s27, 0
    %p54 = por %p52, %p53
    %s55 = ssub.s32 %s21, %s28
    %p56 = scmp.eq.s32.totalorder %s55, 0
    %s58 = sadd.s32 %s57, 1
    %s59 = scalar_select %p56, %s57, %s58
    %p62 = pneg %p56
    %p63 = scmp.eq.s32.totalorder %s21, 1
    %p64 = por %p62, %p63
    %p65 = scmp.ne.s32.totalorder %s57, %s60
    %p66 = scmp.eq.s32.totalorder %s21, 0
    %p67 = por %p65, %p66
    %p68 = scmp.ne.s32.totalorder %s57, %s60
    %p69 = scmp.eq.s32.totalorder %s26, 1
    %p70 = por %p68, %p69
    %p71 = scmp.ne.s32.totalorder %s60, %s61
    %p72 = scmp.eq.s32.totalorder %s26, 0
    %p73 = por %p71, %p72
    %p74 = scmp.ne.s32.totalorder %s60, %s61
    %p75 = scmp.eq.s32.totalorder %s27, 1
    %p76 = por %p74, %p75
    %p78 = scmp.ne.s32.totalorder %s61, %s77
    %p79 = scmp.eq.s32.totalorder %s27, 0
    %p80 = por %p78, %p79
    %s81 = ssub.s32 %s21, %s28
    %p82 = scmp.eq.s32.totalorder %s81, 0
    %s84 = sadd.s32 %s83, 1
    %s85 = scalar_select %p82, %s83, %s84
    %p88 = pneg %p82
    %p89 = scmp.eq.s32.totalorder %s21, 1
    %p90 = por %p88, %p89
    %p91 = scmp.ne.s32.totalorder %s83, %s86
    %p92 = scmp.eq.s32.totalorder %s21, 0
    %p93 = por %p91, %p92
    %p94 = scmp.ne.s32.totalorder %s83, %s86
    %p95 = scmp.eq.s32.totalorder %s26, 1
    %p96 = por %p94, %p95
    %p97 = scmp.ne.s32.totalorder %s86, %s87
    %p98 = scmp.eq.s32.totalorder %s26, 0
    %p99 = por %p97, %p98
    %p100 = scmp.ne.s32.totalorder %s86, %s87
    %p101 = scmp.eq.s32.totalorder %s27, 1
    %p102 = por %p100, %p101
    %p104 = scmp.ne.s32.totalorder %s87, %s103
    %p105 = scmp.eq.s32.totalorder %s27, 0
    %p106 = por %p104, %p105
    %s107 = ssub.s32 %s21, %s28
    %p108 = scmp.eq.s32.totalorder %s107, 0
    %s110 = sadd.s32 %s109, 1
    %s111 = scalar_select %p108, %s109, %s110
    %p114 = pneg %p108
    %p115 = scmp.eq.s32.totalorder %s21, 1
    %p116 = por %p114, %p115
    %p117 = scmp.ne.s32.totalorder %s109, %s112
    %p118 = scmp.eq.s32.totalorder %s21, 0
    %p119 = por %p117, %p118
    %p120 = scmp.ne.s32.totalorder %s109, %s112
    %p121 = scmp.eq.s32.totalorder %s26, 1
    %p122 = por %p120, %p121
    %p123 = scmp.ne.s32.totalorder %s112, %s113
    %p124 = scmp.eq.s32.totalorder %s26, 0
    %p125 = por %p123, %p124
    %p126 = scmp.ne.s32.totalorder %s112, %s113
    %p127 = scmp.eq.s32.totalorder %s27, 1
    %p128 = por %p126, %p127
    %p130 = scmp.ne.s32.totalorder %s113, %s129
    %p131 = scmp.eq.s32.totalorder %s27, 0
    %p132 = por %p130, %p131
    %s134 = sadd.s32 %s133, 1
    %p137 = scmp.eq.s32.totalorder %s21, 1
    %p138 = scmp.ne.s32.totalorder %s133, %s135
    %p139 = scmp.eq.s32.totalorder %s21, 0
    %p140 = por %p138, %p139
    %p141 = scmp.ne.s32.totalorder %s133, %s135
    %p142 = scmp.eq.s32.totalorder %s26, 1
    %p143 = por %p141, %p142
    %p144 = scmp.ne.s32.totalorder %s135, %s136
    %p145 = scmp.eq.s32.totalorder %s26, 0
    %p146 = por %p144, %p145
    %p147 = scmp.ne.s32.totalorder %s135, %s136
    %p148 = scmp.eq.s32.totalorder %s27, 1
    %p149 = por %p147, %p148
    %p151 = scmp.ne.s32.totalorder %s136, %s150
    %p152 = scmp.eq.s32.totalorder %s27, 0
    %p153 = por %p151, %p152
    %s155 = sadd.s32 %s154, 1
    %p158 = scmp.eq.s32.totalorder %s21, 1
    %p159 = scmp.ne.s32.totalorder %s154, %s156
    %p160 = scmp.eq.s32.totalorder %s21, 0
    %p161 = por %p159, %p160
    %p162 = scmp.ne.s32.totalorder %s154, %s156
    %p163 = scmp.eq.s32.totalorder %s26, 1
    %p164 = por %p162, %p163
    %p165 = scmp.ne.s32.totalorder %s156, %s157
    %p166 = scmp.eq.s32.totalorder %s26, 0
    %p167 = por %p165, %p166
    %p168 = scmp.ne.s32.totalorder %s156, %s157
    %p169 = scmp.eq.s32.totalorder %s27, 1
    %p170 = por %p168, %p169
    %p172 = scmp.ne.s32.totalorder %s157, %s171
    %p173 = scmp.eq.s32.totalorder %s27, 0
    %p174 = por %p172, %p173
    %s176 = sadd.s32 %s175, 1
    %p179 = scmp.eq.s32.totalorder %s21, 1
    %p180 = scmp.ne.s32.totalorder %s175, %s177
    %p181 = scmp.eq.s32.totalorder %s21, 0
    %p182 = por %p180, %p181
    %p183 = scmp.ne.s32.totalorder %s175, %s177
    %p184 = scmp.eq.s32.totalorder %s26, 1
    %p185 = por %p183, %p184
    %p186 = scmp.ne.s32.totalorder %s177, %s178
    %p187 = scmp.eq.s32.totalorder %s26, 0
    %p188 = por %p186, %p187
    %p189 = scmp.ne.s32.totalorder %s177, %s178
    %p190 = scmp.eq.s32.totalorder %s27, 1
    %p191 = por %p189, %p190
    %p193 = scmp.ne.s32.totalorder %s178, %s192
    %p194 = scmp.eq.s32.totalorder %s27, 0
    %p195 = por %p193, %p194
    %s197 = sadd.s32 %s196, 1
    %p200 = scmp.eq.s32.totalorder %s21, 1
    %p201 = scmp.ne.s32.totalorder %s196, %s198
    %p202 = scmp.eq.s32.totalorder %s21, 0
    %p203 = por %p201, %p202
    %p204 = scmp.ne.s32.totalorder %s196, %s198
    %p205 = scmp.eq.s32.totalorder %s26, 1
    %p206 = por %p204, %p205
    %p207 = scmp.ne.s32.totalorder %s198, %s199
    %p208 = scmp.eq.s32.totalorder %s26, 0
    %p209 = por %p207, %p208
    %p210 = scmp.ne.s32.totalorder %s198, %s199
    %p211 = scmp.eq.s32.totalorder %s27, 1
    %p212 = por %p210, %p211
    %p214 = scmp.ne.s32.totalorder %s199, %s213
    %p215 = scmp.eq.s32.totalorder %s27, 0
    %p216 = por %p214, %p215
    %s218 = sadd.s32 %s217, 1
    %p221 = scmp.eq.s32.totalorder %s21, 1
    %p222 = scmp.ne.s32.totalorder %s217, %s219
    %p223 = scmp.eq.s32.totalorder %s21, 0
    %p224 = por %p222, %p223
    %p225 = scmp.ne.s32.totalorder %s217, %s219
    %p226 = scmp.eq.s32.totalorder %s26, 1
    %p227 = por %p225, %p226
    %p228 = scmp.ne.s32.totalorder %s219, %s220
    %p229 = scmp.eq.s32.totalorder %s26, 0
    %p230 = por %p228, %p229
    %p231 = scmp.ne.s32.totalorder %s219, %s220
    %p232 = scmp.eq.s32.totalorder %s27, 1
    %p233 = por %p231, %p232
    %p235 = scmp.ne.s32.totalorder %s220, %s234
    %p236 = scmp.eq.s32.totalorder %s27, 0
    %p237 = por %p235, %p236
    %s239 = sadd.s32 %s238, 1
    %p242 = scmp.eq.s32.totalorder %s21, 1
    %p243 = scmp.ne.s32.totalorder %s238, %s240
    %p244 = scmp.eq.s32.totalorder %s21, 0
    %p245 = por %p243, %p244
    %p246 = scmp.ne.s32.totalorder %s238, %s240
    %p247 = scmp.eq.s32.totalorder %s26, 1
    %p248 = por %p246, %p247
    %p249 = scmp.ne.s32.totalorder %s240, %s241
    %p250 = scmp.eq.s32.totalorder %s26, 0
    %p251 = por %p249, %p250
    %p252 = scmp.ne.s32.totalorder %s240, %s241
    %p253 = scmp.eq.s32.totalorder %s27, 1
    %p254 = por %p252, %p253
    %p256 = scmp.ne.s32.totalorder %s241, %s255
    %p257 = scmp.eq.s32.totalorder %s27, 0
    %p258 = por %p256, %p257
    %s260 = sadd.s32 %s259, 1
    %p263 = scmp.eq.s32.totalorder %s21, 1
    %p264 = scmp.ne.s32.totalorder %s259, %s261
    %p265 = scmp.eq.s32.totalorder %s21, 0
    %p266 = por %p264, %p265
    %p267 = scmp.ne.s32.totalorder %s259, %s261
    %p268 = scmp.eq.s32.totalorder %s26, 1
    %p269 = por %p267, %p268
    %p270 = scmp.ne.s32.totalorder %s261, %s262
    %p271 = scmp.eq.s32.totalorder %s26, 0
    %p272 = por %p270, %p271
    %p273 = scmp.ne.s32.totalorder %s261, %s262
    %p274 = scmp.eq.s32.totalorder %s27, 1
    %p275 = por %p273, %p274
    %p277 = scmp.ne.s32.totalorder %s262, %s276
    %p278 = scmp.eq.s32.totalorder %s27, 0
    %p279 = por %p277, %p278
    %s281 = sadd.s32 %s280, 1
    %p284 = scmp.eq.s32.totalorder %s21, 1
    %p285 = scmp.ne.s32.totalorder %s280, %s282
    %p286 = scmp.eq.s32.totalorder %s21, 0
    %p287 = por %p285, %p286
    %p288 = scmp.ne.s32.totalorder %s280, %s282
    %p289 = scmp.eq.s32.totalorder %s26, 1
    %p290 = por %p288, %p289
    %p291 = scmp.ne.s32.totalorder %s282, %s283
    %p292 = scmp.eq.s32.totalorder %s26, 0
    %p293 = por %p291, %p292
    %p294 = scmp.ne.s32.totalorder %s282, %s283
    %p295 = scmp.eq.s32.totalorder %s27, 1
    %p296 = por %p294, %p295
    %p298 = scmp.ne.s32.totalorder %s283, %s297
    %p299 = scmp.eq.s32.totalorder %s27, 0
    %p300 = por %p298, %p299
    %s302 = sadd.s32 %s301, 1
    %p305 = scmp.eq.s32.totalorder %s21, 1
    %p306 = scmp.ne.s32.totalorder %s301, %s303
    %p307 = scmp.eq.s32.totalorder %s21, 0
    %p308 = por %p306, %p307
    %p309 = scmp.ne.s32.totalorder %s301, %s303
    %p310 = scmp.eq.s32.totalorder %s26, 1
    %p311 = por %p309, %p310
    %p312 = scmp.ne.s32.totalorder %s303, %s304
    %p313 = scmp.eq.s32.totalorder %s26, 0
    %p314 = por %p312, %p313
    %p315 = scmp.ne.s32.totalorder %s303, %s304
    %p316 = scmp.eq.s32.totalorder %s27, 1
    %p317 = por %p315, %p316
    %p319 = scmp.ne.s32.totalorder %s304, %s318
    %p320 = scmp.eq.s32.totalorder %s27, 0
    %p321 = por %p319, %p320
    %s323 = sadd.s32 %s322, 1
    %p326 = scmp.eq.s32.totalorder %s21, 1
    %p327 = scmp.ne.s32.totalorder %s322, %s324
    %p328 = scmp.eq.s32.totalorder %s21, 0
    %p329 = por %p327, %p328
    %p330 = scmp.ne.s32.totalorder %s322, %s324
    %p331 = scmp.eq.s32.totalorder %s26, 1
    %p332 = por %p330, %p331
    %p333 = scmp.ne.s32.totalorder %s324, %s325
    %p334 = scmp.eq.s32.totalorder %s26, 0
    %p335 = por %p333, %p334
    %p336 = scmp.ne.s32.totalorder %s324, %s325
    %p337 = scmp.eq.s32.totalorder %s27, 1
    %p338 = por %p336, %p337
    %p340 = scmp.ne.s32.totalorder %s325, %s339
    %p341 = scmp.eq.s32.totalorder %s27, 0
    %p342 = por %p340, %p341
    %s344 = sadd.s32 %s343, 1
    %p347 = scmp.eq.s32.totalorder %s21, 1
    %p348 = scmp.ne.s32.totalorder %s343, %s345
    %p349 = scmp.eq.s32.totalorder %s21, 0
    %p350 = por %p348, %p349
    %p351 = scmp.ne.s32.totalorder %s343, %s345
    %p352 = scmp.eq.s32.totalorder %s26, 1
    %p353 = por %p351, %p352
    %p354 = scmp.ne.s32.totalorder %s345, %s346
    %p355 = scmp.eq.s32.totalorder %s26, 0
    %p356 = por %p354, %p355
    %p357 = scmp.ne.s32.totalorder %s345, %s346
    %p358 = scmp.eq.s32.totalorder %s27, 1
    %p359 = por %p357, %p358
    %p361 = scmp.ne.s32.totalorder %s346, %s360
    %p362 = scmp.eq.s32.totalorder %s27, 0
    %p363 = por %p361, %p362
    %s364 = ssub.s32 %s21, %s28
    %p365 = scmp.eq.s32.totalorder %s364, 0
    %s367 = sadd.s32 %s366, 1
    %s368 = scalar_select %p365, %s366, %s367
    %p371 = pneg %p365
    %p372 = scmp.eq.s32.totalorder %s21, 1
    %p373 = por %p371, %p372
    %p374 = scmp.ne.s32.totalorder %s366, %s369
    %p375 = scmp.eq.s32.totalorder %s21, 0
    %p376 = por %p374, %p375
    %p377 = scmp.ne.s32.totalorder %s366, %s369
    %p378 = scmp.eq.s32.totalorder %s26, 1
    %p379 = por %p377, %p378
    %p380 = scmp.ne.s32.totalorder %s369, %s370
    %p381 = scmp.eq.s32.totalorder %s26, 0
    %p382 = por %p380, %p381
    %p383 = scmp.ne.s32.totalorder %s369, %s370
    %p384 = scmp.eq.s32.totalorder %s27, 1
    %p385 = por %p383, %p384
    %p387 = scmp.ne.s32.totalorder %s370, %s386
    %p388 = scmp.eq.s32.totalorder %s27, 0
    %p389 = por %p387, %p388
    %p390 = scmp.le.s32.totalorder 1, %s21
    %p391 = scmp.lt.s32.totalorder %s21, 3
    %p392 = pnand %p390, %p391
    %p393 = pneg %p392
    // Predicated region
    $region9: #{tpu_custom_call.1} parent=5 // pred_check
      _
    $region10: #{tpu_custom_call.1} parent=5 // pred_check_branch
      %395 = sbr.rel (%p392) target = $region12
    $region11: #{tpu_custom_call.1} parent=5 // pred_region
      %s396 = ssub.s32 %s21, 1
      // Predicated region
      $region13: #{tpu_custom_call.1} parent=11 // pred_check
        %p397 = pneg %p146
      $region14: #{tpu_custom_call.1} parent=11 // pred_check_branch
        %399 = sbr.rel (%p397) target = $region16
      $region15: #{tpu_custom_call.1} parent=11 // pred_region
        _
      $region16: #{tpu_custom_call.1} parent=11 // pred_fallthru
        _
      // Predicated region
      $region17: #{tpu_custom_call.1} parent=11 // pred_check
        %p400 = pneg %p167
      $region18: #{tpu_custom_call.1} parent=11 // pred_check_branch
        %402 = sbr.rel (%p400) target = $region20
      $region19: #{tpu_custom_call.1} parent=11 // pred_region
        _
      $region20: #{tpu_custom_call.1} parent=11 // pred_fallthru
        _
      // Predicated region
      $region21: #{tpu_custom_call.1} parent=11 // pred_check
        %p403 = pneg %p188
      $region22: #{tpu_custom_call.1} parent=11 // pred_check_branch
        %405 = sbr.rel (%p403) target = $region24
      $region23: #{tpu_custom_call.1} parent=11 // pred_region
        _
      $region24: #{tpu_custom_call.1} parent=11 // pred_fallthru
        _
      // Predicated region
      $region25: #{tpu_custom_call.1} parent=11 // pred_check
        %p406 = pneg %p209
      $region26: #{tpu_custom_call.1} parent=11 // pred_check_branch
        %408 = sbr.rel (%p406) target = $region28
      $region27: #{tpu_custom_call.1} parent=11 // pred_region
        _
      $region28: #{tpu_custom_call.1} parent=11 // pred_fallthru
        _
      // Predicated region
      $region29: #{tpu_custom_call.1} parent=11 // pred_check
        %p409 = pneg %p230
      $region30: #{tpu_custom_call.1} parent=11 // pred_check_branch
        %411 = sbr.rel (%p409) target = $region32
      $region31: #{tpu_custom_call.1} parent=11 // pred_region
        _
      $region32: #{tpu_custom_call.1} parent=11 // pred_fallthru
        _
      // Predicated region
      $region33: #{tpu_custom_call.1} parent=11 // pred_check
        %p412 = pneg %p251
      $region34: #{tpu_custom_call.1} parent=11 // pred_check_branch
        %414 = sbr.rel (%p412) target = $region36
      $region35: #{tpu_custom_call.1} parent=11 // pred_region
        _
      $region36: #{tpu_custom_call.1} parent=11 // pred_fallthru
        _
      // Predicated region
      $region37: #{tpu_custom_call.1} parent=11 // pred_check
        %p415 = pneg %p272
      $region38: #{tpu_custom_call.1} parent=11 // pred_check_branch
        %417 = sbr.rel (%p415) target = $region40
      $region39: #{tpu_custom_call.1} parent=11 // pred_region
        _
      $region40: #{tpu_custom_call.1} parent=11 // pred_fallthru
        _
      // Predicated region
      $region41: #{tpu_custom_call.1} parent=11 // pred_check
        %p418 = pneg %p293
      $region42: #{tpu_custom_call.1} parent=11 // pred_check_branch
        %420 = sbr.rel (%p418) target = $region44
      $region43: #{tpu_custom_call.1} parent=11 // pred_region
        _
      $region44: #{tpu_custom_call.1} parent=11 // pred_fallthru
        _
      // Predicated region
      $region45: #{tpu_custom_call.1} parent=11 // pred_check
        %p421 = pneg %p314
      $region46: #{tpu_custom_call.1} parent=11 // pred_check_branch
        %423 = sbr.rel (%p421) target = $region48
      $region47: #{tpu_custom_call.1} parent=11 // pred_region
        _
      $region48: #{tpu_custom_call.1} parent=11 // pred_fallthru
        _
      // Predicated region
      $region49: #{tpu_custom_call.1} parent=11 // pred_check
        %p424 = pneg %p335
      $region50: #{tpu_custom_call.1} parent=11 // pred_check_branch
        %426 = sbr.rel (%p424) target = $region52
      $region51: #{tpu_custom_call.1} parent=11 // pred_region
        _
      $region52: #{tpu_custom_call.1} parent=11 // pred_fallthru
        _
      // Predicated region
      $region53: #{tpu_custom_call.1} parent=11 // pred_check
        %p427 = pneg %p356
      $region54: #{tpu_custom_call.1} parent=11 // pred_check_branch
        %429 = sbr.rel (%p427) target = $region56
      $region55: #{tpu_custom_call.1} parent=11 // pred_region
        _
      $region56: #{tpu_custom_call.1} parent=11 // pred_fallthru
        _
    $region12: #{tpu_custom_call.1} parent=5 // pred_fallthru
      _
    %p430 = scmp.lt.s32.totalorder %s21, 2
    // Predicated region
    $region57: #{tpu_custom_call.1} parent=5 // pred_check
      %p431 = pneg %p430
    $region58: #{tpu_custom_call.1} parent=5 // pred_check_branch
      %433 = sbr.rel (%p431) target = $region60
    $region59: #{tpu_custom_call.1} parent=5 // pred_region
      // Predicated region
      $region61: #{tpu_custom_call.1} parent=59 // pred_check
        %p434 = pneg %p41
      $region62: #{tpu_custom_call.1} parent=59 // pred_check_branch
        %436 = sbr.rel (%p434) target = $region64
      $region63: #{tpu_custom_call.1} parent=59 // pred_region
        %p437 = scmp.lt.s32.totalorder %s21, 1
        %s438 = scalar_select %p437, %s21, 1
        %s439 = smul.addr %s438, 16
        %s440 = smul.addr %s439, 8
        %s441 = scalar_lea.vmem %s0, %s440
      $region64: #{tpu_custom_call.1} parent=59 // pred_fallthru
        _
      // Predicated region
      $region65: #{tpu_custom_call.1} parent=59 // pred_check
        %p442 = pneg %p67
      $region66: #{tpu_custom_call.1} parent=59 // pred_check_branch
        %444 = sbr.rel (%p442) target = $region68
      $region67: #{tpu_custom_call.1} parent=59 // pred_region
        %p445 = scmp.lt.s32.totalorder %s21, 1
        %s446 = scalar_select %p445, %s21, 1
        %s447 = smul.addr %s446, 8
        %s448 = smul.addr %s447, 8
        %s449 = scalar_lea.vmem %s1, %s448
      $region68: #{tpu_custom_call.1} parent=59 // pred_fallthru
        _
      // Predicated region
      $region69: #{tpu_custom_call.1} parent=59 // pred_check
        %p450 = pneg %p93
      $region70: #{tpu_custom_call.1} parent=59 // pred_check_branch
        %452 = sbr.rel (%p450) target = $region72
      $region71: #{tpu_custom_call.1} parent=59 // pred_region
        %p453 = scmp.lt.s32.totalorder %s21, 1
        %s454 = scalar_select %p453, %s21, 1
        %s455 = smul.addr %s454, 8
        %s456 = smul.addr %s455, 8
        %s457 = scalar_lea.vmem %s2, %s456
      $region72: #{tpu_custom_call.1} parent=59 // pred_fallthru
        _
      // Predicated region
      $region73: #{tpu_custom_call.1} parent=59 // pred_check
        %p458 = pneg %p119
      $region74: #{tpu_custom_call.1} parent=59 // pred_check_branch
        %460 = sbr.rel (%p458) target = $region76
      $region75: #{tpu_custom_call.1} parent=59 // pred_region
        %p461 = scmp.lt.s32.totalorder %s21, 1
        %s462 = scalar_select %p461, %s21, 1
        %s463 = smul.addr %s462, 8
        %s464 = smul.addr %s463, 8
        %s465 = scalar_lea.vmem %s3, %s464
      $region76: #{tpu_custom_call.1} parent=59 // pred_fallthru
        _
    $region60: #{tpu_custom_call.1} parent=5 // pred_fallthru
      _
    %p466 = scmp.le.s32.totalorder 1, %s21
    %p467 = scmp.lt.s32.totalorder %s21, 3
    %p468 = pnand %p466, %p467
    %p469 = pneg %p468
    // Predicated region
    $region77: #{tpu_custom_call.1} parent=5 // pred_check
      _
    $region78: #{tpu_custom_call.1} parent=5 // pred_check_branch
      %471 = sbr.rel (%p468) target = $region80
    $region79: #{tpu_custom_call.1} parent=5 // pred_region
      %s472 = ssub.s32 %s21, 1
      %p473 = scmp.lt.s32.totalorder %s26, 1
      %s474 = scalar_select %p473, %s26, 1
      %s475 = smul.addr %s474, 16
      %s476 = smul.addr %s475, 8
      %s477 = scalar_lea.vmem %s0, %s476
      %p478 = pneg %p47
      %p479 = pneg %p44
      %p480 = scmp.lt.s32.totalorder %s26, 1
      %s481 = scalar_select %p480, %s26, 1
      %s482 = smul.addr %s481, 8
      %s483 = smul.addr %s482, 8
      %s484 = scalar_lea.vmem %s1, %s483
      %p485 = pneg %p73
      %p486 = pneg %p70
      %p487 = scmp.lt.s32.totalorder %s26, 1
      %s488 = scalar_select %p487, %s26, 1
      %s489 = smul.addr %s488, 8
      %s490 = smul.addr %s489, 8
      %s491 = scalar_lea.vmem %s2, %s490
      %p492 = pneg %p99
      %p493 = pneg %p96
      %p494 = scmp.lt.s32.totalorder %s26, 1
      %s495 = scalar_select %p494, %s26, 1
      %s496 = smul.addr %s495, 8
      %s497 = smul.addr %s496, 8
      %s498 = scalar_lea.vmem %s3, %s497
      %p499 = pneg %p125
      %p500 = pneg %p122
      %p501 = pneg %p146
      %p502 = pneg %p143
      %p503 = pneg %p167
      %p504 = pneg %p164
      %p505 = pneg %p188
      %p506 = pneg %p185
      %p507 = pneg %p209
      %p508 = pneg %p206
      %p509 = pneg %p230
      %p510 = pneg %p227
      %p511 = pneg %p251
      %p512 = pneg %p248
      %p513 = pneg %p272
      %p514 = pneg %p269
      %p515 = pneg %p293
      %p516 = pneg %p290
      %p517 = pneg %p314
      %p518 = pneg %p311
      %p519 = pneg %p335
      %p520 = pneg %p332
      %p521 = pneg %p356
      %p522 = pneg %p353
      %p523 = pneg %p382
      %p524 = pneg %p379
      %p525 = scmp.lt.s32.totalorder %s26, 1
      %s526 = scalar_select %p525, %s26, 1
      %s527 = smul.addr %s526, 2
      %s528 = smul.addr %s527, 8
      %s529 = scalar_lea.vmem %s15, %s528
      %p530 = scmp.lt.s32.totalorder %s26, 1
      %s531 = scalar_select %p530, %s26, 1
      %s532 = smul.addr %s531, 16
      %s533 = smul.addr %s532, 8
      %s534 = scalar_lea.vmem %s0, %s533
      %p535 = scmp.lt.s32.totalorder %s26, 1
      %s536 = scalar_select %p535, %s26, 1
      %s537 = smul.addr %s536, 8
      %s538 = smul.addr %s537, 8
      %s539 = scalar_lea.vmem %s1, %s538
      %p540 = scmp.lt.s32.totalorder %s26, 1
      %s541 = scalar_select %p540, %s26, 1
      %s542 = smul.addr %s541, 8
      %s543 = smul.addr %s542, 8
      %s544 = scalar_lea.vmem %s2, %s543
      %p545 = scmp.lt.s32.totalorder %s26, 1
      %s546 = scalar_select %p545, %s26, 1
      %s547 = smul.addr %s546, 8
      %s548 = smul.addr %s547, 8
      %s549 = scalar_lea.vmem %s3, %s548
      %p550 = scmp.lt.s32.totalorder %s26, 1
      %s551 = scalar_select %p550, %s26, 1
      %s552 = smul.addr %s551, 2
      %s553 = smul.addr %s552, 8
      %s554 = scalar_lea.vmem %s15, %s553
      %v555 = vld [vmem:[%s4] sm:$0xf]
      %v556 = vld [vmem:[%s5] sm:$0xf]
      %v557 = vld [vmem:[%s6] sm:$0xff]
      %v558 = vld [vmem:[%s6 + $0x8] sm:$0xff]
      %v559 = vld [vmem:[%s6 + $0x10] sm:$0xff]
      %v560 = vld [vmem:[%s6 + $0x18] sm:$0xff]
      %v561 = vld [vmem:[%s7] sm:$0xff]
      %v562 = vld [vmem:[%s7 + $0x8] sm:$0xff]
      %v563 = vld [vmem:[%s7 + $0x10] sm:$0xff]
      %v564 = vld [vmem:[%s7 + $0x18] sm:$0xff]
      %v565 = vld [vmem:[%s8] sm:$0xff]
      %v566 = vld [vmem:[%s8 + $0x8] sm:$0xff]
      %v567 = vld [vmem:[%s8 + $0x10] sm:$0xff]
      %v568 = vld [vmem:[%s8 + $0x18] sm:$0xff]
      %v569 = vld [vmem:[%s9] sm:$0x3]
      %v570 = vld [vmem:[%s10] sm:$0xf]
      %v571 = vld [vmem:[%s11] sm:$0xff]
      %v572 = vld [vmem:[%s11 + $0x8] sm:$0xff]
      %v573 = vld [vmem:[%s11 + $0x10] sm:$0xff]
      %v574 = vld [vmem:[%s11 + $0x18] sm:$0xff]
      %v575 = vld [vmem:[%s12] sm:$0xff]
      %v576 = vld [vmem:[%s12 + $0x8] sm:$0xff]
      %v577 = vld [vmem:[%s13] sm:$0xf]
      %v578 = vld [vmem:[%s14] sm:$0xff]
      %v579 = vld [vmem:[%s14 + $0x8] sm:$0xff]
      %v580 = vld [vmem:[%s534] sm:$0xff]
      %v581 = vld [vmem:[%s534 + $0x8] sm:$0xff]
      %v582 = vld [vmem:[%s534 + $0x10] sm:$0xff]
      %v583 = vld [vmem:[%s534 + $0x18] sm:$0xff]
      %v584 = vld [vmem:[%s539] sm:$0xff]
      %v585 = vld [vmem:[%s539 + $0x8] sm:$0xff]
      %v586 = vld [vmem:[%s544] sm:$0xff]
      %v587 = vld [vmem:[%s544 + $0x8] sm:$0xff]
      %v588 = vld [vmem:[%s549] sm:$0xff]
      %v589 = vld [vmem:[%s549 + $0x8] sm:$0xff]
      %vm590 = vcmask 31744
      %v592 = vsel %vm590, 0.0, 0
      %vm594 = vcmask 1043456
      %v596 = vsel %vm594, %v555, 0
      %598 = vmatprep.subr.mxu0 0.0
      %599 = vmatpush1.msra.mxu0 %v596
      %600 = vmatprep.subr.mxu0 0.0
      %601 = vmatpush1.msra.mxu0 0.0
      %602 = vmatprep.subr.mxu0 0.0
      %603 = vmatpush1.msra.mxu0 0.0
      %604 = vmatprep.subr.mxu0 0.0
      %605 = vmatpush1.msra.mxu0 0.0
      %606 = vmatprep.subr.mxu0 0.0
      %607 = vmatpush1.msra.mxu0 0.0
      %608 = vmatprep.subr.mxu0 0.0
      %609 = vmatpush1.msra.mxu0 0.0
      %610 = vmatprep.subr.mxu0 0.0
      %611 = vmatpush1.msra.mxu0 0.0
      %612 = vmatprep.subr.mxu0 0.0
      %613 = vmatpush1.msra.mxu0 0.0
      %614 = vmatprep.subr.mxu0 0.0
      %615 = vmatpush1.msra.mxu0 0.0
      %616 = vmatprep.subr.mxu0 0.0
      %617 = vmatpush1.msra.mxu0 0.0
      %618 = vmatprep.subr.mxu0 0.0
      %619 = vmatpush1.msra.mxu0 0.0
      %620 = vmatprep.subr.mxu0 0.0
      %621 = vmatpush1.msra.mxu0 0.0
      %622 = vmatprep.subr.mxu0 0.0
      %623 = vmatpush1.msra.mxu0 0.0
      %624 = vmatprep.subr.mxu0 0.0
      %625 = vmatpush1.msra.mxu0 0.0
      %626 = vmatprep.subr.mxu0 0.0
      %627 = vmatpush1.msra.mxu0 0.0
      %628 = vmatprep.subr.mxu0 0.0
      %629 = vmatpush1.msra.mxu0 0.0
      %630 = vmatprep.subr.mxu0 0.0
      %631 = vmatpush1.msra.mxu0 0.0
      %632 = vmatprep.subr.mxu0 0.0
      %633 = vmatpush1.msra.mxu0 0.0
      %634 = vmatprep.subr.mxu0 0.0
      %635 = vmatpush1.msra.mxu0 0.0
      %636 = vmatprep.subr.mxu0 0.0
      %637 = vmatpush1.msra.mxu0 0.0
      %638 = vmatprep.subr.mxu0 0.0
      %639 = vmatpush1.msra.mxu0 0.0
      %640 = vmatprep.subr.mxu0 0.0
      %641 = vmatpush1.msra.mxu0 0.0
      %642 = vmatprep.subr.mxu0 0.0
      %643 = vmatpush1.msra.mxu0 0.0
      %644 = vmatprep.subr.mxu0 0.0
      %645 = vmatpush1.msra.mxu0 0.0
      %646 = vmatprep.subr.mxu0 0.0
      %647 = vmatpush1.msra.mxu0 0.0
      %648 = vmatprep.subr.mxu0 0.0
      %649 = vmatpush1.msra.mxu0 0.0
      %650 = vmatprep.subr.mxu0 0.0
      %651 = vmatpush1.msra.mxu0 0.0
      %652 = vmatprep.subr.mxu0 0.0
      %653 = vmatpush1.msra.mxu0 0.0
      %654 = vmatprep.subr.mxu0 0.0
      %655 = vmatpush1.msra.mxu0 0.0
      %656 = vmatprep.subr.mxu0 0.0
      %657 = vmatpush1.msra.mxu0 0.0
      %658 = vmatprep.subr.mxu0 0.0
      %659 = vmatpush1.msra.mxu0 0.0
      %660 = vmatprep.subr.mxu0 0.0
      %661 = vmatpush1.msra.mxu0 0.0
      %662 = vmatprep.mubr.f32.mxu0 0.0
      %663 = vmatmul.mubr.f32.gmra.mrb[0].mxu0 %v592
      %v664 = vpop.f32.mrb[0].mxu0
      %v665 = vadd.f32 0.0, %v664
      %v666 = vpop.f32.mrb[0].mxu0
      %667 = vmatprep.mubr.f32.mxu0 0.0
      %668 = vmatmul.mubr.f32.gmra.mrb[0].mxu0 %v592
      %v669 = vpop.f32.mrb[0].mxu0
      %v670 = vadd.f32 0.0, %v669
      %v671 = vpop.f32.mrb[0].mxu0
      %672 = vdwg.mxu0
      %v673 = vadd.f32 %v586, %v665
      %v674 = vadd.f32 %v587, %v670
      %v675 = vtanh.pop %v673
      %v676 = vtanh.pop %v674
      %v677 = vmul.f32 %v675, 0.5
      %v678 = vmul.f32 %v676, 0.5
      %v680 = vsel %vm594, %v556, 0
      %682 = vmatprep.subr.mxu0 0.0
      %683 = vmatpush1.msra.mxu0 %v680
      %684 = vmatprep.subr.mxu0 0.0
      %685 = vmatpush1.msra.mxu0 0.0
      %686 = vmatprep.subr.mxu0 0.0
      %687 = vmatpush1.msra.mxu0 0.0
      %688 = vmatprep.subr.mxu0 0.0
      %689 = vmatpush1.msra.mxu0 0.0
      %690 = vmatprep.subr.mxu0 0.0
      %691 = vmatpush1.msra.mxu0 0.0
      %692 = vmatprep.subr.mxu0 0.0
      %693 = vmatpush1.msra.mxu0 0.0
      %694 = vmatprep.subr.mxu0 0.0
      %695 = vmatpush1.msra.mxu0 0.0
      %696 = vmatprep.subr.mxu0 0.0
      %697 = vmatpush1.msra.mxu0 0.0
      %698 = vmatprep.subr.mxu0 0.0
      %699 = vmatpush1.msra.mxu0 0.0
      %700 = vmatprep.subr.mxu0 0.0
      %701 = vmatpush1.msra.mxu0 0.0
      %702 = vmatprep.subr.mxu0 0.0
      %703 = vmatpush1.msra.mxu0 0.0
      %704 = vmatprep.subr.mxu0 0.0
      %705 = vmatpush1.msra.mxu0 0.0
      %706 = vmatprep.subr.mxu0 0.0
      %707 = vmatpush1.msra.mxu0 0.0
      %708 = vmatprep.subr.mxu0 0.0
      %709 = vmatpush1.msra.mxu0 0.0
      %710 = vmatprep.subr.mxu0 0.0
      %711 = vmatpush1.msra.mxu0 0.0
      %712 = vmatprep.subr.mxu0 0.0
      %713 = vmatpush1.msra.mxu0 0.0
      %714 = vmatprep.subr.mxu0 0.0
      %715 = vmatpush1.msra.mxu0 0.0
      %716 = vmatprep.subr.mxu0 0.0
      %717 = vmatpush1.msra.mxu0 0.0
      %718 = vmatprep.subr.mxu0 0.0
      %719 = vmatpush1.msra.mxu0 0.0
      %720 = vmatprep.subr.mxu0 0.0
      %721 = vmatpush1.msra.mxu0 0.0
      %722 = vmatprep.subr.mxu0 0.0
      %723 = vmatpush1.msra.mxu0 0.0
      %724 = vmatprep.subr.mxu0 0.0
      %725 = vmatpush1.msra.mxu0 0.0
      %726 = vmatprep.subr.mxu0 0.0
      %727 = vmatpush1.msra.mxu0 0.0
      %728 = vmatprep.subr.mxu0 0.0
      %729 = vmatpush1.msra.mxu0 0.0
      %730 = vmatprep.subr.mxu0 0.0
      %731 = vmatpush1.msra.mxu0 0.0
      %732 = vmatprep.subr.mxu0 0.0
      %733 = vmatpush1.msra.mxu0 0.0
      %734 = vmatprep.subr.mxu0 0.0
      %735 = vmatpush1.msra.mxu0 0.0
      %736 = vmatprep.subr.mxu0 0.0
      %737 = vmatpush1.msra.mxu0 0.0
      %738 = vmatprep.subr.mxu0 0.0
      %739 = vmatpush1.msra.mxu0 0.0
      %740 = vmatprep.subr.mxu0 0.0
      %741 = vmatpush1.msra.mxu0 0.0
      %742 = vmatprep.subr.mxu0 0.0
      %743 = vmatpush1.msra.mxu0 0.0
      %744 = vmatprep.subr.mxu0 0.0
      %745 = vmatpush1.msra.mxu0 0.0
      %746 = vmatprep.mubr.f32.mxu0 0.0
      %747 = vmatmul.mubr.f32.gmra.mrb[0].mxu0 %v592
      %v748 = vpop.f32.mrb[0].mxu0
      %v749 = vadd.f32 0.0, %v748
      %v750 = vpop.f32.mrb[0].mxu0
      %751 = vmatprep.mubr.f32.mxu0 0.0
      %752 = vmatmul.mubr.f32.gmra.mrb[0].mxu0 %v592
      %v753 = vpop.f32.mrb[0].mxu0
      %v754 = vadd.f32 0.0, %v753
      %v755 = vpop.f32.mrb[0].mxu0
      %756 = vdwg.mxu0
      %v757 = vadd.f32 %v584, %v749
      %v758 = vadd.f32 %v585, %v754
      %vm759 = vcmask 130048
      %v761 = vsel %vm759, %v557, 0
      %v764 = vsel %vm759, %v558, 0
      %v767 = vsel %vm759, %v559, 0
      %v770 = vsel %vm759, %v560, 0
      %772 = vmatprep.subr.mxu0 0.0
      %773 = vmatpush1.msra.mxu0 %v757
      %774 = vmatprep.subr.mxu0 0.0
      %775 = vmatpush1.msra.mxu0 %v758
      %776 = vmatprep.subr.mxu0 0.0
      %777 = vmatpush1.msra.mxu0 0.0
      %778 = vmatprep.subr.mxu0 0.0
      %779 = vmatpush1.msra.mxu0 0.0
      %780 = vmatprep.subr.mxu0 0.0
      %781 = vmatpush1.msra.mxu0 0.0
      %782 = vmatprep.subr.mxu0 0.0
      %783 = vmatpush1.msra.mxu0 0.0
      %784 = vmatprep.subr.mxu0 0.0
      %785 = vmatpush1.msra.mxu0 0.0
      %786 = vmatprep.subr.mxu0 0.0
      %787 = vmatpush1.msra.mxu0 0.0
      %788 = vmatprep.subr.mxu0 0.0
      %789 = vmatpush1.msra.mxu0 0.0
      %790 = vmatprep.subr.mxu0 0.0
      %791 = vmatpush1.msra.mxu0 0.0
      %792 = vmatprep.subr.mxu0 0.0
      %793 = vmatpush1.msra.mxu0 0.0
      %794 = vmatprep.subr.mxu0 0.0
      %795 = vmatpush1.msra.mxu0 0.0
      %796 = vmatprep.subr.mxu0 0.0
      %797 = vmatpush1.msra.mxu0 0.0
      %798 = vmatprep.subr.mxu0 0.0
      %799 = vmatpush1.msra.mxu0 0.0
      %800 = vmatprep.subr.mxu0 0.0
      %801 = vmatpush1.msra.mxu0 0.0
      %802 = vmatprep.subr.mxu0 0.0
      %803 = vmatpush1.msra.mxu0 0.0
      %804 = vmatprep.subr.mxu0 0.0
      %805 = vmatpush1.msra.mxu0 0.0
      %806 = vmatprep.subr.mxu0 0.0
      %807 = vmatpush1.msra.mxu0 0.0
      %808 = vmatprep.subr.mxu0 0.0
      %809 = vmatpush1.msra.mxu0 0.0
      %810 = vmatprep.subr.mxu0 0.0
      %811 = vmatpush1.msra.mxu0 0.0
      %812 = vmatprep.subr.mxu0 0.0
      %813 = vmatpush1.msra.mxu0 0.0
      %814 = vmatprep.subr.mxu0 0.0
      %815 = vmatpush1.msra.mxu0 0.0
      %816 = vmatprep.subr.mxu0 0.0
      %817 = vmatpush1.msra.mxu0 0.0
      %818 = vmatprep.subr.mxu0 0.0
      %819 = vmatpush1.msra.mxu0 0.0
      %820 = vmatprep.subr.mxu0 0.0
      %821 = vmatpush1.msra.mxu0 0.0
      %822 = vmatprep.subr.mxu0 0.0
      %823 = vmatpush1.msra.mxu0 0.0
      %824 = vmatprep.subr.mxu0 0.0
      %825 = vmatpush1.msra.mxu0 0.0
      %826 = vmatprep.subr.mxu0 0.0
      %827 = vmatpush1.msra.mxu0 0.0
      %828 = vmatprep.subr.mxu0 0.0
      %829 = vmatpush1.msra.mxu0 0.0
      %830 = vmatprep.subr.mxu0 0.0
      %831 = vmatpush1.msra.mxu0 0.0
      %832 = vmatprep.subr.mxu0 0.0
      %833 = vmatpush1.msra.mxu0 0.0
      %834 = vmatprep.subr.mxu0 0.0
      %835 = vmatpush1.msra.mxu0 0.0
      %836 = vmatprep.mubr.f32.mxu0 0.0
      %837 = vmatmul.mubr.f32.gmra.mrb[0].mxu0 %v761
      %v838 = vpop.f32.mrb[0].mxu0
      %v839 = vadd.f32 %v561, %v838
      %v840 = vpop.f32.mrb[0].mxu0
      %841 = vmatprep.mubr.f32.mxu0 0.0
      %842 = vmatmul.mubr.f32.gmra.mrb[0].mxu0 %v764
      %v843 = vpop.f32.mrb[0].mxu0
      %v844 = vadd.f32 %v562, %v843
      %v845 = vpop.f32.mrb[0].mxu0
      %846 = vmatprep.mubr.f32.mxu0 0.0
      %847 = vmatmul.mubr.f32.gmra.mrb[0].mxu0 %v767
      %v848 = vpop.f32.mrb[0].mxu0
      %v849 = vadd.f32 %v563, %v848
      %v850 = vpop.f32.mrb[0].mxu0
      %851 = vmatprep.mubr.f32.mxu0 0.0
      %852 = vmatmul.mubr.f32.gmra.mrb[0].mxu0 %v770
      %v853 = vpop.f32.mrb[0].mxu0
      %v854 = vadd.f32 %v564, %v853
      %v855 = vpop.f32.mrb[0].mxu0
      %856 = vdwg.mxu0
      %vm857 = vcmask 261120
      %v858 = vsel %vm857, %v839, -inf
      %859 = vmax.xlane.f32.xlu0 %v858
      %v860 = vpop.xlane.xlu0 %859
      %v861 = vsel %vm857, %v844, -inf
      %862 = vmax.xlane.f32.xlu0 %v861
      %v863 = vpop.xlane.xlu0 %862
      %v864 = vsel %vm857, %v849, -inf
      %865 = vmax.xlane.f32.xlu0 %v864
      %v866 = vpop.xlane.xlu0 %865
      %v867 = vsel %vm857, %v854, -inf
      %868 = vmax.xlane.f32.xlu0 %v867
      %v869 = vpop.xlane.xlu0 %868
      %v870 = vsub.f32 %v839, %v860
      %v871 = vsub.f32 %v844, %v863
      %v872 = vsub.f32 %v849, %v866
      %v873 = vsub.f32 %v854, %v869
      %v874 = vmul.f32 %v870, 1.442695
      %v875 = vpow.pop %v874
      %v876 = vmul.f32 %v871, 1.442695
      %v877 = vpow.pop %v876
      %v878 = vmul.f32 %v872, 1.442695
      %v879 = vpow.pop %v878
      %v880 = vmul.f32 %v873, 1.442695
      %v881 = vpow.pop %v880
      %v882 = vsel %vm857, %v875, 0.0
      %883 = vadd.xlane.f32.xlu0 %v882
      %v884 = vpop.xlane.xlu0 %883
      %v885 = vsel %vm857, %v877, 0.0
      %886 = vadd.xlane.f32.xlu0 %v885
      %v887 = vpop.xlane.xlu0 %886
      %v888 = vsel %vm857, %v879, 0.0
      %889 = vadd.xlane.f32.xlu0 %v888
      %v890 = vpop.xlane.xlu0 %889
      %v891 = vsel %vm857, %v881, 0.0
      %892 = vadd.xlane.f32.xlu0 %v891
      %v893 = vpop.xlane.xlu0 %892
      %v894 = vrcp.pop %v884
      %v895 = vmul.f32 %v875, %v894
      %v896 = vrcp.pop %v887
      %v897 = vmul.f32 %v877, %v896
      %v898 = vrcp.pop %v890
      %v899 = vmul.f32 %v879, %v898
      %v900 = vrcp.pop %v893
      %v901 = vmul.f32 %v881, %v900
      %v903 = vsel %vm857, %v895, 0
      %v906 = vsel %vm857, %v897, 0
      %v909 = vsel %vm857, %v899, 0
      %v912 = vsel %vm857, %v901, 0
      %914 = vmatprep.subr.mxu0 0.0
      %915 = vmatpush1.msra.mxu0 %v580
      %916 = vmatprep.subr.mxu0 0.0
      %917 = vmatpush1.msra.mxu0 %v581
      %918 = vmatprep.subr.mxu0 0.0
      %919 = vmatpush1.msra.mxu0 %v582
      %920 = vmatprep.subr.mxu0 0.0
      %921 = vmatpush1.msra.mxu0 %v583
      %922 = vmatprep.subr.mxu0 0.0
      %923 = vmatpush1.msra.mxu0 0.0
      %924 = vmatprep.subr.mxu0 0.0
      %925 = vmatpush1.msra.mxu0 0.0
      %926 = vmatprep.subr.mxu0 0.0
      %927 = vmatpush1.msra.mxu0 0.0
      %928 = vmatprep.subr.mxu0 0.0
      %929 = vmatpush1.msra.mxu0 0.0
      %930 = vmatprep.subr.mxu0 0.0
      %931 = vmatpush1.msra.mxu0 0.0
      %932 = vmatprep.subr.mxu0 0.0
      %933 = vmatpush1.msra.mxu0 0.0
      %934 = vmatprep.subr.mxu0 0.0
      %935 = vmatpush1.msra.mxu0 0.0
      %936 = vmatprep.subr.mxu0 0.0
      %937 = vmatpush1.msra.mxu0 0.0
      %938 = vmatprep.subr.mxu0 0.0
      %939 = vmatpush1.msra.mxu0 0.0
      %940 = vmatprep.subr.mxu0 0.0
      %941 = vmatpush1.msra.mxu0 0.0
      %942 = vmatprep.subr.mxu0 0.0
      %943 = vmatpush1.msra.mxu0 0.0
      %944 = vmatprep.subr.mxu0 0.0
      %945 = vmatpush1.msra.mxu0 0.0
      %946 = vmatprep.subr.mxu0 0.0
      %947 = vmatpush1.msra.mxu0 0.0
      %948 = vmatprep.subr.mxu0 0.0
      %949 = vmatpush1.msra.mxu0 0.0
      %950 = vmatprep.subr.mxu0 0.0
      %951 = vmatpush1.msra.mxu0 0.0
      %952 = vmatprep.subr.mxu0 0.0
      %953 = vmatpush1.msra.mxu0 0.0
      %954 = vmatprep.subr.mxu0 0.0
      %955 = vmatpush1.msra.mxu0 0.0
      %956 = vmatprep.subr.mxu0 0.0
      %957 = vmatpush1.msra.mxu0 0.0
      %958 = vmatprep.subr.mxu0 0.0
      %959 = vmatpush1.msra.mxu0 0.0
      %960 = vmatprep.subr.mxu0 0.0
      %961 = vmatpush1.msra.mxu0 0.0
      %962 = vmatprep.subr.mxu0 0.0
      %963 = vmatpush1.msra.mxu0 0.0
      %964 = vmatprep.subr.mxu0 0.0
      %965 = vmatpush1.msra.mxu0 0.0
      %966 = vmatprep.subr.mxu0 0.0
      %967 = vmatpush1.msra.mxu0 0.0
      %968 = vmatprep.subr.mxu0 0.0
      %969 = vmatpush1.msra.mxu0 0.0
      %970 = vmatprep.subr.mxu0 0.0
      %971 = vmatpush1.msra.mxu0 0.0
      %972 = vmatprep.subr.mxu0 0.0
      %973 = vmatpush1.msra.mxu0 0.0
      %974 = vmatprep.subr.mxu0 0.0
      %975 = vmatpush1.msra.mxu0 0.0
      %976 = vmatprep.subr.mxu0 0.0
      %977 = vmatpush1.msra.mxu0 0.0
      %978 = vmatprep.mubr.f32.mxu0 0.0
      %979 = vmatmul.mubr.f32.gmra.mrb[0].mxu0 %v903
      %v980 = vpop.f32.mrb[0].mxu0
      %v981 = vadd.f32 0.0, %v980
      %v982 = vpop.f32.mrb[0].mxu0
      %983 = vmatprep.mubr.f32.mxu0 0.0
      %984 = vmatmul.mubr.f32.gmra.mrb[0].mxu0 %v906
      %v985 = vpop.f32.mrb[0].mxu0
      %v986 = vadd.f32 0.0, %v985
      %v987 = vpop.f32.mrb[0].mxu0
      %988 = vmatprep.mubr.f32.mxu0 0.0
      %989 = vmatmul.mubr.f32.gmra.mrb[0].mxu0 %v909
      %v990 = vpop.f32.mrb[0].mxu0
      %v991 = vadd.f32 0.0, %v990
      %v992 = vpop.f32.mrb[0].mxu0
      %993 = vmatprep.mubr.f32.mxu0 0.0
      %994 = vmatmul.mubr.f32.gmra.mrb[0].mxu0 %v912
      %v995 = vpop.f32.mrb[0].mxu0
      %v996 = vadd.f32 0.0, %v995
      %v997 = vpop.f32.mrb[0].mxu0
      %998 = vdwg.mxu0
      %v999 = vadd.f32 %v981, %v991
      %v1000 = vadd.f32 %v986, %v996
      %v1001 = vadd.f32 %v999, %v677
      %v1002 = vadd.f32 %v1000, %v678
      %v1004 = vsel %vm594, %v570, 0
      %1006 = vmatprep.subr.mxu0 0.0
      %1007 = vmatpush1.msra.mxu0 %v1004
      %1008 = vmatprep.subr.mxu0 0.0
      %1009 = vmatpush1.msra.mxu0 0.0
      %1010 = vmatprep.subr.mxu0 0.0
      %1011 = vmatpush1.msra.mxu0 0.0
      %1012 = vmatprep.subr.mxu0 0.0
      %1013 = vmatpush1.msra.mxu0 0.0
      %1014 = vmatprep.subr.mxu0 0.0
      %1015 = vmatpush1.msra.mxu0 0.0
      %1016 = vmatprep.subr.mxu0 0.0
      %1017 = vmatpush1.msra.mxu0 0.0
      %1018 = vmatprep.subr.mxu0 0.0
      %1019 = vmatpush1.msra.mxu0 0.0
      %1020 = vmatprep.subr.mxu0 0.0
      %1021 = vmatpush1.msra.mxu0 0.0
      %1022 = vmatprep.subr.mxu0 0.0
      %1023 = vmatpush1.msra.mxu0 0.0
      %1024 = vmatprep.subr.mxu0 0.0
      %1025 = vmatpush1.msra.mxu0 0.0
      %1026 = vmatprep.subr.mxu0 0.0
      %1027 = vmatpush1.msra.mxu0 0.0
      %1028 = vmatprep.subr.mxu0 0.0
      %1029 = vmatpush1.msra.mxu0 0.0
      %1030 = vmatprep.subr.mxu0 0.0
      %1031 = vmatpush1.msra.mxu0 0.0
      %1032 = vmatprep.subr.mxu0 0.0
      %1033 = vmatpush1.msra.mxu0 0.0
      %1034 = vmatprep.subr.mxu0 0.0
      %1035 = vmatpush1.msra.mxu0 0.0
      %1036 = vmatprep.subr.mxu0 0.0
      %1037 = vmatpush1.msra.mxu0 0.0
      %1038 = vmatprep.subr.mxu0 0.0
      %1039 = vmatpush1.msra.mxu0 0.0
      %1040 = vmatprep.subr.mxu0 0.0
      %1041 = vmatpush1.msra.mxu0 0.0
      %1042 = vmatprep.subr.mxu0 0.0
      %1043 = vmatpush1.msra.mxu0 0.0
      %1044 = vmatprep.subr.mxu0 0.0
      %1045 = vmatpush1.msra.mxu0 0.0
      %1046 = vmatprep.subr.mxu0 0.0
      %1047 = vmatpush1.msra.mxu0 0.0
      %1048 = vmatprep.subr.mxu0 0.0
      %1049 = vmatpush1.msra.mxu0 0.0
      %1050 = vmatprep.subr.mxu0 0.0
      %1051 = vmatpush1.msra.mxu0 0.0
      %1052 = vmatprep.subr.mxu0 0.0
      %1053 = vmatpush1.msra.mxu0 0.0
      %1054 = vmatprep.subr.mxu0 0.0
      %1055 = vmatpush1.msra.mxu0 0.0
      %1056 = vmatprep.subr.mxu0 0.0
      %1057 = vmatpush1.msra.mxu0 0.0
      %1058 = vmatprep.subr.mxu0 0.0
      %1059 = vmatpush1.msra.mxu0 0.0
      %1060 = vmatprep.subr.mxu0 0.0
      %1061 = vmatpush1.msra.mxu0 0.0
      %1062 = vmatprep.subr.mxu0 0.0
      %1063 = vmatpush1.msra.mxu0 0.0
      %1064 = vmatprep.subr.mxu0 0.0
      %1065 = vmatpush1.msra.mxu0 0.0
      %1066 = vmatprep.subr.mxu0 0.0
      %1067 = vmatpush1.msra.mxu0 0.0
      %1068 = vmatprep.subr.mxu0 0.0
      %1069 = vmatpush1.msra.mxu0 0.0
      %1070 = vmatprep.mubr.f32.mxu0 0.0
      %1071 = vmatmul.mubr.f32.gmra.mrb[0].mxu0 %v592
      %v1072 = vpop.f32.mrb[0].mxu0
      %v1073 = vadd.f32 0.0, %v1072
      %v1074 = vpop.f32.mrb[0].mxu0
      %1075 = vmatprep.mubr.f32.mxu0 0.0
      %1076 = vmatmul.mubr.f32.gmra.mrb[0].mxu0 %v592
      %v1077 = vpop.f32.mrb[0].mxu0
      %v1078 = vadd.f32 0.0, %v1077
      %v1079 = vpop.f32.mrb[0].mxu0
      %1080 = vdwg.mxu0
      %vm1081 = vcmask 15360
      %v1083 = vsel %vm1081, %v1001, 0
      %v1086 = vsel %vm1081, %v1002, 0
      %vm1088 = vcmask 1041408
      %v1090 = vsel %vm1088, %v569, 0
      %1092 = vmatprep.subr.mxu0 0.0
      %1093 = vmatpush1.msra.mxu0 %v1090
      %1094 = vmatprep.subr.mxu0 0.0
      %1095 = vmatpush1.msra.mxu0 0.0
      %1096 = vmatprep.subr.mxu0 0.0
      %1097 = vmatpush1.msra.mxu0 0.0
      %1098 = vmatprep.subr.mxu0 0.0
      %1099 = vmatpush1.msra.mxu0 0.0
      %1100 = vmatprep.subr.mxu0 0.0
      %1101 = vmatpush1.msra.mxu0 0.0
      %1102 = vmatprep.subr.mxu0 0.0
      %1103 = vmatpush1.msra.mxu0 0.0
      %1104 = vmatprep.subr.mxu0 0.0
      %1105 = vmatpush1.msra.mxu0 0.0
      %1106 = vmatprep.subr.mxu0 0.0
      %1107 = vmatpush1.msra.mxu0 0.0
      %1108 = vmatprep.subr.mxu0 0.0
      %1109 = vmatpush1.msra.mxu0 0.0
      %1110 = vmatprep.subr.mxu0 0.0
      %1111 = vmatpush1.msra.mxu0 0.0
      %1112 = vmatprep.subr.mxu0 0.0
      %1113 = vmatpush1.msra.mxu0 0.0
      %1114 = vmatprep.subr.mxu0 0.0
      %1115 = vmatpush1.msra.mxu0 0.0
      %1116 = vmatprep.subr.mxu0 0.0
      %1117 = vmatpush1.msra.mxu0 0.0
      %1118 = vmatprep.subr.mxu0 0.0
      %1119 = vmatpush1.msra.mxu0 0.0
      %1120 = vmatprep.subr.mxu0 0.0
      %1121 = vmatpush1.msra.mxu0 0.0
      %1122 = vmatprep.subr.mxu0 0.0
      %1123 = vmatpush1.msra.mxu0 0.0
      %1124 = vmatprep.subr.mxu0 0.0
      %1125 = vmatpush1.msra.mxu0 0.0
      %1126 = vmatprep.subr.mxu0 0.0
      %1127 = vmatpush1.msra.mxu0 0.0
      %1128 = vmatprep.subr.mxu0 0.0
      %1129 = vmatpush1.msra.mxu0 0.0
      %1130 = vmatprep.subr.mxu0 0.0
      %1131 = vmatpush1.msra.mxu0 0.0
      %1132 = vmatprep.subr.mxu0 0.0
      %1133 = vmatpush1.msra.mxu0 0.0
      %1134 = vmatprep.subr.mxu0 0.0
      %1135 = vmatpush1.msra.mxu0 0.0
      %1136 = vmatprep.subr.mxu0 0.0
      %1137 = vmatpush1.msra.mxu0 0.0
      %1138 = vmatprep.subr.mxu0 0.0
      %1139 = vmatpush1.msra.mxu0 0.0
      %1140 = vmatprep.subr.mxu0 0.0
      %1141 = vmatpush1.msra.mxu0 0.0
      %1142 = vmatprep.subr.mxu0 0.0
      %1143 = vmatpush1.msra.mxu0 0.0
      %1144 = vmatprep.subr.mxu0 0.0
      %1145 = vmatpush1.msra.mxu0 0.0
      %1146 = vmatprep.subr.mxu0 0.0
      %1147 = vmatpush1.msra.mxu0 0.0
      %1148 = vmatprep.subr.mxu0 0.0
      %1149 = vmatpush1.msra.mxu0 0.0
      %1150 = vmatprep.subr.mxu0 0.0
      %1151 = vmatpush1.msra.mxu0 0.0
      %1152 = vmatprep.subr.mxu0 0.0
      %1153 = vmatpush1.msra.mxu0 0.0
      %1154 = vmatprep.subr.mxu0 0.0
      %1155 = vmatpush1.msra.mxu0 0.0
      %1156 = vmatprep.mubr.f32.mxu0 0.0
      %1157 = vmatmul.mubr.f32.gmra.mrb[0].mxu0 %v1083
      %v1158 = vpop.f32.mrb[0].mxu0
      %v1159 = vadd.f32 %v1073, %v1158
      %v1160 = vpop.f32.mrb[0].mxu0
      %1161 = vmatprep.mubr.f32.mxu0 0.0
      %1162 = vmatmul.mubr.f32.gmra.mrb[0].mxu0 %v1086
      %v1163 = vpop.f32.mrb[0].mxu0
      %v1164 = vadd.f32 %v1078, %v1163
      %v1165 = vpop.f32.mrb[0].mxu0
      %1166 = vdwg.mxu0
      %v1168 = vsel %vm759, %v565, 0
      %v1171 = vsel %vm759, %v566, 0
      %v1174 = vsel %vm759, %v567, 0
      %v1177 = vsel %vm759, %v568, 0
      %1179 = vmatprep.subr.mxu0 0.0
      %1180 = vmatpush1.msra.mxu0 %v1159
      %1181 = vmatprep.subr.mxu0 0.0
      %1182 = vmatpush1.msra.mxu0 %v1164
      %1183 = vmatprep.subr.mxu0 0.0
      %1184 = vmatpush1.msra.mxu0 0.0
      %1185 = vmatprep.subr.mxu0 0.0
      %1186 = vmatpush1.msra.mxu0 0.0
      %1187 = vmatprep.subr.mxu0 0.0
      %1188 = vmatpush1.msra.mxu0 0.0
      %1189 = vmatprep.subr.mxu0 0.0
      %1190 = vmatpush1.msra.mxu0 0.0
      %1191 = vmatprep.subr.mxu0 0.0
      %1192 = vmatpush1.msra.mxu0 0.0
      %1193 = vmatprep.subr.mxu0 0.0
      %1194 = vmatpush1.msra.mxu0 0.0
      %1195 = vmatprep.subr.mxu0 0.0
      %1196 = vmatpush1.msra.mxu0 0.0
      %1197 = vmatprep.subr.mxu0 0.0
      %1198 = vmatpush1.msra.mxu0 0.0
      %1199 = vmatprep.subr.mxu0 0.0
      %1200 = vmatpush1.msra.mxu0 0.0
      %1201 = vmatprep.subr.mxu0 0.0
      %1202 = vmatpush1.msra.mxu0 0.0
      %1203 = vmatprep.subr.mxu0 0.0
      %1204 = vmatpush1.msra.mxu0 0.0
      %1205 = vmatprep.subr.mxu0 0.0
      %1206 = vmatpush1.msra.mxu0 0.0
      %1207 = vmatprep.subr.mxu0 0.0
      %1208 = vmatpush1.msra.mxu0 0.0
      %1209 = vmatprep.subr.mxu0 0.0
      %1210 = vmatpush1.msra.mxu0 0.0
      %1211 = vmatprep.subr.mxu0 0.0
      %1212 = vmatpush1.msra.mxu0 0.0
      %1213 = vmatprep.subr.mxu0 0.0
      %1214 = vmatpush1.msra.mxu0 0.0
      %1215 = vmatprep.subr.mxu0 0.0
      %1216 = vmatpush1.msra.mxu0 0.0
      %1217 = vmatprep.subr.mxu0 0.0
      %1218 = vmatpush1.msra.mxu0 0.0
      %1219 = vmatprep.subr.mxu0 0.0
      %1220 = vmatpush1.msra.mxu0 0.0
      %1221 = vmatprep.subr.mxu0 0.0
      %1222 = vmatpush1.msra.mxu0 0.0
      %1223 = vmatprep.subr.mxu0 0.0
      %1224 = vmatpush1.msra.mxu0 0.0
      %1225 = vmatprep.subr.mxu0 0.0
      %1226 = vmatpush1.msra.mxu0 0.0
      %1227 = vmatprep.subr.mxu0 0.0
      %1228 = vmatpush1.msra.mxu0 0.0
      %1229 = vmatprep.subr.mxu0 0.0
      %1230 = vmatpush1.msra.mxu0 0.0
      %1231 = vmatprep.subr.mxu0 0.0
      %1232 = vmatpush1.msra.mxu0 0.0
      %1233 = vmatprep.subr.mxu0 0.0
      %1234 = vmatpush1.msra.mxu0 0.0
      %1235 = vmatprep.subr.mxu0 0.0
      %1236 = vmatpush1.msra.mxu0 0.0
      %1237 = vmatprep.subr.mxu0 0.0
      %1238 = vmatpush1.msra.mxu0 0.0
      %1239 = vmatprep.subr.mxu0 0.0
      %1240 = vmatpush1.msra.mxu0 0.0
      %1241 = vmatprep.subr.mxu0 0.0
      %1242 = vmatpush1.msra.mxu0 0.0
      %1243 = vmatprep.mubr.f32.mxu0 0.0
      %1244 = vmatmul.mubr.f32.gmra.mrb[0].mxu0 %v1168
      %v1245 = vpop.f32.mrb[0].mxu0
      %v1246 = vadd.f32 %v571, %v1245
      %v1247 = vpop.f32.mrb[0].mxu0
      %1248 = vmatprep.mubr.f32.mxu0 0.0
      %1249 = vmatmul.mubr.f32.gmra.mrb[0].mxu0 %v1171
      %v1250 = vpop.f32.mrb[0].mxu0
      %v1251 = vadd.f32 %v572, %v1250
      %v1252 = vpop.f32.mrb[0].mxu0
      %1253 = vmatprep.mubr.f32.mxu0 0.0
      %1254 = vmatmul.mubr.f32.gmra.mrb[0].mxu0 %v1174
      %v1255 = vpop.f32.mrb[0].mxu0
      %v1256 = vadd.f32 %v573, %v1255
      %v1257 = vpop.f32.mrb[0].mxu0
      %1258 = vmatprep.mubr.f32.mxu0 0.0
      %1259 = vmatmul.mubr.f32.gmra.mrb[0].mxu0 %v1177
      %v1260 = vpop.f32.mrb[0].mxu0
      %v1261 = vadd.f32 %v574, %v1260
      %v1262 = vpop.f32.mrb[0].mxu0
      %1263 = vdwg.mxu0
      %v1264 = vxor.u32 %v1246, 2147483648
      %v1265 = vxor.u32 %v1251, 2147483648
      %v1266 = vxor.u32 %v1256, 2147483648
      %v1267 = vxor.u32 %v1261, 2147483648
      %v1268 = vmul.f32 %v1264, 1.442695
      %v1269 = vpow.pop %v1268
      %v1270 = vmul.f32 %v1265, 1.442695
      %v1271 = vpow.pop %v1270
      %v1272 = vmul.f32 %v1266, 1.442695
      %v1273 = vpow.pop %v1272
      %v1274 = vmul.f32 %v1267, 1.442695
      %v1275 = vpow.pop %v1274
      %v1276 = vadd.f32 %v1269, 1.0
      %v1277 = vadd.f32 %v1271, 1.0
      %v1278 = vadd.f32 %v1273, 1.0
      %v1279 = vadd.f32 %v1275, 1.0
      %v1280 = vrcp.pop %v1276
      %v1281 = vmul.f32 1.0, %v1280
      %v1282 = vrcp.pop %v1277
      %v1283 = vmul.f32 1.0, %v1282
      %v1284 = vrcp.pop %v1278
      %v1285 = vmul.f32 1.0, %v1284
      %v1286 = vrcp.pop %v1279
      %v1287 = vmul.f32 1.0, %v1286
      %v1288 = vmul.f32 %v1281, 0.0
      %v1289 = vmul.f32 %v1283, 0.0
      %v1291 = vsel %vm590, %v1288, 0
      %v1294 = vsel %vm590, %v1289, 0
      %v1297 = vsel %vm594, %v577, 0
      %1299 = vmatprep.subr.mxu0 0.0
      %1300 = vmatpush1.msra.mxu0 %v1297
      %1301 = vmatprep.subr.mxu0 0.0
      %1302 = vmatpush1.msra.mxu0 0.0
      %1303 = vmatprep.subr.mxu0 0.0
      %1304 = vmatpush1.msra.mxu0 0.0
      %1305 = vmatprep.subr.mxu0 0.0
      %1306 = vmatpush1.msra.mxu0 0.0
      %1307 = vmatprep.subr.mxu0 0.0
      %1308 = vmatpush1.msra.mxu0 0.0
      %1309 = vmatprep.subr.mxu0 0.0
      %1310 = vmatpush1.msra.mxu0 0.0
      %1311 = vmatprep.subr.mxu0 0.0
      %1312 = vmatpush1.msra.mxu0 0.0
      %1313 = vmatprep.subr.mxu0 0.0
      %1314 = vmatpush1.msra.mxu0 0.0
      %1315 = vmatprep.subr.mxu0 0.0
      %1316 = vmatpush1.msra.mxu0 0.0
      %1317 = vmatprep.subr.mxu0 0.0
      %1318 = vmatpush1.msra.mxu0 0.0
      %1319 = vmatprep.subr.mxu0 0.0
      %1320 = vmatpush1.msra.mxu0 0.0
      %1321 = vmatprep.subr.mxu0 0.0
      %1322 = vmatpush1.msra.mxu0 0.0
      %1323 = vmatprep.subr.mxu0 0.0
      %1324 = vmatpush1.msra.mxu0 0.0
      %1325 = vmatprep.subr.mxu0 0.0
      %1326 = vmatpush1.msra.mxu0 0.0
      %1327 = vmatprep.subr.mxu0 0.0
      %1328 = vmatpush1.msra.mxu0 0.0
      %1329 = vmatprep.subr.mxu0 0.0
      %1330 = vmatpush1.msra.mxu0 0.0
      %1331 = vmatprep.subr.mxu0 0.0
      %1332 = vmatpush1.msra.mxu0 0.0
      %1333 = vmatprep.subr.mxu0 0.0
      %1334 = vmatpush1.msra.mxu0 0.0
      %1335 = vmatprep.subr.mxu0 0.0
      %1336 = vmatpush1.msra.mxu0 0.0
      %1337 = vmatprep.subr.mxu0 0.0
      %1338 = vmatpush1.msra.mxu0 0.0
      %1339 = vmatprep.subr.mxu0 0.0
      %1340 = vmatpush1.msra.mxu0 0.0
      %1341 = vmatprep.subr.mxu0 0.0
      %1342 = vmatpush1.msra.mxu0 0.0
      %1343 = vmatprep.subr.mxu0 0.0
      %1344 = vmatpush1.msra.mxu0 0.0
      %1345 = vmatprep.subr.mxu0 0.0
      %1346 = vmatpush1.msra.mxu0 0.0
      %1347 = vmatprep.subr.mxu0 0.0
      %1348 = vmatpush1.msra.mxu0 0.0
      %1349 = vmatprep.subr.mxu0 0.0
      %1350 = vmatpush1.msra.mxu0 0.0
      %1351 = vmatprep.subr.mxu0 0.0
      %1352 = vmatpush1.msra.mxu0 0.0
      %1353 = vmatprep.subr.mxu0 0.0
      %1354 = vmatpush1.msra.mxu0 0.0
      %1355 = vmatprep.subr.mxu0 0.0
      %1356 = vmatpush1.msra.mxu0 0.0
      %1357 = vmatprep.subr.mxu0 0.0
      %1358 = vmatpush1.msra.mxu0 0.0
      %1359 = vmatprep.subr.mxu0 0.0
      %1360 = vmatpush1.msra.mxu0 0.0
      %1361 = vmatprep.subr.mxu0 0.0
      %1362 = vmatpush1.msra.mxu0 0.0
      %1363 = vmatprep.mubr.f32.mxu0 0.0
      %1364 = vmatmul.mubr.f32.gmra.mrb[0].mxu0 %v1291
      %v1365 = vpop.f32.mrb[0].mxu0
      %v1366 = vadd.f32 0.0, %v1365
      %v1367 = vpop.f32.mrb[0].mxu0
      %1368 = vmatprep.mubr.f32.mxu0 0.0
      %1369 = vmatmul.mubr.f32.gmra.mrb[0].mxu0 %v1294
      %v1370 = vpop.f32.mrb[0].mxu0
      %v1371 = vadd.f32 0.0, %v1370
      %v1372 = vpop.f32.mrb[0].mxu0
      %1373 = vdwg.mxu0
      %v1374 = vadd.f32 %v588, %v1366
      %v1375 = vadd.f32 %v589, %v1371
      %v1377 = vsel %vm759, %v575, 0
      %v1380 = vsel %vm759, %v576, 0
      %1382 = vmatprep.subr.mxu0 0.0
      %1383 = vmatpush1.msra.mxu0 %v1374
      %1384 = vmatprep.subr.mxu0 0.0
      %1385 = vmatpush1.msra.mxu0 %v1375
      %1386 = vmatprep.subr.mxu0 0.0
      %1387 = vmatpush1.msra.mxu0 0.0
      %1388 = vmatprep.subr.mxu0 0.0
      %1389 = vmatpush1.msra.mxu0 0.0
      %1390 = vmatprep.subr.mxu0 0.0
      %1391 = vmatpush1.msra.mxu0 0.0
      %1392 = vmatprep.subr.mxu0 0.0
      %1393 = vmatpush1.msra.mxu0 0.0
      %1394 = vmatprep.subr.mxu0 0.0
      %1395 = vmatpush1.msra.mxu0 0.0
      %1396 = vmatprep.subr.mxu0 0.0
      %1397 = vmatpush1.msra.mxu0 0.0
      %1398 = vmatprep.subr.mxu0 0.0
      %1399 = vmatpush1.msra.mxu0 0.0
      %1400 = vmatprep.subr.mxu0 0.0
      %1401 = vmatpush1.msra.mxu0 0.0
      %1402 = vmatprep.subr.mxu0 0.0
      %1403 = vmatpush1.msra.mxu0 0.0
      %1404 = vmatprep.subr.mxu0 0.0
      %1405 = vmatpush1.msra.mxu0 0.0
      %1406 = vmatprep.subr.mxu0 0.0
      %1407 = vmatpush1.msra.mxu0 0.0
      %1408 = vmatprep.subr.mxu0 0.0
      %1409 = vmatpush1.msra.mxu0 0.0
      %1410 = vmatprep.subr.mxu0 0.0
      %1411 = vmatpush1.msra.mxu0 0.0
      %1412 = vmatprep.subr.mxu0 0.0
      %1413 = vmatpush1.msra.mxu0 0.0
      %1414 = vmatprep.subr.mxu0 0.0
      %1415 = vmatpush1.msra.mxu0 0.0
      %1416 = vmatprep.subr.mxu0 0.0
      %1417 = vmatpush1.msra.mxu0 0.0
      %1418 = vmatprep.subr.mxu0 0.0
      %1419 = vmatpush1.msra.mxu0 0.0
      %1420 = vmatprep.subr.mxu0 0.0
      %1421 = vmatpush1.msra.mxu0 0.0
      %1422 = vmatprep.subr.mxu0 0.0
      %1423 = vmatpush1.msra.mxu0 0.0
      %1424 = vmatprep.subr.mxu0 0.0
      %1425 = vmatpush1.msra.mxu0 0.0
      %1426 = vmatprep.subr.mxu0 0.0
      %1427 = vmatpush1.msra.mxu0 0.0
      %1428 = vmatprep.subr.mxu0 0.0
      %1429 = vmatpush1.msra.mxu0 0.0
      %1430 = vmatprep.subr.mxu0 0.0
      %1431 = vmatpush1.msra.mxu0 0.0
      %1432 = vmatprep.subr.mxu0 0.0
      %1433 = vmatpush1.msra.mxu0 0.0
      %1434 = vmatprep.subr.mxu0 0.0
      %1435 = vmatpush1.msra.mxu0 0.0
      %1436 = vmatprep.subr.mxu0 0.0
      %1437 = vmatpush1.msra.mxu0 0.0
      %1438 = vmatprep.subr.mxu0 0.0
      %1439 = vmatpush1.msra.mxu0 0.0
      %1440 = vmatprep.subr.mxu0 0.0
      %1441 = vmatpush1.msra.mxu0 0.0
      %1442 = vmatprep.subr.mxu0 0.0
      %1443 = vmatpush1.msra.mxu0 0.0
      %1444 = vmatprep.subr.mxu0 0.0
      %1445 = vmatpush1.msra.mxu0 0.0
      %1446 = vmatprep.mubr.f32.mxu0 0.0
      %1447 = vmatmul.mubr.f32.gmra.mrb[0].mxu0 %v1377
      %v1448 = vpop.f32.mrb[0].mxu0
      %v1449 = vadd.f32 %v578, %v1448
      %v1450 = vpop.f32.mrb[0].mxu0
      %1451 = vmatprep.mubr.f32.mxu0 0.0
      %1452 = vmatmul.mubr.f32.gmra.mrb[0].mxu0 %v1380
      %v1453 = vpop.f32.mrb[0].mxu0
      %v1454 = vadd.f32 %v579, %v1453
      %v1455 = vpop.f32.mrb[0].mxu0
      %1456 = vdwg.mxu0
      %v1457 = vtanh.pop %v1449
      %v1458 = vtanh.pop %v1454
      %v1459 = vmul.f32 %v1285, 0.0
      %v1460 = vmul.f32 %v1287, 0.0
      %v1461 = vsub.f32 1.0, %v1285
      %v1462 = vsub.f32 1.0, %v1287
      %1465 = vrot.lane.b32.xlu0 %v1457, 4
      %v1466 = vpop.permute.xlu0 %1465
      %1467 = vrot.lane.b32.xlu0 %v1458, 4
      %v1468 = vpop.permute.xlu0 %1467
      %v1471 = vmul.f32 %v1461, %v1466
      %v1472 = vmul.f32 %v1462, %v1468
      %v1473 = vadd.f32 %v1459, %v1471
      %v1474 = vadd.f32 %v1460, %v1472
      %s1475 = scalar_lea.vmem %s534, 32
      %v1476 = vld [vmem:[%s1475] sm:$0xff]
      %v1477 = vld [vmem:[%s1475 + $0x8] sm:$0xff]
      %v1478 = vld [vmem:[%s1475 + $0x10] sm:$0xff]
      %v1479 = vld [vmem:[%s1475 + $0x18] sm:$0xff]
      %s1480 = scalar_lea.vmem %s539, 16
      %v1481 = vld [vmem:[%s1480] sm:$0xff]
      %v1482 = vld [vmem:[%s1480 + $0x8] sm:$0xff]
      %s1483 = scalar_lea.vmem %s544, 16
      %v1484 = vld [vmem:[%s1483] sm:$0xff]
      %v1485 = vld [vmem:[%s1483 + $0x8] sm:$0xff]
      %s1486 = scalar_lea.vmem %s549, 16
      %v1487 = vld [vmem:[%s1486] sm:$0xff]
      %v1488 = vld [vmem:[%s1486 + $0x8] sm:$0xff]
      %1491 = vrot.lane.b32.xlu0 %v1473, 124
      %v1492 = vpop.permute.xlu0 %1491
      %1493 = vrot.lane.b32.xlu0 %v1474, 124
      %v1494 = vpop.permute.xlu0 %1493
      %v1495 = vsel %vm590, %v1492, 0
      %v1497 = vsel %vm590, %v1494, 0
      %1499 = vmatprep.subr.mxu0 0.0
      %1500 = vmatpush1.msra.mxu0 %v596
      %1501 = vmatprep.subr.mxu0 0.0
      %1502 = vmatpush1.msra.mxu0 0.0
      %1503 = vmatprep.subr.mxu0 0.0
      %1504 = vmatpush1.msra.mxu0 0.0
      %1505 = vmatprep.subr.mxu0 0.0
      %1506 = vmatpush1.msra.mxu0 0.0
      %1507 = vmatprep.subr.mxu0 0.0
      %1508 = vmatpush1.msra.mxu0 0.0
      %1509 = vmatprep.subr.mxu0 0.0
      %1510 = vmatpush1.msra.mxu0 0.0
      %1511 = vmatprep.subr.mxu0 0.0
      %1512 = vmatpush1.msra.mxu0 0.0
      %1513 = vmatprep.subr.mxu0 0.0
      %1514 = vmatpush1.msra.mxu0 0.0
      %1515 = vmatprep.subr.mxu0 0.0
      %1516 = vmatpush1.msra.mxu0 0.0
      %1517 = vmatprep.subr.mxu0 0.0
      %1518 = vmatpush1.msra.mxu0 0.0
      %1519 = vmatprep.subr.mxu0 0.0
      %1520 = vmatpush1.msra.mxu0 0.0
      %1521 = vmatprep.subr.mxu0 0.0
      %1522 = vmatpush1.msra.mxu0 0.0
      %1523 = vmatprep.subr.mxu0 0.0
      %1524 = vmatpush1.msra.mxu0 0.0
      %1525 = vmatprep.subr.mxu0 0.0
      %1526 = vmatpush1.msra.mxu0 0.0
      %1527 = vmatprep.subr.mxu0 0.0
      %1528 = vmatpush1.msra.mxu0 0.0
      %1529 = vmatprep.subr.mxu0 0.0
      %1530 = vmatpush1.msra.mxu0 0.0
      %1531 = vmatprep.subr.mxu0 0.0
      %1532 = vmatpush1.msra.mxu0 0.0
      %1533 = vmatprep.subr.mxu0 0.0
      %1534 = vmatpush1.msra.mxu0 0.0
      %1535 = vmatprep.subr.mxu0 0.0
      %1536 = vmatpush1.msra.mxu0 0.0
      %1537 = vmatprep.subr.mxu0 0.0
      %1538 = vmatpush1.msra.mxu0 0.0
      %1539 = vmatprep.subr.mxu0 0.0
      %1540 = vmatpush1.msra.mxu0 0.0
      %1541 = vmatprep.subr.mxu0 0.0
      %1542 = vmatpush1.msra.mxu0 0.0
      %1543 = vmatprep.subr.mxu0 0.0
      %1544 = vmatpush1.msra.mxu0 0.0
      %1545 = vmatprep.subr.mxu0 0.0
      %1546 = vmatpush1.msra.mxu0 0.0
      %1547 = vmatprep.subr.mxu0 0.0
      %1548 = vmatpush1.msra.mxu0 0.0
      %1549 = vmatprep.subr.mxu0 0.0
      %1550 = vmatpush1.msra.mxu0 0.0
      %1551 = vmatprep.subr.mxu0 0.0
      %1552 = vmatpush1.msra.mxu0 0.0
      %1553 = vmatprep.subr.mxu0 0.0
      %1554 = vmatpush1.msra.mxu0 0.0
      %1555 = vmatprep.subr.mxu0 0.0
      %1556 = vmatpush1.msra.mxu0 0.0
      %1557 = vmatprep.subr.mxu0 0.0
      %1558 = vmatpush1.msra.mxu0 0.0
      %1559 = vmatprep.subr.mxu0 0.0
      %1560 = vmatpush1.msra.mxu0 0.0
      %1561 = vmatprep.subr.mxu0 0.0
      %1562 = vmatpush1.msra.mxu0 0.0
      %1563 = vmatprep.mubr.f32.mxu0 0.0
      %1564 = vmatmul.mubr.f32.gmra.mrb[0].mxu0 %v1495
      %v1565 = vpop.f32.mrb[0].mxu0
      %v1566 = vadd.f32 0.0, %v1565
      %v1567 = vpop.f32.mrb[0].mxu0
      %1568 = vmatprep.mubr.f32.mxu0 0.0
      %1569 = vmatmul.mubr.f32.gmra.mrb[0].mxu0 %v1497
      %v1570 = vpop.f32.mrb[0].mxu0
      %v1571 = vadd.f32 0.0, %v1570
      %v1572 = vpop.f32.mrb[0].mxu0
      %1573 = vdwg.mxu0
      %v1574 = vadd.f32 %v1484, %v1566
      %v1575 = vadd.f32 %v1485, %v1571
      %v1576 = vtanh.pop %v1574
      %v1577 = vtanh.pop %v1575
      %v1578 = vmul.f32 %v1576, 0.5
      %v1579 = vmul.f32 %v1577, 0.5
      %1580 = vmatprep.subr.mxu0 0.0
      %1581 = vmatpush1.msra.mxu0 %v680
      %1582 = vmatprep.subr.mxu0 0.0
      %1583 = vmatpush1.msra.mxu0 0.0
      %1584 = vmatprep.subr.mxu0 0.0
      %1585 = vmatpush1.msra.mxu0 0.0
      %1586 = vmatprep.subr.mxu0 0.0
      %1587 = vmatpush1.msra.mxu0 0.0
      %1588 = vmatprep.subr.mxu0 0.0
      %1589 = vmatpush1.msra.mxu0 0.0
      %1590 = vmatprep.subr.mxu0 0.0
      %1591 = vmatpush1.msra.mxu0 0.0
      %1592 = vmatprep.subr.mxu0 0.0
      %1593 = vmatpush1.msra.mxu0 0.0
      %1594 = vmatprep.subr.mxu0 0.0
      %1595 = vmatpush1.msra.mxu0 0.0
      %1596 = vmatprep.subr.mxu0 0.0
      %1597 = vmatpush1.msra.mxu0 0.0
      %1598 = vmatprep.subr.mxu0 0.0
      %1599 = vmatpush1.msra.mxu0 0.0
      %1600 = vmatprep.subr.mxu0 0.0
      %1601 = vmatpush1.msra.mxu0 0.0
      %1602 = vmatprep.subr.mxu0 0.0
      %1603 = vmatpush1.msra.mxu0 0.0
      %1604 = vmatprep.subr.mxu0 0.0
      %1605 = vmatpush1.msra.mxu0 0.0
      %1606 = vmatprep.subr.mxu0 0.0
      %1607 = vmatpush1.msra.mxu0 0.0
      %1608 = vmatprep.subr.mxu0 0.0
      %1609 = vmatpush1.msra.mxu0 0.0
      %1610 = vmatprep.subr.mxu0 0.0
      %1611 = vmatpush1.msra.mxu0 0.0
      %1612 = vmatprep.subr.mxu0 0.0
      %1613 = vmatpush1.msra.mxu0 0.0
      %1614 = vmatprep.subr.mxu0 0.0
      %1615 = vmatpush1.msra.mxu0 0.0
      %1616 = vmatprep.subr.mxu0 0.0
      %1617 = vmatpush1.msra.mxu0 0.0
      %1618 = vmatprep.subr.mxu0 0.0
      %1619 = vmatpush1.msra.mxu0 0.0
      %1620 = vmatprep.subr.mxu0 0.0
      %1621 = vmatpush1.msra.mxu0 0.0
      %1622 = vmatprep.subr.mxu0 0.0
      %1623 = vmatpush1.msra.mxu0 0.0
      %1624 = vmatprep.subr.mxu0 0.0
      %1625 = vmatpush1.msra.mxu0 0.0
      %1626 = vmatprep.subr.mxu0 0.0
      %1627 = vmatpush1.msra.mxu0 0.0
      %1628 = vmatprep.subr.mxu0 0.0
      %1629 = vmatpush1.msra.mxu0 0.0
      %1630 = vmatprep.subr.mxu0 0.0
      %1631 = vmatpush1.msra.mxu0 0.0
      %1632 = vmatprep.subr.mxu0 0.0
      %1633 = vmatpush1.msra.mxu0 0.0
      %1634 = vmatprep.subr.mxu0 0.0
      %1635 = vmatpush1.msra.mxu0 0.0
      %1636 = vmatprep.subr.mxu0 0.0
      %1637 = vmatpush1.msra.mxu0 0.0
      %1638 = vmatprep.subr.mxu0 0.0
      %1639 = vmatpush1.msra.mxu0 0.0
      %1640 = vmatprep.subr.mxu0 0.0
      %1641 = vmatpush1.msra.mxu0 0.0
      %1642 = vmatprep.subr.mxu0 0.0
      %1643 = vmatpush1.msra.mxu0 0.0
      %1644 = vmatprep.mubr.f32.mxu0 0.0
      %1645 = vmatmul.mubr.f32.gmra.mrb[0].mxu0 %v1495
      %v1646 = vpop.f32.mrb[0].mxu0
      %v1647 = vadd.f32 0.0, %v1646
      %v1648 = vpop.f32.mrb[0].mxu0
      %1649 = vmatprep.mubr.f32.mxu0 0.0
      %1650 = vmatmul.mubr.f32.gmra.mrb[0].mxu0 %v1497
      %v1651 = vpop.f32.mrb[0].mxu0
      %v1652 = vadd.f32 0.0, %v1651
      %v1653 = vpop.f32.mrb[0].mxu0
      %1654 = vdwg.mxu0
      %v1655 = vadd.f32 %v1481, %v1647
      %v1656 = vadd.f32 %v1482, %v1652
      %1657 = vmatprep.subr.mxu0 0.0
      %1658 = vmatpush1.msra.mxu0 %v1655
      %1659 = vmatprep.subr.mxu0 0.0
      %1660 = vmatpush1.msra.mxu0 %v1656
      %1661 = vmatprep.subr.mxu0 0.0
      %1662 = vmatpush1.msra.mxu0 0.0
      %1663 = vmatprep.subr.mxu0 0.0
      %1664 = vmatpush1.msra.mxu0 0.0
      %1665 = vmatprep.subr.mxu0 0.0
      %1666 = vmatpush1.msra.mxu0 0.0
      %1667 = vmatprep.subr.mxu0 0.0
      %1668 = vmatpush1.msra.mxu0 0.0
      %1669 = vmatprep.subr.mxu0 0.0
      %1670 = vmatpush1.msra.mxu0 0.0
      %1671 = vmatprep.subr.mxu0 0.0
      %1672 = vmatpush1.msra.mxu0 0.0
      %1673 = vmatprep.subr.mxu0 0.0
      %1674 = vmatpush1.msra.mxu0 0.0
      %1675 = vmatprep.subr.mxu0 0.0
      %1676 = vmatpush1.msra.mxu0 0.0
      %1677 = vmatprep.subr.mxu0 0.0
      %1678 = vmatpush1.msra.mxu0 0.0
      %1679 = vmatprep.subr.mxu0 0.0
      %1680 = vmatpush1.msra.mxu0 0.0
      %1681 = vmatprep.subr.mxu0 0.0
      %1682 = vmatpush1.msra.mxu0 0.0
      %1683 = vmatprep.subr.mxu0 0.0
      %1684 = vmatpush1.msra.mxu0 0.0
      %1685 = vmatprep.subr.mxu0 0.0
      %1686 = vmatpush1.msra.mxu0 0.0
      %1687 = vmatprep.subr.mxu0 0.0
      %1688 = vmatpush1.msra.mxu0 0.0
      %1689 = vmatprep.subr.mxu0 0.0
      %1690 = vmatpush1.msra.mxu0 0.0
      %1691 = vmatprep.subr.mxu0 0.0
      %1692 = vmatpush1.msra.mxu0 0.0
      %1693 = vmatprep.subr.mxu0 0.0
      %1694 = vmatpush1.msra.mxu0 0.0
      %1695 = vmatprep.subr.mxu0 0.0
      %1696 = vmatpush1.msra.mxu0 0.0
      %1697 = vmatprep.subr.mxu0 0.0
      %1698 = vmatpush1.msra.mxu0 0.0
      %1699 = vmatprep.subr.mxu0 0.0
      %1700 = vmatpush1.msra.mxu0 0.0
      %1701 = vmatprep.subr.mxu0 0.0
      %1702 = vmatpush1.msra.mxu0 0.0
      %1703 = vmatprep.subr.mxu0 0.0
      %1704 = vmatpush1.msra.mxu0 0.0
      %1705 = vmatprep.subr.mxu0 0.0
      %1706 = vmatpush1.msra.mxu0 0.0
      %1707 = vmatprep.subr.mxu0 0.0
      %1708 = vmatpush1.msra.mxu0 0.0
      %1709 = vmatprep.subr.mxu0 0.0
      %1710 = vmatpush1.msra.mxu0 0.0
      %1711 = vmatprep.subr.mxu0 0.0
      %1712 = vmatpush1.msra.mxu0 0.0
      %1713 = vmatprep.subr.mxu0 0.0
      %1714 = vmatpush1.msra.mxu0 0.0
      %1715 = vmatprep.subr.mxu0 0.0
      %1716 = vmatpush1.msra.mxu0 0.0
      %1717 = vmatprep.subr.mxu0 0.0
      %1718 = vmatpush1.msra.mxu0 0.0
      %1719 = vmatprep.subr.mxu0 0.0
      %1720 = vmatpush1.msra.mxu0 0.0
      %1721 = vmatprep.mubr.f32.mxu0 0.0
      %1722 = vmatmul.mubr.f32.gmra.mrb[0].mxu0 %v761
      %v1723 = vpop.f32.mrb[0].mxu0
      %v1724 = vadd.f32 %v561, %v1723
      %v1725 = vpop.f32.mrb[0].mxu0
      %1726 = vmatprep.mubr.f32.mxu0 0.0
      %1727 = vmatmul.mubr.f32.gmra.mrb[0].mxu0 %v764
      %v1728 = vpop.f32.mrb[0].mxu0
      %v1729 = vadd.f32 %v562, %v1728
      %v1730 = vpop.f32.mrb[0].mxu0
      %1731 = vmatprep.mubr.f32.mxu0 0.0
      %1732 = vmatmul.mubr.f32.gmra.mrb[0].mxu0 %v767
      %v1733 = vpop.f32.mrb[0].mxu0
      %v1734 = vadd.f32 %v563, %v1733
      %v1735 = vpop.f32.mrb[0].mxu0
      %1736 = vmatprep.mubr.f32.mxu0 0.0
      %1737 = vmatmul.mubr.f32.gmra.mrb[0].mxu0 %v770
      %v1738 = vpop.f32.mrb[0].mxu0
      %v1739 = vadd.f32 %v564, %v1738
      %v1740 = vpop.f32.mrb[0].mxu0
      %1741 = vdwg.mxu0
      %v1742 = vsel %vm857, %v1724, -inf
      %1743 = vmax.xlane.f32.xlu0 %v1742
      %v1744 = vpop.xlane.xlu0 %1743
      %v1745 = vsel %vm857, %v1729, -inf
      %1746 = vmax.xlane.f32.xlu0 %v1745
      %v1747 = vpop.xlane.xlu0 %1746
      %v1748 = vsel %vm857, %v1734, -inf
      %1749 = vmax.xlane.f32.xlu0 %v1748
      %v1750 = vpop.xlane.xlu0 %1749
      %v1751 = vsel %vm857, %v1739, -inf
      %1752 = vmax.xlane.f32.xlu0 %v1751
      %v1753 = vpop.xlane.xlu0 %1752
      %v1754 = vsub.f32 %v1724, %v1744
      %v1755 = vsub.f32 %v1729, %v1747
      %v1756 = vsub.f32 %v1734, %v1750
      %v1757 = vsub.f32 %v1739, %v1753
      %v1758 = vmul.f32 %v1754, 1.442695
      %v1759 = vpow.pop %v1758
      %v1760 = vmul.f32 %v1755, 1.442695
      %v1761 = vpow.pop %v1760
      %v1762 = vmul.f32 %v1756, 1.442695
      %v1763 = vpow.pop %v1762
      %v1764 = vmul.f32 %v1757, 1.442695
      %v1765 = vpow.pop %v1764
      %v1766 = vsel %vm857, %v1759, 0.0
      %1767 = vadd.xlane.f32.xlu0 %v1766
      %v1768 = vpop.xlane.xlu0 %1767
      %v1769 = vsel %vm857, %v1761, 0.0
      %1770 = vadd.xlane.f32.xlu0 %v1769
      %v1771 = vpop.xlane.xlu0 %1770
      %v1772 = vsel %vm857, %v1763, 0.0
      %1773 = vadd.xlane.f32.xlu0 %v1772
      %v1774 = vpop.xlane.xlu0 %1773
      %v1775 = vsel %vm857, %v1765, 0.0
      %1776 = vadd.xlane.f32.xlu0 %v1775
      %v1777 = vpop.xlane.xlu0 %1776
      %v1778 = vrcp.pop %v1768
      %v1779 = vmul.f32 %v1759, %v1778
      %v1780 = vrcp.pop %v1771
      %v1781 = vmul.f32 %v1761, %v1780
      %v1782 = vrcp.pop %v1774
      %v1783 = vmul.f32 %v1763, %v1782
      %v1784 = vrcp.pop %v1777
      %v1785 = vmul.f32 %v1765, %v1784
      %v1787 = vsel %vm857, %v1779, 0
      %v1790 = vsel %vm857, %v1781, 0
      %v1793 = vsel %vm857, %v1783, 0
      %v1796 = vsel %vm857, %v1785, 0
      %1798 = vmatprep.subr.mxu0 0.0
      %1799 = vmatpush1.msra.mxu0 %v1476
      %1800 = vmatprep.subr.mxu0 0.0
      %1801 = vmatpush1.msra.mxu0 %v1477
      %1802 = vmatprep.subr.mxu0 0.0
      %1803 = vmatpush1.msra.mxu0 %v1478
      %1804 = vmatprep.subr.mxu0 0.0
      %1805 = vmatpush1.msra.mxu0 %v1479
      %1806 = vmatprep.subr.mxu0 0.0
      %1807 = vmatpush1.msra.mxu0 0.0
      %1808 = vmatprep.subr.mxu0 0.0
      %1809 = vmatpush1.msra.mxu0 0.0
      %1810 = vmatprep.subr.mxu0 0.0
      %1811 = vmatpush1.msra.mxu0 0.0
      %1812 = vmatprep.subr.mxu0 0.0
      %1813 = vmatpush1.msra.mxu0 0.0
      %1814 = vmatprep.subr.mxu0 0.0
      %1815 = vmatpush1.msra.mxu0 0.0
      %1816 = vmatprep.subr.mxu0 0.0
      %1817 = vmatpush1.msra.mxu0 0.0
      %1818 = vmatprep.subr.mxu0 0.0
      %1819 = vmatpush1.msra.mxu0 0.0
      %1820 = vmatprep.subr.mxu0 0.0
      %1821 = vmatpush1.msra.mxu0 0.0
      %1822 = vmatprep.subr.mxu0 0.0
      %1823 = vmatpush1.msra.mxu0 0.0
      %1824 = vmatprep.subr.mxu0 0.0
      %1825 = vmatpush1.msra.mxu0 0.0
      %1826 = vmatprep.subr.mxu0 0.0
      %1827 = vmatpush1.msra.mxu0 0.0
      %1828 = vmatprep.subr.mxu0 0.0
      %1829 = vmatpush1.msra.mxu0 0.0
      %1830 = vmatprep.subr.mxu0 0.0
      %1831 = vmatpush1.msra.mxu0 0.0
      %1832 = vmatprep.subr.mxu0 0.0
      %1833 = vmatpush1.msra.mxu0 0.0
      %1834 = vmatprep.subr.mxu0 0.0
      %1835 = vmatpush1.msra.mxu0 0.0
      %1836 = vmatprep.subr.mxu0 0.0
      %1837 = vmatpush1.msra.mxu0 0.0
      %1838 = vmatprep.subr.mxu0 0.0
      %1839 = vmatpush1.msra.mxu0 0.0
      %1840 = vmatprep.subr.mxu0 0.0
      %1841 = vmatpush1.msra.mxu0 0.0
      %1842 = vmatprep.subr.mxu0 0.0
      %1843 = vmatpush1.msra.mxu0 0.0
      %1844 = vmatprep.subr.mxu0 0.0
      %1845 = vmatpush1.msra.mxu0 0.0
      %1846 = vmatprep.subr.mxu0 0.0
      %1847 = vmatpush1.msra.mxu0 0.0
      %1848 = vmatprep.subr.mxu0 0.0
      %1849 = vmatpush1.msra.mxu0 0.0
      %1850 = vmatprep.subr.mxu0 0.0
      %1851 = vmatpush1.msra.mxu0 0.0
      %1852 = vmatprep.subr.mxu0 0.0
      %1853 = vmatpush1.msra.mxu0 0.0
      %1854 = vmatprep.subr.mxu0 0.0
      %1855 = vmatpush1.msra.mxu0 0.0
      %1856 = vmatprep.subr.mxu0 0.0
      %1857 = vmatpush1.msra.mxu0 0.0
      %1858 = vmatprep.subr.mxu0 0.0
      %1859 = vmatpush1.msra.mxu0 0.0
      %1860 = vmatprep.subr.mxu0 0.0
      %1861 = vmatpush1.msra.mxu0 0.0
      %1862 = vmatprep.mubr.f32.mxu0 0.0
      %1863 = vmatmul.mubr.f32.gmra.mrb[0].mxu0 %v1787
      %v1864 = vpop.f32.mrb[0].mxu0
      %v1865 = vadd.f32 0.0, %v1864
      %v1866 = vpop.f32.mrb[0].mxu0
      %1867 = vmatprep.mubr.f32.mxu0 0.0
      %1868 = vmatmul.mubr.f32.gmra.mrb[0].mxu0 %v1790
      %v1869 = vpop.f32.mrb[0].mxu0
      %v1870 = vadd.f32 0.0, %v1869
      %v1871 = vpop.f32.mrb[0].mxu0
      %1872 = vmatprep.mubr.f32.mxu0 0.0
      %1873 = vmatmul.mubr.f32.gmra.mrb[0].mxu0 %v1793
      %v1874 = vpop.f32.mrb[0].mxu0
      %v1875 = vadd.f32 0.0, %v1874
      %v1876 = vpop.f32.mrb[0].mxu0
      %1877 = vmatprep.mubr.f32.mxu0 0.0
      %1878 = vmatmul.mubr.f32.gmra.mrb[0].mxu0 %v1796
      %v1879 = vpop.f32.mrb[0].mxu0
      %v1880 = vadd.f32 0.0, %v1879
      %v1881 = vpop.f32.mrb[0].mxu0
      %1882 = vdwg.mxu0
      %v1883 = vadd.f32 %v1865, %v1875
      %v1884 = vadd.f32 %v1870, %v1880
      %v1885 = vadd.f32 %v1883, %v1578
      %v1886 = vadd.f32 %v1884, %v1579
      %1887 = vmatprep.subr.mxu0 0.0
      %1888 = vmatpush1.msra.mxu0 %v1004
      %1889 = vmatprep.subr.mxu0 0.0
      %1890 = vmatpush1.msra.mxu0 0.0
      %1891 = vmatprep.subr.mxu0 0.0
      %1892 = vmatpush1.msra.mxu0 0.0
      %1893 = vmatprep.subr.mxu0 0.0
      %1894 = vmatpush1.msra.mxu0 0.0
      %1895 = vmatprep.subr.mxu0 0.0
      %1896 = vmatpush1.msra.mxu0 0.0
      %1897 = vmatprep.subr.mxu0 0.0
      %1898 = vmatpush1.msra.mxu0 0.0
      %1899 = vmatprep.subr.mxu0 0.0
      %1900 = vmatpush1.msra.mxu0 0.0
      %1901 = vmatprep.subr.mxu0 0.0
      %1902 = vmatpush1.msra.mxu0 0.0
      %1903 = vmatprep.subr.mxu0 0.0
      %1904 = vmatpush1.msra.mxu0 0.0
      %1905 = vmatprep.subr.mxu0 0.0
      %1906 = vmatpush1.msra.mxu0 0.0
      %1907 = vmatprep.subr.mxu0 0.0
      %1908 = vmatpush1.msra.mxu0 0.0
      %1909 = vmatprep.subr.mxu0 0.0
      %1910 = vmatpush1.msra.mxu0 0.0
      %1911 = vmatprep.subr.mxu0 0.0
      %1912 = vmatpush1.msra.mxu0 0.0
      %1913 = vmatprep.subr.mxu0 0.0
      %1914 = vmatpush1.msra.mxu0 0.0
      %1915 = vmatprep.subr.mxu0 0.0
      %1916 = vmatpush1.msra.mxu0 0.0
      %1917 = vmatprep.subr.mxu0 0.0
      %1918 = vmatpush1.msra.mxu0 0.0
      %1919 = vmatprep.subr.mxu0 0.0
      %1920 = vmatpush1.msra.mxu0 0.0
      %1921 = vmatprep.subr.mxu0 0.0
      %1922 = vmatpush1.msra.mxu0 0.0
      %1923 = vmatprep.subr.mxu0 0.0
      %1924 = vmatpush1.msra.mxu0 0.0
      %1925 = vmatprep.subr.mxu0 0.0
      %1926 = vmatpush1.msra.mxu0 0.0
      %1927 = vmatprep.subr.mxu0 0.0
      %1928 = vmatpush1.msra.mxu0 0.0
      %1929 = vmatprep.subr.mxu0 0.0
      %1930 = vmatpush1.msra.mxu0 0.0
      %1931 = vmatprep.subr.mxu0 0.0
      %1932 = vmatpush1.msra.mxu0 0.0
      %1933 = vmatprep.subr.mxu0 0.0
      %1934 = vmatpush1.msra.mxu0 0.0
      %1935 = vmatprep.subr.mxu0 0.0
      %1936 = vmatpush1.msra.mxu0 0.0
      %1937 = vmatprep.subr.mxu0 0.0
      %1938 = vmatpush1.msra.mxu0 0.0
      %1939 = vmatprep.subr.mxu0 0.0
      %1940 = vmatpush1.msra.mxu0 0.0
      %1941 = vmatprep.subr.mxu0 0.0
      %1942 = vmatpush1.msra.mxu0 0.0
      %1943 = vmatprep.subr.mxu0 0.0
      %1944 = vmatpush1.msra.mxu0 0.0
      %1945 = vmatprep.subr.mxu0 0.0
      %1946 = vmatpush1.msra.mxu0 0.0
      %1947 = vmatprep.subr.mxu0 0.0
      %1948 = vmatpush1.msra.mxu0 0.0
      %1949 = vmatprep.subr.mxu0 0.0
      %1950 = vmatpush1.msra.mxu0 0.0
      %1951 = vmatprep.mubr.f32.mxu0 0.0
      %1952 = vmatmul.mubr.f32.gmra.mrb[0].mxu0 %v1495
      %v1953 = vpop.f32.mrb[0].mxu0
      %v1954 = vadd.f32 0.0, %v1953
      %v1955 = vpop.f32.mrb[0].mxu0
      %1956 = vmatprep.mubr.f32.mxu0 0.0
      %1957 = vmatmul.mubr.f32.gmra.mrb[0].mxu0 %v1497
      %v1958 = vpop.f32.mrb[0].mxu0
      %v1959 = vadd.f32 0.0, %v1958
      %v1960 = vpop.f32.mrb[0].mxu0
      %1961 = vdwg.mxu0
      %v1963 = vsel %vm1081, %v1885, 0
      %v1966 = vsel %vm1081, %v1886, 0
      %1968 = vmatprep.subr.mxu0 0.0
      %1969 = vmatpush1.msra.mxu0 %v1090
      %1970 = vmatprep.subr.mxu0 0.0
      %1971 = vmatpush1.msra.mxu0 0.0
      %1972 = vmatprep.subr.mxu0 0.0
      %1973 = vmatpush1.msra.mxu0 0.0
      %1974 = vmatprep.subr.mxu0 0.0
      %1975 = vmatpush1.msra.mxu0 0.0
      %1976 = vmatprep.subr.mxu0 0.0
      %1977 = vmatpush1.msra.mxu0 0.0
      %1978 = vmatprep.subr.mxu0 0.0
      %1979 = vmatpush1.msra.mxu0 0.0
      %1980 = vmatprep.subr.mxu0 0.0
      %1981 = vmatpush1.msra.mxu0 0.0
      %1982 = vmatprep.subr.mxu0 0.0
      %1983 = vmatpush1.msra.mxu0 0.0
      %1984 = vmatprep.subr.mxu0 0.0
      %1985 = vmatpush1.msra.mxu0 0.0
      %1986 = vmatprep.subr.mxu0 0.0
      %1987 = vmatpush1.msra.mxu0 0.0
      %1988 = vmatprep.subr.mxu0 0.0
      %1989 = vmatpush1.msra.mxu0 0.0
      %1990 = vmatprep.subr.mxu0 0.0
      %1991 = vmatpush1.msra.mxu0 0.0
      %1992 = vmatprep.subr.mxu0 0.0
      %1993 = vmatpush1.msra.mxu0 0.0
      %1994 = vmatprep.subr.mxu0 0.0
      %1995 = vmatpush1.msra.mxu0 0.0
      %1996 = vmatprep.subr.mxu0 0.0
      %1997 = vmatpush1.msra.mxu0 0.0
      %1998 = vmatprep.subr.mxu0 0.0
      %1999 = vmatpush1.msra.mxu0 0.0
      %2000 = vmatprep.subr.mxu0 0.0
      %2001 = vmatpush1.msra.mxu0 0.0
      %2002 = vmatprep.subr.mxu0 0.0
      %2003 = vmatpush1.msra.mxu0 0.0
      %2004 = vmatprep.subr.mxu0 0.0
      %2005 = vmatpush1.msra.mxu0 0.0
      %2006 = vmatprep.subr.mxu0 0.0
      %2007 = vmatpush1.msra.mxu0 0.0
      %2008 = vmatprep.subr.mxu0 0.0
      %2009 = vmatpush1.msra.mxu0 0.0
      %2010 = vmatprep.subr.mxu0 0.0
      %2011 = vmatpush1.msra.mxu0 0.0
      %2012 = vmatprep.subr.mxu0 0.0
      %2013 = vmatpush1.msra.mxu0 0.0
      %2014 = vmatprep.subr.mxu0 0.0
      %2015 = vmatpush1.msra.mxu0 0.0
      %2016 = vmatprep.subr.mxu0 0.0
      %2017 = vmatpush1.msra.mxu0 0.0
      %2018 = vmatprep.subr.mxu0 0.0
      %2019 = vmatpush1.msra.mxu0 0.0
      %2020 = vmatprep.subr.mxu0 0.0
      %2021 = vmatpush1.msra.mxu0 0.0
      %2022 = vmatprep.subr.mxu0 0.0
      %2023 = vmatpush1.msra.mxu0 0.0
      %2024 = vmatprep.subr.mxu0 0.0
      %2025 = vmatpush1.msra.mxu0 0.0
      %2026 = vmatprep.subr.mxu0 0.0
      %2027 = vmatpush1.msra.mxu0 0.0
      %2028 = vmatprep.subr.mxu0 0.0
      %2029 = vmatpush1.msra.mxu0 0.0
      %2030 = vmatprep.subr.mxu0 0.0
      %2031 = vmatpush1.msra.mxu0 0.0
      %2032 = vmatprep.mubr.f32.mxu0 0.0
      %2033 = vmatmul.mubr.f32.gmra.mrb[0].mxu0 %v1963
      %v2034 = vpop.f32.mrb[0].mxu0
      %v2035 = vadd.f32 %v1954, %v2034
      %v2036 = vpop.f32.mrb[0].mxu0
      %2037 = vmatprep.mubr.f32.mxu0 0.0
      %2038 = vmatmul.mubr.f32.gmra.mrb[0].mxu0 %v1966
      %v2039 = vpop.f32.mrb[0].mxu0
      %v2040 = vadd.f32 %v1959, %v2039
      %v2041 = vpop.f32.mrb[0].mxu0
      %2042 = vdwg.mxu0
      %2043 = vmatprep.subr.mxu0 0.0
      %2044 = vmatpush1.msra.mxu0 %v2035
      %2045 = vmatprep.subr.mxu0 0.0
      %2046 = vmatpush1.msra.mxu0 %v2040
      %2047 = vmatprep.subr.mxu0 0.0
      %2048 = vmatpush1.msra.mxu0 0.0
      %2049 = vmatprep.subr.mxu0 0.0
      %2050 = vmatpush1.msra.mxu0 0.0
      %2051 = vmatprep.subr.mxu0 0.0
      %2052 = vmatpush1.msra.mxu0 0.0
      %2053 = vmatprep.subr.mxu0 0.0
      %2054 = vmatpush1.msra.mxu0 0.0
      %2055 = vmatprep.subr.mxu0 0.0
      %2056 = vmatpush1.msra.mxu0 0.0
      %2057 = vmatprep.subr.mxu0 0.0
      %2058 = vmatpush1.msra.mxu0 0.0
      %2059 = vmatprep.subr.mxu0 0.0
      %2060 = vmatpush1.msra.mxu0 0.0
      %2061 = vmatprep.subr.mxu0 0.0
      %2062 = vmatpush1.msra.mxu0 0.0
      %2063 = vmatprep.subr.mxu0 0.0
      %2064 = vmatpush1.msra.mxu0 0.0
      %2065 = vmatprep.subr.mxu0 0.0
      %2066 = vmatpush1.msra.mxu0 0.0
      %2067 = vmatprep.subr.mxu0 0.0
      %2068 = vmatpush1.msra.mxu0 0.0
      %2069 = vmatprep.subr.mxu0 0.0
      %2070 = vmatpush1.msra.mxu0 0.0
      %2071 = vmatprep.subr.mxu0 0.0
      %2072 = vmatpush1.msra.mxu0 0.0
      %2073 = vmatprep.subr.mxu0 0.0
      %2074 = vmatpush1.msra.mxu0 0.0
      %2075 = vmatprep.subr.mxu0 0.0
      %2076 = vmatpush1.msra.mxu0 0.0
      %2077 = vmatprep.subr.mxu0 0.0
      %2078 = vmatpush1.msra.mxu0 0.0
      %2079 = vmatprep.subr.mxu0 0.0
      %2080 = vmatpush1.msra.mxu0 0.0
      %2081 = vmatprep.subr.mxu0 0.0
      %2082 = vmatpush1.msra.mxu0 0.0
      %2083 = vmatprep.subr.mxu0 0.0
      %2084 = vmatpush1.msra.mxu0 0.0
      %2085 = vmatprep.subr.mxu0 0.0
      %2086 = vmatpush1.msra.mxu0 0.0
      %2087 = vmatprep.subr.mxu0 0.0
      %2088 = vmatpush1.msra.mxu0 0.0
      %2089 = vmatprep.subr.mxu0 0.0
      %2090 = vmatpush1.msra.mxu0 0.0
      %2091 = vmatprep.subr.mxu0 0.0
      %2092 = vmatpush1.msra.mxu0 0.0
      %2093 = vmatprep.subr.mxu0 0.0
      %2094 = vmatpush1.msra.mxu0 0.0
      %2095 = vmatprep.subr.mxu0 0.0
      %2096 = vmatpush1.msra.mxu0 0.0
      %2097 = vmatprep.subr.mxu0 0.0
      %2098 = vmatpush1.msra.mxu0 0.0
      %2099 = vmatprep.subr.mxu0 0.0
      %2100 = vmatpush1.msra.mxu0 0.0
      %2101 = vmatprep.subr.mxu0 0.0
      %2102 = vmatpush1.msra.mxu0 0.0
      %2103 = vmatprep.subr.mxu0 0.0
      %2104 = vmatpush1.msra.mxu0 0.0
      %2105 = vmatprep.subr.mxu0 0.0
      %2106 = vmatpush1.msra.mxu0 0.0
      %2107 = vmatprep.mubr.f32.mxu0 0.0
      %2108 = vmatmul.mubr.f32.gmra.mrb[0].mxu0 %v1168
      %v2109 = vpop.f32.mrb[0].mxu0
      %v2110 = vadd.f32 %v571, %v2109
      %v2111 = vpop.f32.mrb[0].mxu0
      %2112 = vmatprep.mubr.f32.mxu0 0.0
      %2113 = vmatmul.mubr.f32.gmra.mrb[0].mxu0 %v1171
      %v2114 = vpop.f32.mrb[0].mxu0
      %v2115 = vadd.f32 %v572, %v2114
      %v2116 = vpop.f32.mrb[0].mxu0
      %2117 = vmatprep.mubr.f32.mxu0 0.0
      %2118 = vmatmul.mubr.f32.gmra.mrb[0].mxu0 %v1174
      %v2119 = vpop.f32.mrb[0].mxu0
      %v2120 = vadd.f32 %v573, %v2119
      %v2121 = vpop.f32.mrb[0].mxu0
      %2122 = vmatprep.mubr.f32.mxu0 0.0
      %2123 = vmatmul.mubr.f32.gmra.mrb[0].mxu0 %v1177
      %v2124 = vpop.f32.mrb[0].mxu0
      %v2125 = vadd.f32 %v574, %v2124
      %v2126 = vpop.f32.mrb[0].mxu0
      %2127 = vdwg.mxu0
      %v2128 = vxor.u32 %v2110, 2147483648
      %v2129 = vxor.u32 %v2115, 2147483648
      %v2130 = vxor.u32 %v2120, 2147483648
      %v2131 = vxor.u32 %v2125, 2147483648
      %v2132 = vmul.f32 %v2128, 1.442695
      %v2133 = vpow.pop %v2132
      %v2134 = vmul.f32 %v2129, 1.442695
      %v2135 = vpow.pop %v2134
      %v2136 = vmul.f32 %v2130, 1.442695
      %v2137 = vpow.pop %v2136
      %v2138 = vmul.f32 %v2131, 1.442695
      %v2139 = vpow.pop %v2138
      %v2140 = vadd.f32 %v2133, 1.0
      %v2141 = vadd.f32 %v2135, 1.0
      %v2142 = vadd.f32 %v2137, 1.0
      %v2143 = vadd.f32 %v2139, 1.0
      %v2144 = vrcp.pop %v2140
      %v2145 = vmul.f32 1.0, %v2144
      %v2146 = vrcp.pop %v2141
      %v2147 = vmul.f32 1.0, %v2146
      %v2148 = vrcp.pop %v2142
      %v2149 = vmul.f32 1.0, %v2148
      %v2150 = vrcp.pop %v2143
      %v2151 = vmul.f32 1.0, %v2150
      %v2154 = vmul.f32 %v2145, %v1492
      %v2155 = vmul.f32 %v2147, %v1494
      %v2157 = vsel %vm590, %v2154, 0
      %v2160 = vsel %vm590, %v2155, 0
      %2162 = vmatprep.subr.mxu0 0.0
      %2163 = vmatpush1.msra.mxu0 %v1297
      %2164 = vmatprep.subr.mxu0 0.0
      %2165 = vmatpush1.msra.mxu0 0.0
      %2166 = vmatprep.subr.mxu0 0.0
      %2167 = vmatpush1.msra.mxu0 0.0
      %2168 = vmatprep.subr.mxu0 0.0
      %2169 = vmatpush1.msra.mxu0 0.0
      %2170 = vmatprep.subr.mxu0 0.0
      %2171 = vmatpush1.msra.mxu0 0.0
      %2172 = vmatprep.subr.mxu0 0.0
      %2173 = vmatpush1.msra.mxu0 0.0
      %2174 = vmatprep.subr.mxu0 0.0
      %2175 = vmatpush1.msra.mxu0 0.0
      %2176 = vmatprep.subr.mxu0 0.0
      %2177 = vmatpush1.msra.mxu0 0.0
      %2178 = vmatprep.subr.mxu0 0.0
      %2179 = vmatpush1.msra.mxu0 0.0
      %2180 = vmatprep.subr.mxu0 0.0
      %2181 = vmatpush1.msra.mxu0 0.0
      %2182 = vmatprep.subr.mxu0 0.0
      %2183 = vmatpush1.msra.mxu0 0.0
      %2184 = vmatprep.subr.mxu0 0.0
      %2185 = vmatpush1.msra.mxu0 0.0
      %2186 = vmatprep.subr.mxu0 0.0
      %2187 = vmatpush1.msra.mxu0 0.0
      %2188 = vmatprep.subr.mxu0 0.0
      %2189 = vmatpush1.msra.mxu0 0.0
      %2190 = vmatprep.subr.mxu0 0.0
      %2191 = vmatpush1.msra.mxu0 0.0
      %2192 = vmatprep.subr.mxu0 0.0
      %2193 = vmatpush1.msra.mxu0 0.0
      %2194 = vmatprep.subr.mxu0 0.0
      %2195 = vmatpush1.msra.mxu0 0.0
      %2196 = vmatprep.subr.mxu0 0.0
      %2197 = vmatpush1.msra.mxu0 0.0
      %2198 = vmatprep.subr.mxu0 0.0
      %2199 = vmatpush1.msra.mxu0 0.0
      %2200 = vmatprep.subr.mxu0 0.0
      %2201 = vmatpush1.msra.mxu0 0.0
      %2202 = vmatprep.subr.mxu0 0.0
      %2203 = vmatpush1.msra.mxu0 0.0
      %2204 = vmatprep.subr.mxu0 0.0
      %2205 = vmatpush1.msra.mxu0 0.0
      %2206 = vmatprep.subr.mxu0 0.0
      %2207 = vmatpush1.msra.mxu0 0.0
      %2208 = vmatprep.subr.mxu0 0.0
      %2209 = vmatpush1.msra.mxu0 0.0
      %2210 = vmatprep.subr.mxu0 0.0
      %2211 = vmatpush1.msra.mxu0 0.0
      %2212 = vmatprep.subr.mxu0 0.0
      %2213 = vmatpush1.msra.mxu0 0.0
      %2214 = vmatprep.subr.mxu0 0.0
      %2215 = vmatpush1.msra.mxu0 0.0
      %2216 = vmatprep.subr.mxu0 0.0
      %2217 = vmatpush1.msra.mxu0 0.0
      %2218 = vmatprep.subr.mxu0 0.0
      %2219 = vmatpush1.msra.mxu0 0.0
      %2220 = vmatprep.subr.mxu0 0.0
      %2221 = vmatpush1.msra.mxu0 0.0
      %2222 = vmatprep.subr.mxu0 0.0
      %2223 = vmatpush1.msra.mxu0 0.0
      %2224 = vmatprep.subr.mxu0 0.0
      %2225 = vmatpush1.msra.mxu0 0.0
      %2226 = vmatprep.mubr.f32.mxu0 0.0
      %2227 = vmatmul.mubr.f32.gmra.mrb[0].mxu0 %v2157
      %v2228 = vpop.f32.mrb[0].mxu0
      %v2229 = vadd.f32 0.0, %v2228
      %v2230 = vpop.f32.mrb[0].mxu0
      %2231 = vmatprep.mubr.f32.mxu0 0.0
      %2232 = vmatmul.mubr.f32.gmra.mrb[0].mxu0 %v2160
      %v2233 = vpop.f32.mrb[0].mxu0
      %v2234 = vadd.f32 0.0, %v2233
      %v2235 = vpop.f32.mrb[0].mxu0
      %2236 = vdwg.mxu0
      %v2237 = vadd.f32 %v1487, %v2229
      %v2238 = vadd.f32 %v1488, %v2234
      %2239 = vmatprep.subr.mxu0 0.0
      %2240 = vmatpush1.msra.mxu0 %v2237
      %2241 = vmatprep.subr.mxu0 0.0
      %2242 = vmatpush1.msra.mxu0 %v2238
      %2243 = vmatprep.subr.mxu0 0.0
      %2244 = vmatpush1.msra.mxu0 0.0
      %2245 = vmatprep.subr.mxu0 0.0
      %2246 = vmatpush1.msra.mxu0 0.0
      %2247 = vmatprep.subr.mxu0 0.0
      %2248 = vmatpush1.msra.mxu0 0.0
      %2249 = vmatprep.subr.mxu0 0.0
      %2250 = vmatpush1.msra.mxu0 0.0
      %2251 = vmatprep.subr.mxu0 0.0
      %2252 = vmatpush1.msra.mxu0 0.0
      %2253 = vmatprep.subr.mxu0 0.0
      %2254 = vmatpush1.msra.mxu0 0.0
      %2255 = vmatprep.subr.mxu0 0.0
      %2256 = vmatpush1.msra.mxu0 0.0
      %2257 = vmatprep.subr.mxu0 0.0
      %2258 = vmatpush1.msra.mxu0 0.0
      %2259 = vmatprep.subr.mxu0 0.0
      %2260 = vmatpush1.msra.mxu0 0.0
      %2261 = vmatprep.subr.mxu0 0.0
      %2262 = vmatpush1.msra.mxu0 0.0
      %2263 = vmatprep.subr.mxu0 0.0
      %2264 = vmatpush1.msra.mxu0 0.0
      %2265 = vmatprep.subr.mxu0 0.0
      %2266 = vmatpush1.msra.mxu0 0.0
      %2267 = vmatprep.subr.mxu0 0.0
      %2268 = vmatpush1.msra.mxu0 0.0
      %2269 = vmatprep.subr.mxu0 0.0
      %2270 = vmatpush1.msra.mxu0 0.0
      %2271 = vmatprep.subr.mxu0 0.0
      %2272 = vmatpush1.msra.mxu0 0.0
      %2273 = vmatprep.subr.mxu0 0.0
      %2274 = vmatpush1.msra.mxu0 0.0
      %2275 = vmatprep.subr.mxu0 0.0
      %2276 = vmatpush1.msra.mxu0 0.0
      %2277 = vmatprep.subr.mxu0 0.0
      %2278 = vmatpush1.msra.mxu0 0.0
      %2279 = vmatprep.subr.mxu0 0.0
      %2280 = vmatpush1.msra.mxu0 0.0
      %2281 = vmatprep.subr.mxu0 0.0
      %2282 = vmatpush1.msra.mxu0 0.0
      %2283 = vmatprep.subr.mxu0 0.0
      %2284 = vmatpush1.msra.mxu0 0.0
      %2285 = vmatprep.subr.mxu0 0.0
      %2286 = vmatpush1.msra.mxu0 0.0
      %2287 = vmatprep.subr.mxu0 0.0
      %2288 = vmatpush1.msra.mxu0 0.0
      %2289 = vmatprep.subr.mxu0 0.0
      %2290 = vmatpush1.msra.mxu0 0.0
      %2291 = vmatprep.subr.mxu0 0.0
      %2292 = vmatpush1.msra.mxu0 0.0
      %2293 = vmatprep.subr.mxu0 0.0
      %2294 = vmatpush1.msra.mxu0 0.0
      %2295 = vmatprep.subr.mxu0 0.0
      %2296 = vmatpush1.msra.mxu0 0.0
      %2297 = vmatprep.subr.mxu0 0.0
      %2298 = vmatpush1.msra.mxu0 0.0
      %2299 = vmatprep.subr.mxu0 0.0
      %2300 = vmatpush1.msra.mxu0 0.0
      %2301 = vmatprep.subr.mxu0 0.0
      %2302 = vmatpush1.msra.mxu0 0.0
      %2303 = vmatprep.mubr.f32.mxu0 0.0
      %2304 = vmatmul.mubr.f32.gmra.mrb[0].mxu0 %v1377
      %v2305 = vpop.f32.mrb[0].mxu0
      %v2306 = vadd.f32 %v578, %v2305
      %v2307 = vpop.f32.mrb[0].mxu0
      %2308 = vmatprep.mubr.f32.mxu0 0.0
      %2309 = vmatmul.mubr.f32.gmra.mrb[0].mxu0 %v1380
      %v2310 = vpop.f32.mrb[0].mxu0
      %v2311 = vadd.f32 %v579, %v2310
      %v2312 = vpop.f32.mrb[0].mxu0
      %2313 = vdwg.mxu0
      %v2314 = vtanh.pop %v2306
      %v2315 = vtanh.pop %v2311
      %v2316 = vmul.f32 %v2149, %v1473
      %v2317 = vmul.f32 %v2151, %v1474
      %v2318 = vsub.f32 1.0, %v2149
      %v2319 = vsub.f32 1.0, %v2151
      %2322 = vrot.lane.b32.xlu0 %v2314, 4
      %v2323 = vpop.permute.xlu0 %2322
      %2324 = vrot.lane.b32.xlu0 %v2315, 4
      %v2325 = vpop.permute.xlu0 %2324
      %v2328 = vmul.f32 %v2318, %v2323
      %v2329 = vmul.f32 %v2319, %v2325
      %v2330 = vadd.f32 %v2316, %v2328
      %v2331 = vadd.f32 %v2317, %v2329
      %s2332 = scalar_lea.vmem %s534, 64
      %v2333 = vld [vmem:[%s2332] sm:$0xff]
      %v2334 = vld [vmem:[%s2332 + $0x8] sm:$0xff]
      %v2335 = vld [vmem:[%s2332 + $0x10] sm:$0xff]
      %v2336 = vld [vmem:[%s2332 + $0x18] sm:$0xff]
      %s2337 = scalar_lea.vmem %s539, 32
      %v2338 = vld [vmem:[%s2337] sm:$0xff]
      %v2339 = vld [vmem:[%s2337 + $0x8] sm:$0xff]
      %s2340 = scalar_lea.vmem %s544, 32
      %v2341 = vld [vmem:[%s2340] sm:$0xff]
      %v2342 = vld [vmem:[%s2340 + $0x8] sm:$0xff]
      %s2343 = scalar_lea.vmem %s549, 32
      %v2344 = vld [vmem:[%s2343] sm:$0xff]
      %v2345 = vld [vmem:[%s2343 + $0x8] sm:$0xff]
      %2348 = vrot.lane.b32.xlu0 %v2330, 124
      %v2349 = vpop.permute.xlu0 %2348
      %2350 = vrot.lane.b32.xlu0 %v2331, 124
      %v2351 = vpop.permute.xlu0 %2350
      %v2352 = vsel %vm590, %v2349, 0
      %v2354 = vsel %vm590, %v2351, 0
      %2356 = vmatprep.subr.mxu0 0.0
      %2357 = vmatpush1.msra.mxu0 %v596
      %2358 = vmatprep.subr.mxu0 0.0
      %2359 = vmatpush1.msra.mxu0 0.0
      %2360 = vmatprep.subr.mxu0 0.0
      %2361 = vmatpush1.msra.mxu0 0.0
      %2362 = vmatprep.subr.mxu0 0.0
      %2363 = vmatpush1.msra.mxu0 0.0
      %2364 = vmatprep.subr.mxu0 0.0
      %2365 = vmatpush1.msra.mxu0 0.0
      %2366 = vmatprep.subr.mxu0 0.0
      %2367 = vmatpush1.msra.mxu0 0.0
      %2368 = vmatprep.subr.mxu0 0.0
      %2369 = vmatpush1.msra.mxu0 0.0
      %2370 = vmatprep.subr.mxu0 0.0
      %2371 = vmatpush1.msra.mxu0 0.0
      %2372 = vmatprep.subr.mxu0 0.0
      %2373 = vmatpush1.msra.mxu0 0.0
      %2374 = vmatprep.subr.mxu0 0.0
      %2375 = vmatpush1.msra.mxu0 0.0
      %2376 = vmatprep.subr.mxu0 0.0
      %2377 = vmatpush1.msra.mxu0 0.0
      %2378 = vmatprep.subr.mxu0 0.0
      %2379 = vmatpush1.msra.mxu0 0.0
      %2380 = vmatprep.subr.mxu0 0.0
      %2381 = vmatpush1.msra.mxu0 0.0
      %2382 = vmatprep.subr.mxu0 0.0
      %2383 = vmatpush1.msra.mxu0 0.0
      %2384 = vmatprep.subr.mxu0 0.0
      %2385 = vmatpush1.msra.mxu0 0.0
      %2386 = vmatprep.subr.mxu0 0.0
      %2387 = vmatpush1.msra.mxu0 0.0
      %2388 = vmatprep.subr.mxu0 0.0
      %2389 = vmatpush1.msra.mxu0 0.0
      %2390 = vmatprep.subr.mxu0 0.0
      %2391 = vmatpush1.msra.mxu0 0.0
      %2392 = vmatprep.subr.mxu0 0.0
      %2393 = vmatpush1.msra.mxu0 0.0
      %2394 = vmatprep.subr.mxu0 0.0
      %2395 = vmatpush1.msra.mxu0 0.0
      %2396 = vmatprep.subr.mxu0 0.0
      %2397 = vmatpush1.msra.mxu0 0.0
      %2398 = vmatprep.subr.mxu0 0.0
      %2399 = vmatpush1.msra.mxu0 0.0
      %2400 = vmatprep.subr.mxu0 0.0
      %2401 = vmatpush1.msra.mxu0 0.0
      %2402 = vmatprep.subr.mxu0 0.0
      %2403 = vmatpush1.msra.mxu0 0.0
      %2404 = vmatprep.subr.mxu0 0.0
      %2405 = vmatpush1.msra.mxu0 0.0
      %2406 = vmatprep.subr.mxu0 0.0
      %2407 = vmatpush1.msra.mxu0 0.0
      %2408 = vmatprep.subr.mxu0 0.0
      %2409 = vmatpush1.msra.mxu0 0.0
      %2410 = vmatprep.subr.mxu0 0.0
      %2411 = vmatpush1.msra.mxu0 0.0
      %2412 = vmatprep.subr.mxu0 0.0
      %2413 = vmatpush1.msra.mxu0 0.0
      %2414 = vmatprep.subr.mxu0 0.0
      %2415 = vmatpush1.msra.mxu0 0.0
      %2416 = vmatprep.subr.mxu0 0.0
      %2417 = vmatpush1.msra.mxu0 0.0
      %2418 = vmatprep.subr.mxu0 0.0
      %2419 = vmatpush1.msra.mxu0 0.0
      %2420 = vmatprep.mubr.f32.mxu0 0.0
      %2421 = vmatmul.mubr.f32.gmra.mrb[0].mxu0 %v2352
      %v2422 = vpop.f32.mrb[0].mxu0
      %v2423 = vadd.f32 0.0, %v2422
      %v2424 = vpop.f32.mrb[0].mxu0
      %2425 = vmatprep.mubr.f32.mxu0 0.0
      %2426 = vmatmul.mubr.f32.gmra.mrb[0].mxu0 %v2354
      %v2427 = vpop.f32.mrb[0].mxu0
      %v2428 = vadd.f32 0.0, %v2427
      %v2429 = vpop.f32.mrb[0].mxu0
      %2430 = vdwg.mxu0
      %v2431 = vadd.f32 %v2341, %v2423
      %v2432 = vadd.f32 %v2342, %v2428
      %v2433 = vtanh.pop %v2431
      %v2434 = vtanh.pop %v2432
      %v2435 = vmul.f32 %v2433, 0.5
      %v2436 = vmul.f32 %v2434, 0.5
      %2437 = vmatprep.subr.mxu0 0.0
      %2438 = vmatpush1.msra.mxu0 %v680
      %2439 = vmatprep.subr.mxu0 0.0
      %2440 = vmatpush1.msra.mxu0 0.0
      %2441 = vmatprep.subr.mxu0 0.0
      %2442 = vmatpush1.msra.mxu0 0.0
      %2443 = vmatprep.subr.mxu0 0.0
      %2444 = vmatpush1.msra.mxu0 0.0
      %2445 = vmatprep.subr.mxu0 0.0
      %2446 = vmatpush1.msra.mxu0 0.0
      %2447 = vmatprep.subr.mxu0 0.0
      %2448 = vmatpush1.msra.mxu0 0.0
      %2449 = vmatprep.subr.mxu0 0.0
      %2450 = vmatpush1.msra.mxu0 0.0
      %2451 = vmatprep.subr.mxu0 0.0
      %2452 = vmatpush1.msra.mxu0 0.0
      %2453 = vmatprep.subr.mxu0 0.0
      %2454 = vmatpush1.msra.mxu0 0.0
      %2455 = vmatprep.subr.mxu0 0.0
      %2456 = vmatpush1.msra.mxu0 0.0
      %2457 = vmatprep.subr.mxu0 0.0
      %2458 = vmatpush1.msra.mxu0 0.0
      %2459 = vmatprep.subr.mxu0 0.0
      %2460 = vmatpush1.msra.mxu0 0.0
      %2461 = vmatprep.subr.mxu0 0.0
      %2462 = vmatpush1.msra.mxu0 0.0
      %2463 = vmatprep.subr.mxu0 0.0
      %2464 = vmatpush1.msra.mxu0 0.0
      %2465 = vmatprep.subr.mxu0 0.0
      %2466 = vmatpush1.msra.mxu0 0.0
      %2467 = vmatprep.subr.mxu0 0.0
      %2468 = vmatpush1.msra.mxu0 0.0
      %2469 = vmatprep.subr.mxu0 0.0
      %2470 = vmatpush1.msra.mxu0 0.0
      %2471 = vmatprep.subr.mxu0 0.0
      %2472 = vmatpush1.msra.mxu0 0.0
      %2473 = vmatprep.subr.mxu0 0.0
      %2474 = vmatpush1.msra.mxu0 0.0
      %2475 = vmatprep.subr.mxu0 0.0
      %2476 = vmatpush1.msra.mxu0 0.0
      %2477 = vmatprep.subr.mxu0 0.0
      %2478 = vmatpush1.msra.mxu0 0.0
      %2479 = vmatprep.subr.mxu0 0.0
      %2480 = vmatpush1.msra.mxu0 0.0
      %2481 = vmatprep.subr.mxu0 0.0
      %2482 = vmatpush1.msra.mxu0 0.0
      %2483 = vmatprep.subr.mxu0 0.0
      %2484 = vmatpush1.msra.mxu0 0.0
      %2485 = vmatprep.subr.mxu0 0.0
      %2486 = vmatpush1.msra.mxu0 0.0
      %2487 = vmatprep.subr.mxu0 0.0
      %2488 = vmatpush1.msra.mxu0 0.0
      %2489 = vmatprep.subr.mxu0 0.0
      %2490 = vmatpush1.msra.mxu0 0.0
      %2491 = vmatprep.subr.mxu0 0.0
      %2492 = vmatpush1.msra.mxu0 0.0
      %2493 = vmatprep.subr.mxu0 0.0
      %2494 = vmatpush1.msra.mxu0 0.0
      %2495 = vmatprep.subr.mxu0 0.0
      %2496 = vmatpush1.msra.mxu0 0.0
      %2497 = vmatprep.subr.mxu0 0.0
      %2498 = vmatpush1.msra.mxu0 0.0
      %2499 = vmatprep.subr.mxu0 0.0
      %2500 = vmatpush1.msra.mxu0 0.0
      %2501 = vmatprep.mubr.f32.mxu0 0.0
      %2502 = vmatmul.mubr.f32.gmra.mrb[0].mxu0 %v2352
      %v2503 = vpop.f32.mrb[0].mxu0
      %v2504 = vadd.f32 0.0, %v2503
      %v2505 = vpop.f32.mrb[0].mxu0
      %2506 = vmatprep.mubr.f32.mxu0 0.0
      %2507 = vmatmul.mubr.f32.gmra.mrb[0].mxu0 %v2354
      %v2508 = vpop.f32.mrb[0].mxu0
      %v2509 = vadd.f32 0.0, %v2508
      %v2510 = vpop.f32.mrb[0].mxu0
      %2511 = vdwg.mxu0
      %v2512 = vadd.f32 %v2338, %v2504
      %v2513 = vadd.f32 %v2339, %v2509
      %2514 = vmatprep.subr.mxu0 0.0
      %2515 = vmatpush1.msra.mxu0 %v2512
      %2516 = vmatprep.subr.mxu0 0.0
      %2517 = vmatpush1.msra.mxu0 %v2513
      %2518 = vmatprep.subr.mxu0 0.0
      %2519 = vmatpush1.msra.mxu0 0.0
      %2520 = vmatprep.subr.mxu0 0.0
      %2521 = vmatpush1.msra.mxu0 0.0
      %2522 = vmatprep.subr.mxu0 0.0
      %2523 = vmatpush1.msra.mxu0 0.0
      %2524 = vmatprep.subr.mxu0 0.0
      %2525 = vmatpush1.msra.mxu0 0.0
      %2526 = vmatprep.subr.mxu0 0.0
      %2527 = vmatpush1.msra.mxu0 0.0
      %2528 = vmatprep.subr.mxu0 0.0
      %2529 = vmatpush1.msra.mxu0 0.0
      %2530 = vmatprep.subr.mxu0 0.0
      %2531 = vmatpush1.msra.mxu0 0.0
      %2532 = vmatprep.subr.mxu0 0.0
      %2533 = vmatpush1.msra.mxu0 0.0
      %2534 = vmatprep.subr.mxu0 0.0
      %2535 = vmatpush1.msra.mxu0 0.0
      %2536 = vmatprep.subr.mxu0 0.0
      %2537 = vmatpush1.msra.mxu0 0.0
      %2538 = vmatprep.subr.mxu0 0.0
      %2539 = vmatpush1.msra.mxu0 0.0
      %2540 = vmatprep.subr.mxu0 0.0
      %2541 = vmatpush1.msra.mxu0 0.0
      %2542 = vmatprep.subr.mxu0 0.0
      %2543 = vmatpush1.msra.mxu0 0.0
      %2544 = vmatprep.subr.mxu0 0.0
      %2545 = vmatpush1.msra.mxu0 0.0
      %2546 = vmatprep.subr.mxu0 0.0
      %2547 = vmatpush1.msra.mxu0 0.0
      %2548 = vmatprep.subr.mxu0 0.0
      %2549 = vmatpush1.msra.mxu0 0.0
      %2550 = vmatprep.subr.mxu0 0.0
      %2551 = vmatpush1.msra.mxu0 0.0
      %2552 = vmatprep.subr.mxu0 0.0
      %2553 = vmatpush1.msra.mxu0 0.0
      %2554 = vmatprep.subr.mxu0 0.0
      %2555 = vmatpush1.msra.mxu0 0.0
      %2556 = vmatprep.subr.mxu0 0.0
      %2557 = vmatpush1.msra.mxu0 0.0
      %2558 = vmatprep.subr.mxu0 0.0
      %2559 = vmatpush1.msra.mxu0 0.0
      %2560 = vmatprep.subr.mxu0 0.0
      %2561 = vmatpush1.msra.mxu0 0.0
      %2562 = vmatprep.subr.mxu0 0.0
      %2563 = vmatpush1.msra.mxu0 0.0
      %2564 = vmatprep.subr.mxu0 0.0
      %2565 = vmatpush1.msra.mxu0 0.0
      %2566 = vmatprep.subr.mxu0 0.0
      %2567 = vmatpush1.msra.mxu0 0.0
      %2568 = vmatprep.subr.mxu0 0.0
      %2569 = vmatpush1.msra.mxu0 0.0
      %2570 = vmatprep.subr.mxu0 0.0
      %2571 = vmatpush1.msra.mxu0 0.0
      %2572 = vmatprep.subr.mxu0 0.0
      %2573 = vmatpush1.msra.mxu0 0.0
      %2574 = vmatprep.subr.mxu0 0.0
      %2575 = vmatpush1.msra.mxu0 0.0
      %2576 = vmatprep.subr.mxu0 0.0
      %2577 = vmatpush1.msra.mxu0 0.0
      %2578 = vmatprep.mubr.f32.mxu0 0.0
      %2579 = vmatmul.mubr.f32.gmra.mrb[0].mxu0 %v761
      %v2580 = vpop.f32.mrb[0].mxu0
      %v2581 = vadd.f32 %v561, %v2580
      %v2582 = vpop.f32.mrb[0].mxu0
      %2583 = vmatprep.mubr.f32.mxu0 0.0
      %2584 = vmatmul.mubr.f32.gmra.mrb[0].mxu0 %v764
      %v2585 = vpop.f32.mrb[0].mxu0
      %v2586 = vadd.f32 %v562, %v2585
      %v2587 = vpop.f32.mrb[0].mxu0
      %2588 = vmatprep.mubr.f32.mxu0 0.0
      %2589 = vmatmul.mubr.f32.gmra.mrb[0].mxu0 %v767
      %v2590 = vpop.f32.mrb[0].mxu0
      %v2591 = vadd.f32 %v563, %v2590
      %v2592 = vpop.f32.mrb[0].mxu0
      %2593 = vmatprep.mubr.f32.mxu0 0.0
      %2594 = vmatmul.mubr.f32.gmra.mrb[0].mxu0 %v770
      %v2595 = vpop.f32.mrb[0].mxu0
      %v2596 = vadd.f32 %v564, %v2595
      %v2597 = vpop.f32.mrb[0].mxu0
      %2598 = vdwg.mxu0
      %v2599 = vsel %vm857, %v2581, -inf
      %2600 = vmax.xlane.f32.xlu0 %v2599
      %v2601 = vpop.xlane.xlu0 %2600
      %v2602 = vsel %vm857, %v2586, -inf
      %2603 = vmax.xlane.f32.xlu0 %v2602
      %v2604 = vpop.xlane.xlu0 %2603
      %v2605 = vsel %vm857, %v2591, -inf
      %2606 = vmax.xlane.f32.xlu0 %v2605
      %v2607 = vpop.xlane.xlu0 %2606
      %v2608 = vsel %vm857, %v2596, -inf
      %2609 = vmax.xlane.f32.xlu0 %v2608
      %v2610 = vpop.xlane.xlu0 %2609
      %v2611 = vsub.f32 %v2581, %v2601
      %v2612 = vsub.f32 %v2586, %v2604
      %v2613 = vsub.f32 %v2591, %v2607
      %v2614 = vsub.f32 %v2596, %v2610
      %v2615 = vmul.f32 %v2611, 1.442695
      %v2616 = vpow.pop %v2615
      %v2617 = vmul.f32 %v2612, 1.442695
      %v2618 = vpow.pop %v2617
      %v2619 = vmul.f32 %v2613, 1.442695
      %v2620 = vpow.pop %v2619
      %v2621 = vmul.f32 %v2614, 1.442695
      %v2622 = vpow.pop %v2621
      %v2623 = vsel %vm857, %v2616, 0.0
      %2624 = vadd.xlane.f32.xlu0 %v2623
      %v2625 = vpop.xlane.xlu0 %2624
      %v2626 = vsel %vm857, %v2618, 0.0
      %2627 = vadd.xlane.f32.xlu0 %v2626
      %v2628 = vpop.xlane.xlu0 %2627
      %v2629 = vsel %vm857, %v2620, 0.0
      %2630 = vadd.xlane.f32.xlu0 %v2629
      %v2631 = vpop.xlane.xlu0 %2630
      %v2632 = vsel %vm857, %v2622, 0.0
      %2633 = vadd.xlane.f32.xlu0 %v2632
      %v2634 = vpop.xlane.xlu0 %2633
      %v2635 = vrcp.pop %v2625
      %v2636 = vmul.f32 %v2616, %v2635
      %v2637 = vrcp.pop %v2628
      %v2638 = vmul.f32 %v2618, %v2637
      %v2639 = vrcp.pop %v2631
      %v2640 = vmul.f32 %v2620, %v2639
      %v2641 = vrcp.pop %v2634
      %v2642 = vmul.f32 %v2622, %v2641
      %v2644 = vsel %vm857, %v2636, 0
      %v2647 = vsel %vm857, %v2638, 0
      %v2650 = vsel %vm857, %v2640, 0
      %v2653 = vsel %vm857, %v2642, 0
      %2655 = vmatprep.subr.mxu0 0.0
      %2656 = vmatpush1.msra.mxu0 %v2333
      %2657 = vmatprep.subr.mxu0 0.0
      %2658 = vmatpush1.msra.mxu0 %v2334
      %2659 = vmatprep.subr.mxu0 0.0
      %2660 = vmatpush1.msra.mxu0 %v2335
      %2661 = vmatprep.subr.mxu0 0.0
      %2662 = vmatpush1.msra.mxu0 %v2336
      %2663 = vmatprep.subr.mxu0 0.0
      %2664 = vmatpush1.msra.mxu0 0.0
      %2665 = vmatprep.subr.mxu0 0.0
      %2666 = vmatpush1.msra.mxu0 0.0
      %2667 = vmatprep.subr.mxu0 0.0
      %2668 = vmatpush1.msra.mxu0 0.0
      %2669 = vmatprep.subr.mxu0 0.0
      %2670 = vmatpush1.msra.mxu0 0.0
      %2671 = vmatprep.subr.mxu0 0.0
      %2672 = vmatpush1.msra.mxu0 0.0
      %2673 = vmatprep.subr.mxu0 0.0
      %2674 = vmatpush1.msra.mxu0 0.0
      %2675 = vmatprep.subr.mxu0 0.0
      %2676 = vmatpush1.msra.mxu0 0.0
      %2677 = vmatprep.subr.mxu0 0.0
      %2678 = vmatpush1.msra.mxu0 0.0
      %2679 = vmatprep.subr.mxu0 0.0
      %2680 = vmatpush1.msra.mxu0 0.0
      %2681 = vmatprep.subr.mxu0 0.0
      %2682 = vmatpush1.msra.mxu0 0.0
      %2683 = vmatprep.subr.mxu0 0.0
      %2684 = vmatpush1.msra.mxu0 0.0
      %2685 = vmatprep.subr.mxu0 0.0
      %2686 = vmatpush1.msra.mxu0 0.0
      %2687 = vmatprep.subr.mxu0 0.0
      %2688 = vmatpush1.msra.mxu0 0.0
      %2689 = vmatprep.subr.mxu0 0.0
      %2690 = vmatpush1.msra.mxu0 0.0
      %2691 = vmatprep.subr.mxu0 0.0
      %2692 = vmatpush1.msra.mxu0 0.0
      %2693 = vmatprep.subr.mxu0 0.0
      %2694 = vmatpush1.msra.mxu0 0.0
      %2695 = vmatprep.subr.mxu0 0.0
      %2696 = vmatpush1.msra.mxu0 0.0
      %2697 = vmatprep.subr.mxu0 0.0
      %2698 = vmatpush1.msra.mxu0 0.0
      %2699 = vmatprep.subr.mxu0 0.0
      %2700 = vmatpush1.msra.mxu0 0.0
      %2701 = vmatprep.subr.mxu0 0.0
      %2702 = vmatpush1.msra.mxu0 0.0
      %2703 = vmatprep.subr.mxu0 0.0
      %2704 = vmatpush1.msra.mxu0 0.0
      %2705 = vmatprep.subr.mxu0 0.0
      %2706 = vmatpush1.msra.mxu0 0.0
      %2707 = vmatprep.subr.mxu0 0.0
      %2708 = vmatpush1.msra.mxu0 0.0
      %2709 = vmatprep.subr.mxu0 0.0
      %2710 = vmatpush1.msra.mxu0 0.0
      %2711 = vmatprep.subr.mxu0 0.0
      %2712 = vmatpush1.msra.mxu0 0.0
      %2713 = vmatprep.subr.mxu0 0.0
      %2714 = vmatpush1.msra.mxu0 0.0
      %2715 = vmatprep.subr.mxu0 0.0
      %2716 = vmatpush1.msra.mxu0 0.0
      %2717 = vmatprep.subr.mxu0 0.0
      %2718 = vmatpush1.msra.mxu0 0.0
      %2719 = vmatprep.mubr.f32.mxu0 0.0
      %2720 = vmatmul.mubr.f32.gmra.mrb[0].mxu0 %v2644
      %v2721 = vpop.f32.mrb[0].mxu0
      %v2722 = vadd.f32 0.0, %v2721
      %v2723 = vpop.f32.mrb[0].mxu0
      %2724 = vmatprep.mubr.f32.mxu0 0.0
      %2725 = vmatmul.mubr.f32.gmra.mrb[0].mxu0 %v2647
      %v2726 = vpop.f32.mrb[0].mxu0
      %v2727 = vadd.f32 0.0, %v2726
      %v2728 = vpop.f32.mrb[0].mxu0
      %2729 = vmatprep.mubr.f32.mxu0 0.0
      %2730 = vmatmul.mubr.f32.gmra.mrb[0].mxu0 %v2650
      %v2731 = vpop.f32.mrb[0].mxu0
      %v2732 = vadd.f32 0.0, %v2731
      %v2733 = vpop.f32.mrb[0].mxu0
      %2734 = vmatprep.mubr.f32.mxu0 0.0
      %2735 = vmatmul.mubr.f32.gmra.mrb[0].mxu0 %v2653
      %v2736 = vpop.f32.mrb[0].mxu0
      %v2737 = vadd.f32 0.0, %v2736
      %v2738 = vpop.f32.mrb[0].mxu0
      %2739 = vdwg.mxu0
      %v2740 = vadd.f32 %v2722, %v2732
      %v2741 = vadd.f32 %v2727, %v2737
      %v2742 = vadd.f32 %v2740, %v2435
      %v2743 = vadd.f32 %v2741, %v2436
      %2744 = vmatprep.subr.mxu0 0.0
      %2745 = vmatpush1.msra.mxu0 %v1004
      %2746 = vmatprep.subr.mxu0 0.0
      %2747 = vmatpush1.msra.mxu0 0.0
      %2748 = vmatprep.subr.mxu0 0.0
      %2749 = vmatpush1.msra.mxu0 0.0
      %2750 = vmatprep.subr.mxu0 0.0
      %2751 = vmatpush1.msra.mxu0 0.0
      %2752 = vmatprep.subr.mxu0 0.0
      %2753 = vmatpush1.msra.mxu0 0.0
      %2754 = vmatprep.subr.mxu0 0.0
      %2755 = vmatpush1.msra.mxu0 0.0
      %2756 = vmatprep.subr.mxu0 0.0
      %2757 = vmatpush1.msra.mxu0 0.0
      %2758 = vmatprep.subr.mxu0 0.0
      %2759 = vmatpush1.msra.mxu0 0.0
      %2760 = vmatprep.subr.mxu0 0.0
      %2761 = vmatpush1.msra.mxu0 0.0
      %2762 = vmatprep.subr.mxu0 0.0
      %2763 = vmatpush1.msra.mxu0 0.0
      %2764 = vmatprep.subr.mxu0 0.0
      %2765 = vmatpush1.msra.mxu0 0.0
      %2766 = vmatprep.subr.mxu0 0.0
      %2767 = vmatpush1.msra.mxu0 0.0
      %2768 = vmatprep.subr.mxu0 0.0
      %2769 = vmatpush1.msra.mxu0 0.0
      %2770 = vmatprep.subr.mxu0 0.0
      %2771 = vmatpush1.msra.mxu0 0.0
      %2772 = vmatprep.subr.mxu0 0.0
      %2773 = vmatpush1.msra.mxu0 0.0
      %2774 = vmatprep.subr.mxu0 0.0
      %2775 = vmatpush1.msra.mxu0 0.0
      %2776 = vmatprep.subr.mxu0 0.0
      %2777 = vmatpush1.msra.mxu0 0.0
      %2778 = vmatprep.subr.mxu0 0.0
      %2779 = vmatpush1.msra.mxu0 0.0
      %2780 = vmatprep.subr.mxu0 0.0
      %2781 = vmatpush1.msra.mxu0 0.0
      %2782 = vmatprep.subr.mxu0 0.0
      %2783 = vmatpush1.msra.mxu0 0.0
      %2784 = vmatprep.subr.mxu0 0.0
      %2785 = vmatpush1.msra.mxu0 0.0
      %2786 = vmatprep.subr.mxu0 0.0
      %2787 = vmatpush1.msra.mxu0 0.0
      %2788 = vmatprep.subr.mxu0 0.0
      %2789 = vmatpush1.msra.mxu0 0.0
      %2790 = vmatprep.subr.mxu0 0.0
      %2791 = vmatpush1.msra.mxu0 0.0
      %2792 = vmatprep.subr.mxu0 0.0
      %2793 = vmatpush1.msra.mxu0 0.0
      %2794 = vmatprep.subr.mxu0 0.0
      %2795 = vmatpush1.msra.mxu0 0.0
      %2796 = vmatprep.subr.mxu0 0.0
      %2797 = vmatpush1.msra.mxu0 0.0
      %2798 = vmatprep.subr.mxu0 0.0
      %2799 = vmatpush1.msra.mxu0 0.0
      %2800 = vmatprep.subr.mxu0 0.0
      %2801 = vmatpush1.msra.mxu0 0.0
      %2802 = vmatprep.subr.mxu0 0.0
      %2803 = vmatpush1.msra.mxu0 0.0
      %2804 = vmatprep.subr.mxu0 0.0
      %2805 = vmatpush1.msra.mxu0 0.0
      %2806 = vmatprep.subr.mxu0 0.0
      %2807 = vmatpush1.msra.mxu0 0.0
      %2808 = vmatprep.mubr.f32.mxu0 0.0
      %2809 = vmatmul.mubr.f32.gmra.mrb[0].mxu0 %v2352
      %v2810 = vpop.f32.mrb[0].mxu0
      %v2811 = vadd.f32 0.0, %v2810
      %v2812 = vpop.f32.mrb[0].mxu0
      %2813 = vmatprep.mubr.f32.mxu0 0.0
      %2814 = vmatmul.mubr.f32.gmra.mrb[0].mxu0 %v2354
      %v2815 = vpop.f32.mrb[0].mxu0
      %v2816 = vadd.f32 0.0, %v2815
      %v2817 = vpop.f32.mrb[0].mxu0
      %2818 = vdwg.mxu0
      %v2820 = vsel %vm1081, %v2742, 0
      %v2823 = vsel %vm1081, %v2743, 0
      %2825 = vmatprep.subr.mxu0 0.0
      %2826 = vmatpush1.msra.mxu0 %v1090
      %2827 = vmatprep.subr.mxu0 0.0
      %2828 = vmatpush1.msra.mxu0 0.0
      %2829 = vmatprep.subr.mxu0 0.0
      %2830 = vmatpush1.msra.mxu0 0.0
      %2831 = vmatprep.subr.mxu0 0.0
      %2832 = vmatpush1.msra.mxu0 0.0
      %2833 = vmatprep.subr.mxu0 0.0
      %2834 = vmatpush1.msra.mxu0 0.0
      %2835 = vmatprep.subr.mxu0 0.0
      %2836 = vmatpush1.msra.mxu0 0.0
      %2837 = vmatprep.subr.mxu0 0.0
      %2838 = vmatpush1.msra.mxu0 0.0
      %2839 = vmatprep.subr.mxu0 0.0
      %2840 = vmatpush1.msra.mxu0 0.0
      %2841 = vmatprep.subr.mxu0 0.0
      %2842 = vmatpush1.msra.mxu0 0.0
      %2843 = vmatprep.subr.mxu0 0.0
      %2844 = vmatpush1.msra.mxu0 0.0
      %2845 = vmatprep.subr.mxu0 0.0
      %2846 = vmatpush1.msra.mxu0 0.0
      %2847 = vmatprep.subr.mxu0 0.0
      %2848 = vmatpush1.msra.mxu0 0.0
      %2849 = vmatprep.subr.mxu0 0.0
      %2850 = vmatpush1.msra.mxu0 0.0
      %2851 = vmatprep.subr.mxu0 0.0
      %2852 = vmatpush1.msra.mxu0 0.0
      %2853 = vmatprep.subr.mxu0 0.0
      %2854 = vmatpush1.msra.mxu0 0.0
      %2855 = vmatprep.subr.mxu0 0.0
      %2856 = vmatpush1.msra.mxu0 0.0
      %2857 = vmatprep.subr.mxu0 0.0
      %2858 = vmatpush1.msra.mxu0 0.0
      %2859 = vmatprep.subr.mxu0 0.0
      %2860 = vmatpush1.msra.mxu0 0.0
      %2861 = vmatprep.subr.mxu0 0.0
      %2862 = vmatpush1.msra.mxu0 0.0
      %2863 = vmatprep.subr.mxu0 0.0
      %2864 = vmatpush1.msra.mxu0 0.0
      %2865 = vmatprep.subr.mxu0 0.0
      %2866 = vmatpush1.msra.mxu0 0.0
      %2867 = vmatprep.subr.mxu0 0.0
      %2868 = vmatpush1.msra.mxu0 0.0
      %2869 = vmatprep.subr.mxu0 0.0
      %2870 = vmatpush1.msra.mxu0 0.0
      %2871 = vmatprep.subr.mxu0 0.0
      %2872 = vmatpush1.msra.mxu0 0.0
      %2873 = vmatprep.subr.mxu0 0.0
      %2874 = vmatpush1.msra.mxu0 0.0
      %2875 = vmatprep.subr.mxu0 0.0
      %2876 = vmatpush1.msra.mxu0 0.0
      %2877 = vmatprep.subr.mxu0 0.0
      %2878 = vmatpush1.msra.mxu0 0.0
      %2879 = vmatprep.subr.mxu0 0.0
      %2880 = vmatpush1.msra.mxu0 0.0
      %2881 = vmatprep.subr.mxu0 0.0
      %2882 = vmatpush1.msra.mxu0 0.0
      %2883 = vmatprep.subr.mxu0 0.0
      %2884 = vmatpush1.msra.mxu0 0.0
      %2885 = vmatprep.subr.mxu0 0.0
      %2886 = vmatpush1.msra.mxu0 0.0
      %2887 = vmatprep.subr.mxu0 0.0
      %2888 = vmatpush1.msra.mxu0 0.0
      %2889 = vmatprep.mubr.f32.mxu0 0.0
      %2890 = vmatmul.mubr.f32.gmra.mrb[0].mxu0 %v2820
      %v2891 = vpop.f32.mrb[0].mxu0
      %v2892 = vadd.f32 %v2811, %v2891
      %v2893 = vpop.f32.mrb[0].mxu0
      %2894 = vmatprep.mubr.f32.mxu0 0.0
      %2895 = vmatmul.mubr.f32.gmra.mrb[0].mxu0 %v2823
      %v2896 = vpop.f32.mrb[0].mxu0
      %v2897 = vadd.f32 %v2816, %v2896
      %v2898 = vpop.f32.mrb[0].mxu0
      %2899 = vdwg.mxu0
      %2900 = vmatprep.subr.mxu0 0.0
      %2901 = vmatpush1.msra.mxu0 %v2892
      %2902 = vmatprep.subr.mxu0 0.0
      %2903 = vmatpush1.msra.mxu0 %v2897
      %2904 = vmatprep.subr.mxu0 0.0
      %2905 = vmatpush1.msra.mxu0 0.0
      %2906 = vmatprep.subr.mxu0 0.0
      %2907 = vmatpush1.msra.mxu0 0.0
      %2908 = vmatprep.subr.mxu0 0.0
      %2909 = vmatpush1.msra.mxu0 0.0
      %2910 = vmatprep.subr.mxu0 0.0
      %2911 = vmatpush1.msra.mxu0 0.0
      %2912 = vmatprep.subr.mxu0 0.0
      %2913 = vmatpush1.msra.mxu0 0.0
      %2914 = vmatprep.subr.mxu0 0.0
      %2915 = vmatpush1.msra.mxu0 0.0
      %2916 = vmatprep.subr.mxu0 0.0
      %2917 = vmatpush1.msra.mxu0 0.0
      %2918 = vmatprep.subr.mxu0 0.0
      %2919 = vmatpush1.msra.mxu0 0.0
      %2920 = vmatprep.subr.mxu0 0.0
      %2921 = vmatpush1.msra.mxu0 0.0
      %2922 = vmatprep.subr.mxu0 0.0
      %2923 = vmatpush1.msra.mxu0 0.0
      %2924 = vmatprep.subr.mxu0 0.0
      %2925 = vmatpush1.msra.mxu0 0.0
      %2926 = vmatprep.subr.mxu0 0.0
      %2927 = vmatpush1.msra.mxu0 0.0
      %2928 = vmatprep.subr.mxu0 0.0
      %2929 = vmatpush1.msra.mxu0 0.0
      %2930 = vmatprep.subr.mxu0 0.0
      %2931 = vmatpush1.msra.mxu0 0.0
      %2932 = vmatprep.subr.mxu0 0.0
      %2933 = vmatpush1.msra.mxu0 0.0
      %2934 = vmatprep.subr.mxu0 0.0
      %2935 = vmatpush1.msra.mxu0 0.0
      %2936 = vmatprep.subr.mxu0 0.0
      %2937 = vmatpush1.msra.mxu0 0.0
      %2938 = vmatprep.subr.mxu0 0.0
      %2939 = vmatpush1.msra.mxu0 0.0
      %2940 = vmatprep.subr.mxu0 0.0
      %2941 = vmatpush1.msra.mxu0 0.0
      %2942 = vmatprep.subr.mxu0 0.0
      %2943 = vmatpush1.msra.mxu0 0.0
      %2944 = vmatprep.subr.mxu0 0.0
      %2945 = vmatpush1.msra.mxu0 0.0
      %2946 = vmatprep.subr.mxu0 0.0
      %2947 = vmatpush1.msra.mxu0 0.0
      %2948 = vmatprep.subr.mxu0 0.0
      %2949 = vmatpush1.msra.mxu0 0.0
      %2950 = vmatprep.subr.mxu0 0.0
      %2951 = vmatpush1.msra.mxu0 0.0
      %2952 = vmatprep.subr.mxu0 0.0
      %2953 = vmatpush1.msra.mxu0 0.0
      %2954 = vmatprep.subr.mxu0 0.0
      %2955 = vmatpush1.msra.mxu0 0.0
      %2956 = vmatprep.subr.mxu0 0.0
      %2957 = vmatpush1.msra.mxu0 0.0
      %2958 = vmatprep.subr.mxu0 0.0
      %2959 = vmatpush1.msra.mxu0 0.0
      %2960 = vmatprep.subr.mxu0 0.0
      %2961 = vmatpush1.msra.mxu0 0.0
      %2962 = vmatprep.subr.mxu0 0.0
      %2963 = vmatpush1.msra.mxu0 0.0
      %2964 = vmatprep.mubr.f32.mxu0 0.0
      %2965 = vmatmul.mubr.f32.gmra.mrb[0].mxu0 %v1168
      %v2966 = vpop.f32.mrb[0].mxu0
      %v2967 = vadd.f32 %v571, %v2966
      %v2968 = vpop.f32.mrb[0].mxu0
      %2969 = vmatprep.mubr.f32.mxu0 0.0
      %2970 = vmatmul.mubr.f32.gmra.mrb[0].mxu0 %v1171
      %v2971 = vpop.f32.mrb[0].mxu0
      %v2972 = vadd.f32 %v572, %v2971
      %v2973 = vpop.f32.mrb[0].mxu0
      %2974 = vmatprep.mubr.f32.mxu0 0.0
      %2975 = vmatmul.mubr.f32.gmra.mrb[0].mxu0 %v1174
      %v2976 = vpop.f32.mrb[0].mxu0
      %v2977 = vadd.f32 %v573, %v2976
      %v2978 = vpop.f32.mrb[0].mxu0
      %2979 = vmatprep.mubr.f32.mxu0 0.0
      %2980 = vmatmul.mubr.f32.gmra.mrb[0].mxu0 %v1177
      %v2981 = vpop.f32.mrb[0].mxu0
      %v2982 = vadd.f32 %v574, %v2981
      %v2983 = vpop.f32.mrb[0].mxu0
      %2984 = vdwg.mxu0
      %v2985 = vxor.u32 %v2967, 2147483648
      %v2986 = vxor.u32 %v2972, 2147483648
      %v2987 = vxor.u32 %v2977, 2147483648
      %v2988 = vxor.u32 %v2982, 2147483648
      %v2989 = vmul.f32 %v2985, 1.442695
      %v2990 = vpow.pop %v2989
      %v2991 = vmul.f32 %v2986, 1.442695
      %v2992 = vpow.pop %v2991
      %v2993 = vmul.f32 %v2987, 1.442695
      %v2994 = vpow.pop %v2993
      %v2995 = vmul.f32 %v2988, 1.442695
      %v2996 = vpow.pop %v2995
      %v2997 = vadd.f32 %v2990, 1.0
      %v2998 = vadd.f32 %v2992, 1.0
      %v2999 = vadd.f32 %v2994, 1.0
      %v3000 = vadd.f32 %v2996, 1.0
      %v3001 = vrcp.pop %v2997
      %v3002 = vmul.f32 1.0, %v3001
      %v3003 = vrcp.pop %v2998
      %v3004 = vmul.f32 1.0, %v3003
      %v3005 = vrcp.pop %v2999
      %v3006 = vmul.f32 1.0, %v3005
      %v3007 = vrcp.pop %v3000
      %v3008 = vmul.f32 1.0, %v3007
      %v3011 = vmul.f32 %v3002, %v2349
      %v3012 = vmul.f32 %v3004, %v2351
      %v3014 = vsel %vm590, %v3011, 0
      %v3017 = vsel %vm590, %v3012, 0
      %3019 = vmatprep.subr.mxu0 0.0
      %3020 = vmatpush1.msra.mxu0 %v1297
      %3021 = vmatprep.subr.mxu0 0.0
      %3022 = vmatpush1.msra.mxu0 0.0
      %3023 = vmatprep.subr.mxu0 0.0
      %3024 = vmatpush1.msra.mxu0 0.0
      %3025 = vmatprep.subr.mxu0 0.0
      %3026 = vmatpush1.msra.mxu0 0.0
      %3027 = vmatprep.subr.mxu0 0.0
      %3028 = vmatpush1.msra.mxu0 0.0
      %3029 = vmatprep.subr.mxu0 0.0
      %3030 = vmatpush1.msra.mxu0 0.0
      %3031 = vmatprep.subr.mxu0 0.0
      %3032 = vmatpush1.msra.mxu0 0.0
      %3033 = vmatprep.subr.mxu0 0.0
      %3034 = vmatpush1.msra.mxu0 0.0
      %3035 = vmatprep.subr.mxu0 0.0
      %3036 = vmatpush1.msra.mxu0 0.0
      %3037 = vmatprep.subr.mxu0 0.0
      %3038 = vmatpush1.msra.mxu0 0.0
      %3039 = vmatprep.subr.mxu0 0.0
      %3040 = vmatpush1.msra.mxu0 0.0
      %3041 = vmatprep.subr.mxu0 0.0
      %3042 = vmatpush1.msra.mxu0 0.0
      %3043 = vmatprep.subr.mxu0 0.0
      %3044 = vmatpush1.msra.mxu0 0.0
      %3045 = vmatprep.subr.mxu0 0.0
      %3046 = vmatpush1.msra.mxu0 0.0
      %3047 = vmatprep.subr.mxu0 0.0
      %3048 = vmatpush1.msra.mxu0 0.0
      %3049 = vmatprep.subr.mxu0 0.0
      %3050 = vmatpush1.msra.mxu0 0.0
      %3051 = vmatprep.subr.mxu0 0.0
      %3052 = vmatpush1.msra.mxu0 0.0
      %3053 = vmatprep.subr.mxu0 0.0
      %3054 = vmatpush1.msra.mxu0 0.0
      %3055 = vmatprep.subr.mxu0 0.0
      %3056 = vmatpush1.msra.mxu0 0.0
      %3057 = vmatprep.subr.mxu0 0.0
      %3058 = vmatpush1.msra.mxu0 0.0
      %3059 = vmatprep.subr.mxu0 0.0
      %3060 = vmatpush1.msra.mxu0 0.0
      %3061 = vmatprep.subr.mxu0 0.0
      %3062 = vmatpush1.msra.mxu0 0.0
      %3063 = vmatprep.subr.mxu0 0.0
      %3064 = vmatpush1.msra.mxu0 0.0
      %3065 = vmatprep.subr.mxu0 0.0
      %3066 = vmatpush1.msra.mxu0 0.0
      %3067 = vmatprep.subr.mxu0 0.0
      %3068 = vmatpush1.msra.mxu0 0.0
      %3069 = vmatprep.subr.mxu0 0.0
      %3070 = vmatpush1.msra.mxu0 0.0
      %3071 = vmatprep.subr.mxu0 0.0
      %3072 = vmatpush1.msra.mxu0 0.0
      %3073 = vmatprep.subr.mxu0 0.0
      %3074 = vmatpush1.msra.mxu0 0.0
      %3075 = vmatprep.subr.mxu0 0.0
      %3076 = vmatpush1.msra.mxu0 0.0
      %3077 = vmatprep.subr.mxu0 0.0
      %3078 = vmatpush1.msra.mxu0 0.0
      %3079 = vmatprep.subr.mxu0 0.0
      %3080 = vmatpush1.msra.mxu0 0.0
      %3081 = vmatprep.subr.mxu0 0.0
      %3082 = vmatpush1.msra.mxu0 0.0
      %3083 = vmatprep.mubr.f32.mxu0 0.0
      %3084 = vmatmul.mubr.f32.gmra.mrb[0].mxu0 %v3014
      %v3085 = vpop.f32.mrb[0].mxu0
      %v3086 = vadd.f32 0.0, %v3085
      %v3087 = vpop.f32.mrb[0].mxu0
      %3088 = vmatprep.mubr.f32.mxu0 0.0
      %3089 = vmatmul.mubr.f32.gmra.mrb[0].mxu0 %v3017
      %v3090 = vpop.f32.mrb[0].mxu0
      %v3091 = vadd.f32 0.0, %v3090
      %v3092 = vpop.f32.mrb[0].mxu0
      %3093 = vdwg.mxu0
      %v3094 = vadd.f32 %v2344, %v3086
      %v3095 = vadd.f32 %v2345, %v3091
      %3096 = vmatprep.subr.mxu0 0.0
      %3097 = vmatpush1.msra.mxu0 %v3094
      %3098 = vmatprep.subr.mxu0 0.0
      %3099 = vmatpush1.msra.mxu0 %v3095
      %3100 = vmatprep.subr.mxu0 0.0
      %3101 = vmatpush1.msra.mxu0 0.0
      %3102 = vmatprep.subr.mxu0 0.0
      %3103 = vmatpush1.msra.mxu0 0.0
      %3104 = vmatprep.subr.mxu0 0.0
      %3105 = vmatpush1.msra.mxu0 0.0
      %3106 = vmatprep.subr.mxu0 0.0
      %3107 = vmatpush1.msra.mxu0 0.0
      %3108 = vmatprep.subr.mxu0 0.0
      %3109 = vmatpush1.msra.mxu0 0.0
      %3110 = vmatprep.subr.mxu0 0.0
      %3111 = vmatpush1.msra.mxu0 0.0
      %3112 = vmatprep.subr.mxu0 0.0
      %3113 = vmatpush1.msra.mxu0 0.0
      %3114 = vmatprep.subr.mxu0 0.0
      %3115 = vmatpush1.msra.mxu0 0.0
      %3116 = vmatprep.subr.mxu0 0.0
      %3117 = vmatpush1.msra.mxu0 0.0
      %3118 = vmatprep.subr.mxu0 0.0
      %3119 = vmatpush1.msra.mxu0 0.0
      %3120 = vmatprep.subr.mxu0 0.0
      %3121 = vmatpush1.msra.mxu0 0.0
      %3122 = vmatprep.subr.mxu0 0.0
      %3123 = vmatpush1.msra.mxu0 0.0
      %3124 = vmatprep.subr.mxu0 0.0
      %3125 = vmatpush1.msra.mxu0 0.0
      %3126 = vmatprep.subr.mxu0 0.0
      %3127 = vmatpush1.msra.mxu0 0.0
      %3128 = vmatprep.subr.mxu0 0.0
      %3129 = vmatpush1.msra.mxu0 0.0
      %3130 = vmatprep.subr.mxu0 0.0
      %3131 = vmatpush1.msra.mxu0 0.0
      %3132 = vmatprep.subr.mxu0 0.0
      %3133 = vmatpush1.msra.mxu0 0.0
      %3134 = vmatprep.subr.mxu0 0.0
      %3135 = vmatpush1.msra.mxu0 0.0
      %3136 = vmatprep.subr.mxu0 0.0
      %3137 = vmatpush1.msra.mxu0 0.0
      %3138 = vmatprep.subr.mxu0 0.0
      %3139 = vmatpush1.msra.mxu0 0.0
      %3140 = vmatprep.subr.mxu0 0.0
      %3141 = vmatpush1.msra.mxu0 0.0
      %3142 = vmatprep.subr.mxu0 0.0
      %3143 = vmatpush1.msra.mxu0 0.0
      %3144 = vmatprep.subr.mxu0 0.0
      %3145 = vmatpush1.msra.mxu0 0.0
      %3146 = vmatprep.subr.mxu0 0.0
      %3147 = vmatpush1.msra.mxu0 0.0
      %3148 = vmatprep.subr.mxu0 0.0
      %3149 = vmatpush1.msra.mxu0 0.0
      %3150 = vmatprep.subr.mxu0 0.0
      %3151 = vmatpush1.msra.mxu0 0.0
      %3152 = vmatprep.subr.mxu0 0.0
      %3153 = vmatpush1.msra.mxu0 0.0
      %3154 = vmatprep.subr.mxu0 0.0
      %3155 = vmatpush1.msra.mxu0 0.0
      %3156 = vmatprep.subr.mxu0 0.0
      %3157 = vmatpush1.msra.mxu0 0.0
      %3158 = vmatprep.subr.mxu0 0.0
      %3159 = vmatpush1.msra.mxu0 0.0
      %3160 = vmatprep.mubr.f32.mxu0 0.0
      %3161 = vmatmul.mubr.f32.gmra.mrb[0].mxu0 %v1377
      %v3162 = vpop.f32.mrb[0].mxu0
      %v3163 = vadd.f32 %v578, %v3162
      %v3164 = vpop.f32.mrb[0].mxu0
      %3165 = vmatprep.mubr.f32.mxu0 0.0
      %3166 = vmatmul.mubr.f32.gmra.mrb[0].mxu0 %v1380
      %v3167 = vpop.f32.mrb[0].mxu0
      %v3168 = vadd.f32 %v579, %v3167
      %v3169 = vpop.f32.mrb[0].mxu0
      %3170 = vdwg.mxu0
      %v3171 = vtanh.pop %v3163
      %v3172 = vtanh.pop %v3168
      %v3173 = vmul.f32 %v3006, %v2330
      %v3174 = vmul.f32 %v3008, %v2331
      %v3175 = vsub.f32 1.0, %v3006
      %v3176 = vsub.f32 1.0, %v3008
      %3179 = vrot.lane.b32.xlu0 %v3171, 4
      %v3180 = vpop.permute.xlu0 %3179
      %3181 = vrot.lane.b32.xlu0 %v3172, 4
      %v3182 = vpop.permute.xlu0 %3181
      %v3185 = vmul.f32 %v3175, %v3180
      %v3186 = vmul.f32 %v3176, %v3182
      %v3187 = vadd.f32 %v3173, %v3185
      %v3188 = vadd.f32 %v3174, %v3186
      %s3189 = scalar_lea.vmem %s534, 96
      %v3190 = vld [vmem:[%s3189] sm:$0xff]
      %v3191 = vld [vmem:[%s3189 + $0x8] sm:$0xff]
      %v3192 = vld [vmem:[%s3189 + $0x10] sm:$0xff]
      %v3193 = vld [vmem:[%s3189 + $0x18] sm:$0xff]
      %s3194 = scalar_lea.vmem %s539, 48
      %v3195 = vld [vmem:[%s3194] sm:$0xff]
      %v3196 = vld [vmem:[%s3194 + $0x8] sm:$0xff]
      %s3197 = scalar_lea.vmem %s544, 48
      %v3198 = vld [vmem:[%s3197] sm:$0xff]
      %v3199 = vld [vmem:[%s3197 + $0x8] sm:$0xff]
      %s3200 = scalar_lea.vmem %s549, 48
      %v3201 = vld [vmem:[%s3200] sm:$0xff]
      %v3202 = vld [vmem:[%s3200 + $0x8] sm:$0xff]
      %3205 = vrot.lane.b32.xlu0 %v3187, 124
      %v3206 = vpop.permute.xlu0 %3205
      %3207 = vrot.lane.b32.xlu0 %v3188, 124
      %v3208 = vpop.permute.xlu0 %3207
      %v3209 = vsel %vm590, %v3206, 0
      %v3211 = vsel %vm590, %v3208, 0
      %3213 = vmatprep.subr.mxu0 0.0
      %3214 = vmatpush1.msra.mxu0 %v596
      %3215 = vmatprep.subr.mxu0 0.0
      %3216 = vmatpush1.msra.mxu0 0.0
      %3217 = vmatprep.subr.mxu0 0.0
      %3218 = vmatpush1.msra.mxu0 0.0
      %3219 = vmatprep.subr.mxu0 0.0
      %3220 = vmatpush1.msra.mxu0 0.0
      %3221 = vmatprep.subr.mxu0 0.0
      %3222 = vmatpush1.msra.mxu0 0.0
      %3223 = vmatprep.subr.mxu0 0.0
      %3224 = vmatpush1.msra.mxu0 0.0
      %3225 = vmatprep.subr.mxu0 0.0
      %3226 = vmatpush1.msra.mxu0 0.0
      %3227 = vmatprep.subr.mxu0 0.0
      %3228 = vmatpush1.msra.mxu0 0.0
      %3229 = vmatprep.subr.mxu0 0.0
      %3230 = vmatpush1.msra.mxu0 0.0
      %3231 = vmatprep.subr.mxu0 0.0
      %3232 = vmatpush1.msra.mxu0 0.0
      %3233 = vmatprep.subr.mxu0 0.0
      %3234 = vmatpush1.msra.mxu0 0.0
      %3235 = vmatprep.subr.mxu0 0.0
      %3236 = vmatpush1.msra.mxu0 0.0
      %3237 = vmatprep.subr.mxu0 0.0
      %3238 = vmatpush1.msra.mxu0 0.0
      %3239 = vmatprep.subr.mxu0 0.0
      %3240 = vmatpush1.msra.mxu0 0.0
      %3241 = vmatprep.subr.mxu0 0.0
      %3242 = vmatpush1.msra.mxu0 0.0
      %3243 = vmatprep.subr.mxu0 0.0
      %3244 = vmatpush1.msra.mxu0 0.0
      %3245 = vmatprep.subr.mxu0 0.0
      %3246 = vmatpush1.msra.mxu0 0.0
      %3247 = vmatprep.subr.mxu0 0.0
      %3248 = vmatpush1.msra.mxu0 0.0
      %3249 = vmatprep.subr.mxu0 0.0
      %3250 = vmatpush1.msra.mxu0 0.0
      %3251 = vmatprep.subr.mxu0 0.0
      %3252 = vmatpush1.msra.mxu0 0.0
      %3253 = vmatprep.subr.mxu0 0.0
      %3254 = vmatpush1.msra.mxu0 0.0
      %3255 = vmatprep.subr.mxu0 0.0
      %3256 = vmatpush1.msra.mxu0 0.0
      %3257 = vmatprep.subr.mxu0 0.0
      %3258 = vmatpush1.msra.mxu0 0.0
      %3259 = vmatprep.subr.mxu0 0.0
      %3260 = vmatpush1.msra.mxu0 0.0
      %3261 = vmatprep.subr.mxu0 0.0
      %3262 = vmatpush1.msra.mxu0 0.0
      %3263 = vmatprep.subr.mxu0 0.0
      %3264 = vmatpush1.msra.mxu0 0.0
      %3265 = vmatprep.subr.mxu0 0.0
      %3266 = vmatpush1.msra.mxu0 0.0
      %3267 = vmatprep.subr.mxu0 0.0
      %3268 = vmatpush1.msra.mxu0 0.0
      %3269 = vmatprep.subr.mxu0 0.0
      %3270 = vmatpush1.msra.mxu0 0.0
      %3271 = vmatprep.subr.mxu0 0.0
      %3272 = vmatpush1.msra.mxu0 0.0
      %3273 = vmatprep.subr.mxu0 0.0
      %3274 = vmatpush1.msra.mxu0 0.0
      %3275 = vmatprep.subr.mxu0 0.0
      %3276 = vmatpush1.msra.mxu0 0.0
      %3277 = vmatprep.mubr.f32.mxu0 0.0
      %3278 = vmatmul.mubr.f32.gmra.mrb[0].mxu0 %v3209
      %v3279 = vpop.f32.mrb[0].mxu0
      %v3280 = vadd.f32 0.0, %v3279
      %v3281 = vpop.f32.mrb[0].mxu0
      %3282 = vmatprep.mubr.f32.mxu0 0.0
      %3283 = vmatmul.mubr.f32.gmra.mrb[0].mxu0 %v3211
      %v3284 = vpop.f32.mrb[0].mxu0
      %v3285 = vadd.f32 0.0, %v3284
      %v3286 = vpop.f32.mrb[0].mxu0
      %3287 = vdwg.mxu0
      %v3288 = vadd.f32 %v3198, %v3280
      %v3289 = vadd.f32 %v3199, %v3285
      %v3290 = vtanh.pop %v3288
      %v3291 = vtanh.pop %v3289
      %v3292 = vmul.f32 %v3290, 0.5
      %v3293 = vmul.f32 %v3291, 0.5
      %3294 = vmatprep.subr.mxu0 0.0
      %3295 = vmatpush1.msra.mxu0 %v680
      %3296 = vmatprep.subr.mxu0 0.0
      %3297 = vmatpush1.msra.mxu0 0.0
      %3298 = vmatprep.subr.mxu0 0.0
      %3299 = vmatpush1.msra.mxu0 0.0
      %3300 = vmatprep.subr.mxu0 0.0
      %3301 = vmatpush1.msra.mxu0 0.0
      %3302 = vmatprep.subr.mxu0 0.0
      %3303 = vmatpush1.msra.mxu0 0.0
      %3304 = vmatprep.subr.mxu0 0.0
      %3305 = vmatpush1.msra.mxu0 0.0
      %3306 = vmatprep.subr.mxu0 0.0
      %3307 = vmatpush1.msra.mxu0 0.0
      %3308 = vmatprep.subr.mxu0 0.0
      %3309 = vmatpush1.msra.mxu0 0.0
      %3310 = vmatprep.subr.mxu0 0.0
      %3311 = vmatpush1.msra.mxu0 0.0
      %3312 = vmatprep.subr.mxu0 0.0
      %3313 = vmatpush1.msra.mxu0 0.0
      %3314 = vmatprep.subr.mxu0 0.0
      %3315 = vmatpush1.msra.mxu0 0.0
      %3316 = vmatprep.subr.mxu0 0.0
      %3317 = vmatpush1.msra.mxu0 0.0
      %3318 = vmatprep.subr.mxu0 0.0
      %3319 = vmatpush1.msra.mxu0 0.0
      %3320 = vmatprep.subr.mxu0 0.0
      %3321 = vmatpush1.msra.mxu0 0.0
      %3322 = vmatprep.subr.mxu0 0.0
      %3323 = vmatpush1.msra.mxu0 0.0
      %3324 = vmatprep.subr.mxu0 0.0
      %3325 = vmatpush1.msra.mxu0 0.0
      %3326 = vmatprep.subr.mxu0 0.0
      %3327 = vmatpush1.msra.mxu0 0.0
      %3328 = vmatprep.subr.mxu0 0.0
      %3329 = vmatpush1.msra.mxu0 0.0
      %3330 = vmatprep.subr.mxu0 0.0
      %3331 = vmatpush1.msra.mxu0 0.0
      %3332 = vmatprep.subr.mxu0 0.0
      %3333 = vmatpush1.msra.mxu0 0.0
      %3334 = vmatprep.subr.mxu0 0.0
      %3335 = vmatpush1.msra.mxu0 0.0
      %3336 = vmatprep.subr.mxu0 0.0
      %3337 = vmatpush1.msra.mxu0 0.0
      %3338 = vmatprep.subr.mxu0 0.0
      %3339 = vmatpush1.msra.mxu0 0.0
      %3340 = vmatprep.subr.mxu0 0.0
      %3341 = vmatpush1.msra.mxu0 0.0
      %3342 = vmatprep.subr.mxu0 0.0
      %3343 = vmatpush1.msra.mxu0 0.0
      %3344 = vmatprep.subr.mxu0 0.0
      %3345 = vmatpush1.msra.mxu0 0.0
      %3346 = vmatprep.subr.mxu0 0.0
      %3347 = vmatpush1.msra.mxu0 0.0
      %3348 = vmatprep.subr.mxu0 0.0
      %3349 = vmatpush1.msra.mxu0 0.0
      %3350 = vmatprep.subr.mxu0 0.0
      %3351 = vmatpush1.msra.mxu0 0.0
      %3352 = vmatprep.subr.mxu0 0.0
      %3353 = vmatpush1.msra.mxu0 0.0
      %3354 = vmatprep.subr.mxu0 0.0
      %3355 = vmatpush1.msra.mxu0 0.0
      %3356 = vmatprep.subr.mxu0 0.0
      %3357 = vmatpush1.msra.mxu0 0.0
      %3358 = vmatprep.mubr.f32.mxu0 0.0
      %3359 = vmatmul.mubr.f32.gmra.mrb[0].mxu0 %v3209
      %v3360 = vpop.f32.mrb[0].mxu0
      %v3361 = vadd.f32 0.0, %v3360
      %v3362 = vpop.f32.mrb[0].mxu0
      %3363 = vmatprep.mubr.f32.mxu0 0.0
      %3364 = vmatmul.mubr.f32.gmra.mrb[0].mxu0 %v3211
      %v3365 = vpop.f32.mrb[0].mxu0
      %v3366 = vadd.f32 0.0, %v3365
      %v3367 = vpop.f32.mrb[0].mxu0
      %3368 = vdwg.mxu0
      %v3369 = vadd.f32 %v3195, %v3361
      %v3370 = vadd.f32 %v3196, %v3366
      %3371 = vmatprep.subr.mxu0 0.0
      %3372 = vmatpush1.msra.mxu0 %v3369
      %3373 = vmatprep.subr.mxu0 0.0
      %3374 = vmatpush1.msra.mxu0 %v3370
      %3375 = vmatprep.subr.mxu0 0.0
      %3376 = vmatpush1.msra.mxu0 0.0
      %3377 = vmatprep.subr.mxu0 0.0
      %3378 = vmatpush1.msra.mxu0 0.0
      %3379 = vmatprep.subr.mxu0 0.0
      %3380 = vmatpush1.msra.mxu0 0.0
      %3381 = vmatprep.subr.mxu0 0.0
      %3382 = vmatpush1.msra.mxu0 0.0
      %3383 = vmatprep.subr.mxu0 0.0
      %3384 = vmatpush1.msra.mxu0 0.0
      %3385 = vmatprep.subr.mxu0 0.0
      %3386 = vmatpush1.msra.mxu0 0.0
      %3387 = vmatprep.subr.mxu0 0.0
      %3388 = vmatpush1.msra.mxu0 0.0
      %3389 = vmatprep.subr.mxu0 0.0
      %3390 = vmatpush1.msra.mxu0 0.0
      %3391 = vmatprep.subr.mxu0 0.0
      %3392 = vmatpush1.msra.mxu0 0.0
      %3393 = vmatprep.subr.mxu0 0.0
      %3394 = vmatpush1.msra.mxu0 0.0
      %3395 = vmatprep.subr.mxu0 0.0
      %3396 = vmatpush1.msra.mxu0 0.0
      %3397 = vmatprep.subr.mxu0 0.0
      %3398 = vmatpush1.msra.mxu0 0.0
      %3399 = vmatprep.subr.mxu0 0.0
      %3400 = vmatpush1.msra.mxu0 0.0
      %3401 = vmatprep.subr.mxu0 0.0
      %3402 = vmatpush1.msra.mxu0 0.0
      %3403 = vmatprep.subr.mxu0 0.0
      %3404 = vmatpush1.msra.mxu0 0.0
      %3405 = vmatprep.subr.mxu0 0.0
      %3406 = vmatpush1.msra.mxu0 0.0
      %3407 = vmatprep.subr.mxu0 0.0
      %3408 = vmatpush1.msra.mxu0 0.0
      %3409 = vmatprep.subr.mxu0 0.0
      %3410 = vmatpush1.msra.mxu0 0.0
      %3411 = vmatprep.subr.mxu0 0.0
      %3412 = vmatpush1.msra.mxu0 0.0
      %3413 = vmatprep.subr.mxu0 0.0
      %3414 = vmatpush1.msra.mxu0 0.0
      %3415 = vmatprep.subr.mxu0 0.0
      %3416 = vmatpush1.msra.mxu0 0.0
      %3417 = vmatprep.subr.mxu0 0.0
      %3418 = vmatpush1.msra.mxu0 0.0
      %3419 = vmatprep.subr.mxu0 0.0
      %3420 = vmatpush1.msra.mxu0 0.0
      %3421 = vmatprep.subr.mxu0 0.0
      %3422 = vmatpush1.msra.mxu0 0.0
      %3423 = vmatprep.subr.mxu0 0.0
      %3424 = vmatpush1.msra.mxu0 0.0
      %3425 = vmatprep.subr.mxu0 0.0
      %3426 = vmatpush1.msra.mxu0 0.0
      %3427 = vmatprep.subr.mxu0 0.0
      %3428 = vmatpush1.msra.mxu0 0.0
      %3429 = vmatprep.subr.mxu0 0.0
      %3430 = vmatpush1.msra.mxu0 0.0
      %3431 = vmatprep.subr.mxu0 0.0
      %3432 = vmatpush1.msra.mxu0 0.0
      %3433 = vmatprep.subr.mxu0 0.0
      %3434 = vmatpush1.msra.mxu0 0.0
      %3435 = vmatprep.mubr.f32.mxu0 0.0
      %3436 = vmatmul.mubr.f32.gmra.mrb[0].mxu0 %v761
      %v3437 = vpop.f32.mrb[0].mxu0
      %v3438 = vadd.f32 %v561, %v3437
      %v3439 = vpop.f32.mrb[0].mxu0
      %3440 = vmatprep.mubr.f32.mxu0 0.0
      %3441 = vmatmul.mubr.f32.gmra.mrb[0].mxu0 %v764
      %v3442 = vpop.f32.mrb[0].mxu0
      %v3443 = vadd.f32 %v562, %v3442
      %v3444 = vpop.f32.mrb[0].mxu0
      %3445 = vmatprep.mubr.f32.mxu0 0.0
      %3446 = vmatmul.mubr.f32.gmra.mrb[0].mxu0 %v767
      %v3447 = vpop.f32.mrb[0].mxu0
      %v3448 = vadd.f32 %v563, %v3447
      %v3449 = vpop.f32.mrb[0].mxu0
      %3450 = vmatprep.mubr.f32.mxu0 0.0
      %3451 = vmatmul.mubr.f32.gmra.mrb[0].mxu0 %v770
      %v3452 = vpop.f32.mrb[0].mxu0
      %v3453 = vadd.f32 %v564, %v3452
      %v3454 = vpop.f32.mrb[0].mxu0
      %3455 = vdwg.mxu0
      %v3456 = vsel %vm857, %v3438, -inf
      %3457 = vmax.xlane.f32.xlu0 %v3456
      %v3458 = vpop.xlane.xlu0 %3457
      %v3459 = vsel %vm857, %v3443, -inf
      %3460 = vmax.xlane.f32.xlu0 %v3459
      %v3461 = vpop.xlane.xlu0 %3460
      %v3462 = vsel %vm857, %v3448, -inf
      %3463 = vmax.xlane.f32.xlu0 %v3462
      %v3464 = vpop.xlane.xlu0 %3463
      %v3465 = vsel %vm857, %v3453, -inf
      %3466 = vmax.xlane.f32.xlu0 %v3465
      %v3467 = vpop.xlane.xlu0 %3466
      %v3468 = vsub.f32 %v3438, %v3458
      %v3469 = vsub.f32 %v3443, %v3461
      %v3470 = vsub.f32 %v3448, %v3464
      %v3471 = vsub.f32 %v3453, %v3467
      %v3472 = vmul.f32 %v3468, 1.442695
      %v3473 = vpow.pop %v3472
      %v3474 = vmul.f32 %v3469, 1.442695
      %v3475 = vpow.pop %v3474
      %v3476 = vmul.f32 %v3470, 1.442695
      %v3477 = vpow.pop %v3476
      %v3478 = vmul.f32 %v3471, 1.442695
      %v3479 = vpow.pop %v3478
      %v3480 = vsel %vm857, %v3473, 0.0
      %3481 = vadd.xlane.f32.xlu0 %v3480
      %v3482 = vpop.xlane.xlu0 %3481
      %v3483 = vsel %vm857, %v3475, 0.0
      %3484 = vadd.xlane.f32.xlu0 %v3483
      %v3485 = vpop.xlane.xlu0 %3484
      %v3486 = vsel %vm857, %v3477, 0.0
      %3487 = vadd.xlane.f32.xlu0 %v3486
      %v3488 = vpop.xlane.xlu0 %3487
      %v3489 = vsel %vm857, %v3479, 0.0
      %3490 = vadd.xlane.f32.xlu0 %v3489
      %v3491 = vpop.xlane.xlu0 %3490
      %v3492 = vrcp.pop %v3482
      %v3493 = vmul.f32 %v3473, %v3492
      %v3494 = vrcp.pop %v3485
      %v3495 = vmul.f32 %v3475, %v3494
      %v3496 = vrcp.pop %v3488
      %v3497 = vmul.f32 %v3477, %v3496
      %v3498 = vrcp.pop %v3491
      %v3499 = vmul.f32 %v3479, %v3498
      %v3501 = vsel %vm857, %v3493, 0
      %v3504 = vsel %vm857, %v3495, 0
      %v3507 = vsel %vm857, %v3497, 0
      %v3510 = vsel %vm857, %v3499, 0
      %3512 = vmatprep.subr.mxu0 0.0
      %3513 = vmatpush1.msra.mxu0 %v3190
      %3514 = vmatprep.subr.mxu0 0.0
      %3515 = vmatpush1.msra.mxu0 %v3191
      %3516 = vmatprep.subr.mxu0 0.0
      %3517 = vmatpush1.msra.mxu0 %v3192
      %3518 = vmatprep.subr.mxu0 0.0
      %3519 = vmatpush1.msra.mxu0 %v3193
      %3520 = vmatprep.subr.mxu0 0.0
      %3521 = vmatpush1.msra.mxu0 0.0
      %3522 = vmatprep.subr.mxu0 0.0
      %3523 = vmatpush1.msra.mxu0 0.0
      %3524 = vmatprep.subr.mxu0 0.0
      %3525 = vmatpush1.msra.mxu0 0.0
      %3526 = vmatprep.subr.mxu0 0.0
      %3527 = vmatpush1.msra.mxu0 0.0
      %3528 = vmatprep.subr.mxu0 0.0
      %3529 = vmatpush1.msra.mxu0 0.0
      %3530 = vmatprep.subr.mxu0 0.0
      %3531 = vmatpush1.msra.mxu0 0.0
      %3532 = vmatprep.subr.mxu0 0.0
      %3533 = vmatpush1.msra.mxu0 0.0
      %3534 = vmatprep.subr.mxu0 0.0
      %3535 = vmatpush1.msra.mxu0 0.0
      %3536 = vmatprep.subr.mxu0 0.0
      %3537 = vmatpush1.msra.mxu0 0.0
      %3538 = vmatprep.subr.mxu0 0.0
      %3539 = vmatpush1.msra.mxu0 0.0
      %3540 = vmatprep.subr.mxu0 0.0
      %3541 = vmatpush1.msra.mxu0 0.0
      %3542 = vmatprep.subr.mxu0 0.0
      %3543 = vmatpush1.msra.mxu0 0.0
      %3544 = vmatprep.subr.mxu0 0.0
      %3545 = vmatpush1.msra.mxu0 0.0
      %3546 = vmatprep.subr.mxu0 0.0
      %3547 = vmatpush1.msra.mxu0 0.0
      %3548 = vmatprep.subr.mxu0 0.0
      %3549 = vmatpush1.msra.mxu0 0.0
      %3550 = vmatprep.subr.mxu0 0.0
      %3551 = vmatpush1.msra.mxu0 0.0
      %3552 = vmatprep.subr.mxu0 0.0
      %3553 = vmatpush1.msra.mxu0 0.0
      %3554 = vmatprep.subr.mxu0 0.0
      %3555 = vmatpush1.msra.mxu0 0.0
      %3556 = vmatprep.subr.mxu0 0.0
      %3557 = vmatpush1.msra.mxu0 0.0
      %3558 = vmatprep.subr.mxu0 0.0
      %3559 = vmatpush1.msra.mxu0 0.0
      %3560 = vmatprep.subr.mxu0 0.0
      %3561 = vmatpush1.msra.mxu0 0.0
      %3562 = vmatprep.subr.mxu0 0.0
      %3563 = vmatpush1.msra.mxu0 0.0
      %3564 = vmatprep.subr.mxu0 0.0
      %3565 = vmatpush1.msra.mxu0 0.0
      %3566 = vmatprep.subr.mxu0 0.0
      %3567 = vmatpush1.msra.mxu0 0.0
      %3568 = vmatprep.subr.mxu0 0.0
      %3569 = vmatpush1.msra.mxu0 0.0
      %3570 = vmatprep.subr.mxu0 0.0
      %3571 = vmatpush1.msra.mxu0 0.0
      %3572 = vmatprep.subr.mxu0 0.0
      %3573 = vmatpush1.msra.mxu0 0.0
      %3574 = vmatprep.subr.mxu0 0.0
      %3575 = vmatpush1.msra.mxu0 0.0
      %3576 = vmatprep.mubr.f32.mxu0 0.0
      %3577 = vmatmul.mubr.f32.gmra.mrb[0].mxu0 %v3501
      %v3578 = vpop.f32.mrb[0].mxu0
      %v3579 = vadd.f32 0.0, %v3578
      %v3580 = vpop.f32.mrb[0].mxu0
      %3581 = vmatprep.mubr.f32.mxu0 0.0
      %3582 = vmatmul.mubr.f32.gmra.mrb[0].mxu0 %v3504
      %v3583 = vpop.f32.mrb[0].mxu0
      %v3584 = vadd.f32 0.0, %v3583
      %v3585 = vpop.f32.mrb[0].mxu0
      %3586 = vmatprep.mubr.f32.mxu0 0.0
      %3587 = vmatmul.mubr.f32.gmra.mrb[0].mxu0 %v3507
      %v3588 = vpop.f32.mrb[0].mxu0
      %v3589 = vadd.f32 0.0, %v3588
      %v3590 = vpop.f32.mrb[0].mxu0
      %3591 = vmatprep.mubr.f32.mxu0 0.0
      %3592 = vmatmul.mubr.f32.gmra.mrb[0].mxu0 %v3510
      %v3593 = vpop.f32.mrb[0].mxu0
      %v3594 = vadd.f32 0.0, %v3593
      %v3595 = vpop.f32.mrb[0].mxu0
      %3596 = vdwg.mxu0
      %v3597 = vadd.f32 %v3579, %v3589
      %v3598 = vadd.f32 %v3584, %v3594
      %v3599 = vadd.f32 %v3597, %v3292
      %v3600 = vadd.f32 %v3598, %v3293
      %3601 = vmatprep.subr.mxu0 0.0
      %3602 = vmatpush1.msra.mxu0 %v1004
      %3603 = vmatprep.subr.mxu0 0.0
      %3604 = vmatpush1.msra.mxu0 0.0
      %3605 = vmatprep.subr.mxu0 0.0
      %3606 = vmatpush1.msra.mxu0 0.0
      %3607 = vmatprep.subr.mxu0 0.0
      %3608 = vmatpush1.msra.mxu0 0.0
      %3609 = vmatprep.subr.mxu0 0.0
      %3610 = vmatpush1.msra.mxu0 0.0
      %3611 = vmatprep.subr.mxu0 0.0
      %3612 = vmatpush1.msra.mxu0 0.0
      %3613 = vmatprep.subr.mxu0 0.0
      %3614 = vmatpush1.msra.mxu0 0.0
      %3615 = vmatprep.subr.mxu0 0.0
      %3616 = vmatpush1.msra.mxu0 0.0
      %3617 = vmatprep.subr.mxu0 0.0
      %3618 = vmatpush1.msra.mxu0 0.0
      %3619 = vmatprep.subr.mxu0 0.0
      %3620 = vmatpush1.msra.mxu0 0.0
      %3621 = vmatprep.subr.mxu0 0.0
      %3622 = vmatpush1.msra.mxu0 0.0
      %3623 = vmatprep.subr.mxu0 0.0
      %3624 = vmatpush1.msra.mxu0 0.0
      %3625 = vmatprep.subr.mxu0 0.0
      %3626 = vmatpush1.msra.mxu0 0.0
      %3627 = vmatprep.subr.mxu0 0.0
      %3628 = vmatpush1.msra.mxu0 0.0
      %3629 = vmatprep.subr.mxu0 0.0
      %3630 = vmatpush1.msra.mxu0 0.0
      %3631 = vmatprep.subr.mxu0 0.0
      %3632 = vmatpush1.msra.mxu0 0.0
      %3633 = vmatprep.subr.mxu0 0.0
      %3634 = vmatpush1.msra.mxu0 0.0
      %3635 = vmatprep.subr.mxu0 0.0
      %3636 = vmatpush1.msra.mxu0 0.0
      %3637 = vmatprep.subr.mxu0 0.0
      %3638 = vmatpush1.msra.mxu0 0.0
      %3639 = vmatprep.subr.mxu0 0.0
      %3640 = vmatpush1.msra.mxu0 0.0
      %3641 = vmatprep.subr.mxu0 0.0
      %3642 = vmatpush1.msra.mxu0 0.0
      %3643 = vmatprep.subr.mxu0 0.0
      %3644 = vmatpush1.msra.mxu0 0.0
      %3645 = vmatprep.subr.mxu0 0.0
      %3646 = vmatpush1.msra.mxu0 0.0
      %3647 = vmatprep.subr.mxu0 0.0
      %3648 = vmatpush1.msra.mxu0 0.0
      %3649 = vmatprep.subr.mxu0 0.0
      %3650 = vmatpush1.msra.mxu0 0.0
      %3651 = vmatprep.subr.mxu0 0.0
      %3652 = vmatpush1.msra.mxu0 0.0
      %3653 = vmatprep.subr.mxu0 0.0
      %3654 = vmatpush1.msra.mxu0 0.0
      %3655 = vmatprep.subr.mxu0 0.0
      %3656 = vmatpush1.msra.mxu0 0.0
      %3657 = vmatprep.subr.mxu0 0.0
      %3658 = vmatpush1.msra.mxu0 0.0
      %3659 = vmatprep.subr.mxu0 0.0
      %3660 = vmatpush1.msra.mxu0 0.0
      %3661 = vmatprep.subr.mxu0 0.0
      %3662 = vmatpush1.msra.mxu0 0.0
      %3663 = vmatprep.subr.mxu0 0.0
      %3664 = vmatpush1.msra.mxu0 0.0
      %3665 = vmatprep.mubr.f32.mxu0 0.0
      %3666 = vmatmul.mubr.f32.gmra.mrb[0].mxu0 %v3209
      %v3667 = vpop.f32.mrb[0].mxu0
      %v3668 = vadd.f32 0.0, %v3667
      %v3669 = vpop.f32.mrb[0].mxu0
      %3670 = vmatprep.mubr.f32.mxu0 0.0
      %3671 = vmatmul.mubr.f32.gmra.mrb[0].mxu0 %v3211
      %v3672 = vpop.f32.mrb[0].mxu0
      %v3673 = vadd.f32 0.0, %v3672
      %v3674 = vpop.f32.mrb[0].mxu0
      %3675 = vdwg.mxu0
      %v3677 = vsel %vm1081, %v3599, 0
      %v3680 = vsel %vm1081, %v3600, 0
      %3682 = vmatprep.subr.mxu0 0.0
      %3683 = vmatpush1.msra.mxu0 %v1090
      %3684 = vmatprep.subr.mxu0 0.0
      %3685 = vmatpush1.msra.mxu0 0.0
      %3686 = vmatprep.subr.mxu0 0.0
      %3687 = vmatpush1.msra.mxu0 0.0
      %3688 = vmatprep.subr.mxu0 0.0
      %3689 = vmatpush1.msra.mxu0 0.0
      %3690 = vmatprep.subr.mxu0 0.0
      %3691 = vmatpush1.msra.mxu0 0.0
      %3692 = vmatprep.subr.mxu0 0.0
      %3693 = vmatpush1.msra.mxu0 0.0
      %3694 = vmatprep.subr.mxu0 0.0
      %3695 = vmatpush1.msra.mxu0 0.0
      %3696 = vmatprep.subr.mxu0 0.0
      %3697 = vmatpush1.msra.mxu0 0.0
      %3698 = vmatprep.subr.mxu0 0.0
      %3699 = vmatpush1.msra.mxu0 0.0
      %3700 = vmatprep.subr.mxu0 0.0
      %3701 = vmatpush1.msra.mxu0 0.0
      %3702 = vmatprep.subr.mxu0 0.0
      %3703 = vmatpush1.msra.mxu0 0.0
      %3704 = vmatprep.subr.mxu0 0.0
      %3705 = vmatpush1.msra.mxu0 0.0
      %3706 = vmatprep.subr.mxu0 0.0
      %3707 = vmatpush1.msra.mxu0 0.0
      %3708 = vmatprep.subr.mxu0 0.0
      %3709 = vmatpush1.msra.mxu0 0.0
      %3710 = vmatprep.subr.mxu0 0.0
      %3711 = vmatpush1.msra.mxu0 0.0
      %3712 = vmatprep.subr.mxu0 0.0
      %3713 = vmatpush1.msra.mxu0 0.0
      %3714 = vmatprep.subr.mxu0 0.0
      %3715 = vmatpush1.msra.mxu0 0.0
      %3716 = vmatprep.subr.mxu0 0.0
      %3717 = vmatpush1.msra.mxu0 0.0
      %3718 = vmatprep.subr.mxu0 0.0
      %3719 = vmatpush1.msra.mxu0 0.0
      %3720 = vmatprep.subr.mxu0 0.0
      %3721 = vmatpush1.msra.mxu0 0.0
      %3722 = vmatprep.subr.mxu0 0.0
      %3723 = vmatpush1.msra.mxu0 0.0
      %3724 = vmatprep.subr.mxu0 0.0
      %3725 = vmatpush1.msra.mxu0 0.0
      %3726 = vmatprep.subr.mxu0 0.0
      %3727 = vmatpush1.msra.mxu0 0.0
      %3728 = vmatprep.subr.mxu0 0.0
      %3729 = vmatpush1.msra.mxu0 0.0
      %3730 = vmatprep.subr.mxu0 0.0
      %3731 = vmatpush1.msra.mxu0 0.0
      %3732 = vmatprep.subr.mxu0 0.0
      %3733 = vmatpush1.msra.mxu0 0.0
      %3734 = vmatprep.subr.mxu0 0.0
      %3735 = vmatpush1.msra.mxu0 0.0
      %3736 = vmatprep.subr.mxu0 0.0
      %3737 = vmatpush1.msra.mxu0 0.0
      %3738 = vmatprep.subr.mxu0 0.0
      %3739 = vmatpush1.msra.mxu0 0.0
      %3740 = vmatprep.subr.mxu0 0.0
      %3741 = vmatpush1.msra.mxu0 0.0
      %3742 = vmatprep.subr.mxu0 0.0
      %3743 = vmatpush1.msra.mxu0 0.0
      %3744 = vmatprep.subr.mxu0 0.0
      %3745 = vmatpush1.msra.mxu0 0.0
      %3746 = vmatprep.mubr.f32.mxu0 0.0
      %3747 = vmatmul.mubr.f32.gmra.mrb[0].mxu0 %v3677
      %v3748 = vpop.f32.mrb[0].mxu0
      %v3749 = vadd.f32 %v3668, %v3748
      %v3750 = vpop.f32.mrb[0].mxu0
      %3751 = vmatprep.mubr.f32.mxu0 0.0
      %3752 = vmatmul.mubr.f32.gmra.mrb[0].mxu0 %v3680
      %v3753 = vpop.f32.mrb[0].mxu0
      %v3754 = vadd.f32 %v3673, %v3753
      %v3755 = vpop.f32.mrb[0].mxu0
      %3756 = vdwg.mxu0
      %3757 = vmatprep.subr.mxu0 0.0
      %3758 = vmatpush1.msra.mxu0 %v3749
      %3759 = vmatprep.subr.mxu0 0.0
      %3760 = vmatpush1.msra.mxu0 %v3754
      %3761 = vmatprep.subr.mxu0 0.0
      %3762 = vmatpush1.msra.mxu0 0.0
      %3763 = vmatprep.subr.mxu0 0.0
      %3764 = vmatpush1.msra.mxu0 0.0
      %3765 = vmatprep.subr.mxu0 0.0
      %3766 = vmatpush1.msra.mxu0 0.0
      %3767 = vmatprep.subr.mxu0 0.0
      %3768 = vmatpush1.msra.mxu0 0.0
      %3769 = vmatprep.subr.mxu0 0.0
      %3770 = vmatpush1.msra.mxu0 0.0
      %3771 = vmatprep.subr.mxu0 0.0
      %3772 = vmatpush1.msra.mxu0 0.0
      %3773 = vmatprep.subr.mxu0 0.0
      %3774 = vmatpush1.msra.mxu0 0.0
      %3775 = vmatprep.subr.mxu0 0.0
      %3776 = vmatpush1.msra.mxu0 0.0
      %3777 = vmatprep.subr.mxu0 0.0
      %3778 = vmatpush1.msra.mxu0 0.0
      %3779 = vmatprep.subr.mxu0 0.0
      %3780 = vmatpush1.msra.mxu0 0.0
      %3781 = vmatprep.subr.mxu0 0.0
      %3782 = vmatpush1.msra.mxu0 0.0
      %3783 = vmatprep.subr.mxu0 0.0
      %3784 = vmatpush1.msra.mxu0 0.0
      %3785 = vmatprep.subr.mxu0 0.0
      %3786 = vmatpush1.msra.mxu0 0.0
      %3787 = vmatprep.subr.mxu0 0.0
      %3788 = vmatpush1.msra.mxu0 0.0
      %3789 = vmatprep.subr.mxu0 0.0
      %3790 = vmatpush1.msra.mxu0 0.0
      %3791 = vmatprep.subr.mxu0 0.0
      %3792 = vmatpush1.msra.mxu0 0.0
      %3793 = vmatprep.subr.mxu0 0.0
      %3794 = vmatpush1.msra.mxu0 0.0
      %3795 = vmatprep.subr.mxu0 0.0
      %3796 = vmatpush1.msra.mxu0 0.0
      %3797 = vmatprep.subr.mxu0 0.0
      %3798 = vmatpush1.msra.mxu0 0.0
      %3799 = vmatprep.subr.mxu0 0.0
      %3800 = vmatpush1.msra.mxu0 0.0
      %3801 = vmatprep.subr.mxu0 0.0
      %3802 = vmatpush1.msra.mxu0 0.0
      %3803 = vmatprep.subr.mxu0 0.0
      %3804 = vmatpush1.msra.mxu0 0.0
      %3805 = vmatprep.subr.mxu0 0.0
      %3806 = vmatpush1.msra.mxu0 0.0
      %3807 = vmatprep.subr.mxu0 0.0
      %3808 = vmatpush1.msra.mxu0 0.0
      %3809 = vmatprep.subr.mxu0 0.0
      %3810 = vmatpush1.msra.mxu0 0.0
      %3811 = vmatprep.subr.mxu0 0.0
      %3812 = vmatpush1.msra.mxu0 0.0
      %3813 = vmatprep.subr.mxu0 0.0
      %3814 = vmatpush1.msra.mxu0 0.0
      %3815 = vmatprep.subr.mxu0 0.0
      %3816 = vmatpush1.msra.mxu0 0.0
      %3817 = vmatprep.subr.mxu0 0.0
      %3818 = vmatpush1.msra.mxu0 0.0
      %3819 = vmatprep.subr.mxu0 0.0
      %3820 = vmatpush1.msra.mxu0 0.0
      %3821 = vmatprep.mubr.f32.mxu0 0.0
      %3822 = vmatmul.mubr.f32.gmra.mrb[0].mxu0 %v1168
      %v3823 = vpop.f32.mrb[0].mxu0
      %v3824 = vadd.f32 %v571, %v3823
      %v3825 = vpop.f32.mrb[0].mxu0
      %3826 = vmatprep.mubr.f32.mxu0 0.0
      %3827 = vmatmul.mubr.f32.gmra.mrb[0].mxu0 %v1171
      %v3828 = vpop.f32.mrb[0].mxu0
      %v3829 = vadd.f32 %v572, %v3828
      %v3830 = vpop.f32.mrb[0].mxu0
      %3831 = vmatprep.mubr.f32.mxu0 0.0
      %3832 = vmatmul.mubr.f32.gmra.mrb[0].mxu0 %v1174
      %v3833 = vpop.f32.mrb[0].mxu0
      %v3834 = vadd.f32 %v573, %v3833
      %v3835 = vpop.f32.mrb[0].mxu0
      %3836 = vmatprep.mubr.f32.mxu0 0.0
      %3837 = vmatmul.mubr.f32.gmra.mrb[0].mxu0 %v1177
      %v3838 = vpop.f32.mrb[0].mxu0
      %v3839 = vadd.f32 %v574, %v3838
      %v3840 = vpop.f32.mrb[0].mxu0
      %3841 = vdwg.mxu0
      %v3842 = vxor.u32 %v3824, 2147483648
      %v3843 = vxor.u32 %v3829, 2147483648
      %v3844 = vxor.u32 %v3834, 2147483648
      %v3845 = vxor.u32 %v3839, 2147483648
      %v3846 = vmul.f32 %v3842, 1.442695
      %v3847 = vpow.pop %v3846
      %v3848 = vmul.f32 %v3843, 1.442695
      %v3849 = vpow.pop %v3848
      %v3850 = vmul.f32 %v3844, 1.442695
      %v3851 = vpow.pop %v3850
      %v3852 = vmul.f32 %v3845, 1.442695
      %v3853 = vpow.pop %v3852
      %v3854 = vadd.f32 %v3847, 1.0
      %v3855 = vadd.f32 %v3849, 1.0
      %v3856 = vadd.f32 %v3851, 1.0
      %v3857 = vadd.f32 %v3853, 1.0
      %v3858 = vrcp.pop %v3854
      %v3859 = vmul.f32 1.0, %v3858
      %v3860 = vrcp.pop %v3855
      %v3861 = vmul.f32 1.0, %v3860
      %v3862 = vrcp.pop %v3856
      %v3863 = vmul.f32 1.0, %v3862
      %v3864 = vrcp.pop %v3857
      %v3865 = vmul.f32 1.0, %v3864
      %v3868 = vmul.f32 %v3859, %v3206
      %v3869 = vmul.f32 %v3861, %v3208
      %v3871 = vsel %vm590, %v3868, 0
      %v3874 = vsel %vm590, %v3869, 0
      %3876 = vmatprep.subr.mxu0 0.0
      %3877 = vmatpush1.msra.mxu0 %v1297
      %3878 = vmatprep.subr.mxu0 0.0
      %3879 = vmatpush1.msra.mxu0 0.0
      %3880 = vmatprep.subr.mxu0 0.0
      %3881 = vmatpush1.msra.mxu0 0.0
      %3882 = vmatprep.subr.mxu0 0.0
      %3883 = vmatpush1.msra.mxu0 0.0
      %3884 = vmatprep.subr.mxu0 0.0
      %3885 = vmatpush1.msra.mxu0 0.0
      %3886 = vmatprep.subr.mxu0 0.0
      %3887 = vmatpush1.msra.mxu0 0.0
      %3888 = vmatprep.subr.mxu0 0.0
      %3889 = vmatpush1.msra.mxu0 0.0
      %3890 = vmatprep.subr.mxu0 0.0
      %3891 = vmatpush1.msra.mxu0 0.0
      %3892 = vmatprep.subr.mxu0 0.0
      %3893 = vmatpush1.msra.mxu0 0.0
      %3894 = vmatprep.subr.mxu0 0.0
      %3895 = vmatpush1.msra.mxu0 0.0
      %3896 = vmatprep.subr.mxu0 0.0
      %3897 = vmatpush1.msra.mxu0 0.0
      %3898 = vmatprep.subr.mxu0 0.0
      %3899 = vmatpush1.msra.mxu0 0.0
      %3900 = vmatprep.subr.mxu0 0.0
      %3901 = vmatpush1.msra.mxu0 0.0
      %3902 = vmatprep.subr.mxu0 0.0
      %3903 = vmatpush1.msra.mxu0 0.0
      %3904 = vmatprep.subr.mxu0 0.0
      %3905 = vmatpush1.msra.mxu0 0.0
      %3906 = vmatprep.subr.mxu0 0.0
      %3907 = vmatpush1.msra.mxu0 0.0
      %3908 = vmatprep.subr.mxu0 0.0
      %3909 = vmatpush1.msra.mxu0 0.0
      %3910 = vmatprep.subr.mxu0 0.0
      %3911 = vmatpush1.msra.mxu0 0.0
      %3912 = vmatprep.subr.mxu0 0.0
      %3913 = vmatpush1.msra.mxu0 0.0
      %3914 = vmatprep.subr.mxu0 0.0
      %3915 = vmatpush1.msra.mxu0 0.0
      %3916 = vmatprep.subr.mxu0 0.0
      %3917 = vmatpush1.msra.mxu0 0.0
      %3918 = vmatprep.subr.mxu0 0.0
      %3919 = vmatpush1.msra.mxu0 0.0
      %3920 = vmatprep.subr.mxu0 0.0
      %3921 = vmatpush1.msra.mxu0 0.0
      %3922 = vmatprep.subr.mxu0 0.0
      %3923 = vmatpush1.msra.mxu0 0.0
      %3924 = vmatprep.subr.mxu0 0.0
      %3925 = vmatpush1.msra.mxu0 0.0
      %3926 = vmatprep.subr.mxu0 0.0
      %3927 = vmatpush1.msra.mxu0 0.0
      %3928 = vmatprep.subr.mxu0 0.0
      %3929 = vmatpush1.msra.mxu0 0.0
      %3930 = vmatprep.subr.mxu0 0.0
      %3931 = vmatpush1.msra.mxu0 0.0
      %3932 = vmatprep.subr.mxu0 0.0
      %3933 = vmatpush1.msra.mxu0 0.0
      %3934 = vmatprep.subr.mxu0 0.0
      %3935 = vmatpush1.msra.mxu0 0.0
      %3936 = vmatprep.subr.mxu0 0.0
      %3937 = vmatpush1.msra.mxu0 0.0
      %3938 = vmatprep.subr.mxu0 0.0
      %3939 = vmatpush1.msra.mxu0 0.0
      %3940 = vmatprep.mubr.f32.mxu0 0.0
      %3941 = vmatmul.mubr.f32.gmra.mrb[0].mxu0 %v3871
      %v3942 = vpop.f32.mrb[0].mxu0
      %v3943 = vadd.f32 0.0, %v3942
      %v3944 = vpop.f32.mrb[0].mxu0
      %3945 = vmatprep.mubr.f32.mxu0 0.0
      %3946 = vmatmul.mubr.f32.gmra.mrb[0].mxu0 %v3874
      %v3947 = vpop.f32.mrb[0].mxu0
      %v3948 = vadd.f32 0.0, %v3947
      %v3949 = vpop.f32.mrb[0].mxu0
      %3950 = vdwg.mxu0
      %v3951 = vadd.f32 %v3201, %v3943
      %v3952 = vadd.f32 %v3202, %v3948
      %3953 = vmatprep.subr.mxu0 0.0
      %3954 = vmatpush1.msra.mxu0 %v3951
      %3955 = vmatprep.subr.mxu0 0.0
      %3956 = vmatpush1.msra.mxu0 %v3952
      %3957 = vmatprep.subr.mxu0 0.0
      %3958 = vmatpush1.msra.mxu0 0.0
      %3959 = vmatprep.subr.mxu0 0.0
      %3960 = vmatpush1.msra.mxu0 0.0
      %3961 = vmatprep.subr.mxu0 0.0
      %3962 = vmatpush1.msra.mxu0 0.0
      %3963 = vmatprep.subr.mxu0 0.0
      %3964 = vmatpush1.msra.mxu0 0.0
      %3965 = vmatprep.subr.mxu0 0.0
      %3966 = vmatpush1.msra.mxu0 0.0
      %3967 = vmatprep.subr.mxu0 0.0
      %3968 = vmatpush1.msra.mxu0 0.0
      %3969 = vmatprep.subr.mxu0 0.0
      %3970 = vmatpush1.msra.mxu0 0.0
      %3971 = vmatprep.subr.mxu0 0.0
      %3972 = vmatpush1.msra.mxu0 0.0
      %3973 = vmatprep.subr.mxu0 0.0
      %3974 = vmatpush1.msra.mxu0 0.0
      %3975 = vmatprep.subr.mxu0 0.0
      %3976 = vmatpush1.msra.mxu0 0.0
      %3977 = vmatprep.subr.mxu0 0.0
      %3978 = vmatpush1.msra.mxu0 0.0
      %3979 = vmatprep.subr.mxu0 0.0
      %3980 = vmatpush1.msra.mxu0 0.0
      %3981 = vmatprep.subr.mxu0 0.0
      %3982 = vmatpush1.msra.mxu0 0.0
      %3983 = vmatprep.subr.mxu0 0.0
      %3984 = vmatpush1.msra.mxu0 0.0
      %3985 = vmatprep.subr.mxu0 0.0
      %3986 = vmatpush1.msra.mxu0 0.0
      %3987 = vmatprep.subr.mxu0 0.0
      %3988 = vmatpush1.msra.mxu0 0.0
      %3989 = vmatprep.subr.mxu0 0.0
      %3990 = vmatpush1.msra.mxu0 0.0
      %3991 = vmatprep.subr.mxu0 0.0
      %3992 = vmatpush1.msra.mxu0 0.0
      %3993 = vmatprep.subr.mxu0 0.0
      %3994 = vmatpush1.msra.mxu0 0.0
      %3995 = vmatprep.subr.mxu0 0.0
      %3996 = vmatpush1.msra.mxu0 0.0
      %3997 = vmatprep.subr.mxu0 0.0
      %3998 = vmatpush1.msra.mxu0 0.0
      %3999 = vmatprep.subr.mxu0 0.0
      %4000 = vmatpush1.msra.mxu0 0.0
      %4001 = vmatprep.subr.mxu0 0.0
      %4002 = vmatpush1.msra.mxu0 0.0
      %4003 = vmatprep.subr.mxu0 0.0
      %4004 = vmatpush1.msra.mxu0 0.0
      %4005 = vmatprep.subr.mxu0 0.0
      %4006 = vmatpush1.msra.mxu0 0.0
      %4007 = vmatprep.subr.mxu0 0.0
      %4008 = vmatpush1.msra.mxu0 0.0
      %4009 = vmatprep.subr.mxu0 0.0
      %4010 = vmatpush1.msra.mxu0 0.0
      %4011 = vmatprep.subr.mxu0 0.0
      %4012 = vmatpush1.msra.mxu0 0.0
      %4013 = vmatprep.subr.mxu0 0.0
      %4014 = vmatpush1.msra.mxu0 0.0
      %4015 = vmatprep.subr.mxu0 0.0
      %4016 = vmatpush1.msra.mxu0 0.0
      %4017 = vmatprep.mubr.f32.mxu0 0.0
      %4018 = vmatmul.mubr.f32.gmra.mrb[0].mxu0 %v1377
      %v4019 = vpop.f32.mrb[0].mxu0
      %v4020 = vadd.f32 %v578, %v4019
      %v4021 = vpop.f32.mrb[0].mxu0
      %4022 = vmatprep.mubr.f32.mxu0 0.0
      %4023 = vmatmul.mubr.f32.gmra.mrb[0].mxu0 %v1380
      %v4024 = vpop.f32.mrb[0].mxu0
      %v4025 = vadd.f32 %v579, %v4024
      %v4026 = vpop.f32.mrb[0].mxu0
      %4027 = vdwg.mxu0
      %v4028 = vtanh.pop %v4020
      %v4029 = vtanh.pop %v4025
      %v4030 = vmul.f32 %v3863, %v3187
      %v4031 = vmul.f32 %v3865, %v3188
      %v4032 = vsub.f32 1.0, %v3863
      %v4033 = vsub.f32 1.0, %v3865
      %4036 = vrot.lane.b32.xlu0 %v4028, 4
      %v4037 = vpop.permute.xlu0 %4036
      %4038 = vrot.lane.b32.xlu0 %v4029, 4
      %v4039 = vpop.permute.xlu0 %4038
      %v4042 = vmul.f32 %v4032, %v4037
      %v4043 = vmul.f32 %v4033, %v4039
      %v4044 = vadd.f32 %v4030, %v4042
      %v4045 = vadd.f32 %v4031, %v4043
      %4048 = vrot.lane.b32.xlu0 %v4044, 124
      %v4049 = vpop.permute.xlu0 %4048
      %4050 = vrot.lane.b32.xlu0 %v4045, 124
      %v4051 = vpop.permute.xlu0 %4050
      %4054 = vst.msk [vmem:[%s554] sm:$0xff] %vm590, %v4049
      %4055 = vst.msk [vmem:[%s554 + $0x8] sm:$0xff] %vm590, %v4051
      %p4056 = scmp.lt.s32.totalorder %s26, 1
      %s4057 = scalar_select %p4056, %s26, 1
      %s4058 = smul.addr %s4057, 2
      %s4059 = smul.addr %s4058, 8
      %s4060 = scalar_lea.vmem %s15, %s4059
      // Predicated region
      $region81: #{tpu_custom_call.1} parent=79 // pred_check
        %p4061 = pneg %p379
      $region82: #{tpu_custom_call.1} parent=79 // pred_check_branch
        %4063 = sbr.rel (%p4061) target = $region84
      $region83: #{tpu_custom_call.1} parent=79 // pred_region
        _
      $region84: #{tpu_custom_call.1} parent=79 // pred_fallthru
        _
    $region80: #{tpu_custom_call.1} parent=5 // pred_fallthru
      _
    %p4064 = scmp.le.s32.totalorder 2, %s21
    // Predicated region
    $region85: #{tpu_custom_call.1} parent=5 // pred_check
      %p4065 = pneg %p4064
    $region86: #{tpu_custom_call.1} parent=5 // pred_check_branch
      %4067 = sbr.rel (%p4065) target = $region88
    $region87: #{tpu_custom_call.1} parent=5 // pred_region
      %s4068 = ssub.s32 %s21, 2
      // Predicated region
      $region89: #{tpu_custom_call.1} parent=87 // pred_check
        %p4069 = pneg %p385
      $region90: #{tpu_custom_call.1} parent=87 // pred_check_branch
        %4071 = sbr.rel (%p4069) target = $region92
      $region91: #{tpu_custom_call.1} parent=87 // pred_region
        %p4072 = scmp.lt.s32.totalorder %s27, 1
        %s4073 = scalar_select %p4072, %s27, 1
        %s4074 = smul.addr %s4073, 2
        %s4075 = smul.addr %s4074, 8
        %s4076 = scalar_lea.vmem %s15, %s4075
      $region92: #{tpu_custom_call.1} parent=87 // pred_fallthru
        _
    $region88: #{tpu_custom_call.1} parent=5 // pred_fallthru
      _
  $region6: #{tpu_custom_call.1} parent=0 // loop_footer
    %s25 = sadd.s32 1, %s21
  $region7: #{tpu_custom_call.1} parent=0 // loop_footer_branch
    %20 = sbr.rel target = $region3
  $region8: #{tpu_custom_call.1} parent=0 // loop_exit
    _

</llo_original>
